<compile_context>
chip_gen: v5e
topology: v5e:2x2
jax: 0.10.0
libtpu: 0.0.40
codegen_flags: <defaults>
</compile_context>

<pallas_src>
import math
from functools import partial

import numpy as np
import jax
import jax.numpy as jnp
from jax.experimental import pallas as pl
from jax.experimental.pallas import tpu as pltpu


def _default_vmem_limit():
    # ~75% of physical per-core VMEM, capped at 100 MiB:
    #   v5e/v6e (128 MiB physical) -> 96 MiB; v7x (64 MiB) -> 48 MiB.
    try:
        cap = int(pltpu.get_tpu_info().vmem_capacity_bytes)
        return min((cap * 3) // 4, 100 * 1024 * 1024)
    except Exception:
        return 64 * 1024 * 1024


_VMEM_LIMIT = _default_vmem_limit()


def _pick_tile(dim, cap, align, allow_partial=True):
    """Largest tile <= cap (multiple of `align`) dividing `dim`.
    If none exists: return the aligned cap (partial edge blocks, masked stores) for
    M/N axes, or the full dim for K axes (allow_partial=False) where padded edge
    blocks would pollute the accumulation."""
    if dim <= cap:
        return dim
    cap_al = max((cap // align) * align, align)
    t = cap_al
    while t >= align:
        if dim % t == 0:
            return t
        t -= align
    return cap_al if allow_partial else dim


def _pad_lanes(a, mult=128):
    n = a.shape[-1]
    n_pad = ((n + mult - 1) // mult) * mult
    if n_pad == n:
        return a
    pad = [(0, 0)] * (a.ndim - 1) + [(0, n_pad - n)]
    return jnp.pad(a, pad)


# ---------------------------------------------------------------------------
# Tiled linear kernel (optional bias / activation), K-axis accumulation into o_ref
# ---------------------------------------------------------------------------

def _linear_kernel(*refs, act, has_bias):
    if has_bias:
        x_ref, w_ref, b_ref, o_ref = refs
    else:
        x_ref, w_ref, o_ref = refs
        b_ref = None
    k = pl.program_id(2)

    @pl.when(k == 0)
    def _():
        o_ref[...] = jnp.zeros_like(o_ref)

    o_ref[...] += jnp.dot(x_ref[...].astype(jnp.bfloat16), w_ref[...],
                          preferred_element_type=jnp.float32)

    if has_bias or act is not None:
        @pl.when(k == pl.num_programs(2) - 1)
        def _():
            y = o_ref[...]
            if b_ref is not None:
                y = y + b_ref[...]
            if act == "gelu":
                y = jax.nn.gelu(y, approximate=True)
            o_ref[...] = y


def pallas_linear(x, w, b=None, act=None, n_valid=None, *,
                  tm_cap=512, tn_cap=1024, tk_cap=512):
    """x: [M, K] f32; w: [K, N_pad] bf16 (lane-padded at init); b: [1, N_pad] f32."""
    M, K = x.shape
    N_pad = w.shape[1]
    assert N_pad % 128 == 0, "weights must be lane-padded at init"

    tm = _pick_tile(M, tm_cap, 8)
    tn_align = 256 if N_pad % 256 == 0 else 128     # fill the 256-wide MXU on v6e/v7x
    tn = _pick_tile(N_pad, tn_cap, tn_align)
    tk = _pick_tile(K, tk_cap, 128, allow_partial=False)
    grid = (pl.cdiv(M, tm), pl.cdiv(N_pad, tn), pl.cdiv(K, tk))

    has_bias = b is not None
    in_specs = [
        pl.BlockSpec((tm, tk), lambda i, j, k: (i, k)),
        pl.BlockSpec((tk, tn), lambda i, j, k: (k, j)),
    ]
    args = [x, w]
    if has_bias:
        in_specs.append(pl.BlockSpec((1, tn), lambda i, j, k: (0, j)))
        args.append(b)

    out = pl.pallas_call(
        partial(_linear_kernel, act=act, has_bias=has_bias),
        out_shape=jax.ShapeDtypeStruct((M, N_pad), jnp.float32),
        grid=grid,
        in_specs=in_specs,
        out_specs=pl.BlockSpec((tm, tn), lambda i, j, k: (i, j)),
        compiler_params=pltpu.CompilerParams(
            dimension_semantics=("parallel", "parallel", "arbitrary"),
            vmem_limit_bytes=_VMEM_LIMIT),
    )(*args)
    if n_valid is not None and n_valid != N_pad:
        out = out[:, :n_valid]
    return out


# ---------------------------------------------------------------------------
# Fused LayerNorm + linear kernel (row-tiled, full K and N resident)
#   Used for: encoder-norm + mimic_head, encoder-norm + decoder_embed,
#             decoder-norm + decoder_pred.
# ---------------------------------------------------------------------------

def _ln_linear_kernel(*refs, has_bias):
    if has_bias:
        x_ref, g_ref, bg_ref, w_ref, b_ref, o_ref = refs
    else:
        x_ref, g_ref, bg_ref, w_ref, o_ref = refs
        b_ref = None
    x = x_ref[...]
    mean = jnp.mean(x, axis=-1, keepdims=True)
    var = jnp.mean((x - mean) ** 2, axis=-1, keepdims=True)
    h = (x - mean) * jax.lax.rsqrt(var + 1e-5) * g_ref[...] + bg_ref[...]
    y = jnp.dot(h.astype(jnp.bfloat16), w_ref[...], preferred_element_type=jnp.float32)
    if b_ref is not None:
        y = y + b_ref[...]
    o_ref[...] = y.astype(o_ref.dtype)


def pallas_ln_linear(x, g, bg, w, b=None, n_valid=None, *, tm_cap=256):
    M, D = x.shape
    N_pad = w.shape[1]
    tm = _pick_tile(M, tm_cap, 8)
    has_bias = b is not None
    in_specs = [
        pl.BlockSpec((tm, D), lambda i: (i, 0)),
        pl.BlockSpec((1, D), lambda i: (0, 0)),
        pl.BlockSpec((1, D), lambda i: (0, 0)),
        pl.BlockSpec((D, N_pad), lambda i: (0, 0)),
    ]
    args = [x, g, bg, w]
    if has_bias:
        in_specs.append(pl.BlockSpec((1, N_pad), lambda i: (0, 0)))
        args.append(b)
    out = pl.pallas_call(
        partial(_ln_linear_kernel, has_bias=has_bias),
        out_shape=jax.ShapeDtypeStruct((M, N_pad), jnp.float32),
        grid=(pl.cdiv(M, tm),),
        in_specs=in_specs,
        out_specs=pl.BlockSpec((tm, N_pad), lambda i: (i, 0)),
        compiler_params=pltpu.CompilerParams(
            dimension_semantics=("parallel",), vmem_limit_bytes=_VMEM_LIMIT),
    )(*args)
    if n_valid is not None and n_valid != N_pad:
        out = out[:, :n_valid]
    return out


# ---------------------------------------------------------------------------
# Fused transformer-block kernels
#   kernel 1: y = x + proj(MHA(LN1(x)))      (grid over batch, "parallel")
#   kernel 2: y = x + fc2(gelu(fc1(LN2(x)))) (grid over row tiles, "parallel")
# ---------------------------------------------------------------------------

def _attn_block_kernel(x_ref, g1_ref, b1_ref, wqkv_ref, bqkv_ref, pw_ref, pb_ref,
                       o_ref, *, n_head, scale):
    x = x_ref[...]                                    # [T, D] f32
    D = x.shape[-1]
    Dh = D // n_head

    # ---- LayerNorm (ln1), fused ----
    mean = jnp.mean(x, axis=-1, keepdims=True)
    var = jnp.mean((x - mean) ** 2, axis=-1, keepdims=True)
    h = (x - mean) * jax.lax.rsqrt(var + 1e-5) * g1_ref[...] + b1_ref[...]

    # ---- ONE full-width QKV matmul (heads stay concatenated on the lane axis) ----
    qkv = jnp.dot(h.astype(jnp.bfloat16), wqkv_ref[...],
                  preferred_element_type=jnp.float32) + bqkv_ref[...]   # [T, 3D]

    heads = []
    for hd in range(n_head):
        q = qkv[:, hd * Dh:(hd + 1) * Dh] * scale     # scale q (T*Dh), not scores (T*T)
        k = qkv[:, D + hd * Dh: D + (hd + 1) * Dh]
        v = qkv[:, 2 * D + hd * Dh: 2 * D + (hd + 1) * Dh]
        s = jax.lax.dot_general(q.astype(jnp.bfloat16), k.astype(jnp.bfloat16),
                                (((1,), (1,)), ((), ())),
                                preferred_element_type=jnp.float32)     # [T, T]
        m = jnp.max(s, axis=-1, keepdims=True)
        p = jnp.exp(s - m)
        l = jnp.sum(p, axis=-1, keepdims=True)
        p = p * pl.reciprocal(l, approx=True)         # EUP reciprocal, not VALU divide
        heads.append(jnp.dot(p.astype(jnp.bfloat16), v.astype(jnp.bfloat16),
                             preferred_element_type=jnp.float32))       # [T, Dh]

    att = jnp.concatenate(heads, axis=-1)             # [T, D]
    # ---- ONE full-width output projection ----
    o = jnp.dot(att.astype(jnp.bfloat16), pw_ref[...],
                preferred_element_type=jnp.float32) + pb_ref[...]
    o_ref[...] = (x + o).astype(o_ref.dtype)


def pallas_attn_block(x, p, n_head):
    B, T, D = x.shape
    Dh = D // n_head
    scale = 1.0 / math.sqrt(Dh)
    return pl.pallas_call(
        partial(_attn_block_kernel, n_head=n_head, scale=scale),
        out_shape=jax.ShapeDtypeStruct((B, T, D), jnp.float32),
        grid=(B,),
        in_specs=[
            pl.BlockSpec((None, T, D), lambda bb: (bb, 0, 0)),
            pl.BlockSpec((1, D), lambda bb: (0, 0)),
            pl.BlockSpec((1, D), lambda bb: (0, 0)),
            pl.BlockSpec((D, 3 * D), lambda bb: (0, 0)),
            pl.BlockSpec((1, 3 * D), lambda bb: (0, 0)),
            pl.BlockSpec((D, D), lambda bb: (0, 0)),
            pl.BlockSpec((1, D), lambda bb: (0, 0)),
        ],
        out_specs=pl.BlockSpec((None, T, D), lambda bb: (bb, 0, 0)),
        compiler_params=pltpu.CompilerParams(
            dimension_semantics=("parallel",), vmem_limit_bytes=_VMEM_LIMIT),
    )(x, p['ln1_g'], p['ln1_b'], p['qkv_w'], p['qkv_b'], p['proj_w'], p['proj_b'])


def _mlp_block_kernel(x_ref, g_ref, b_ref, w1_ref, b1_ref, w2_ref, b2_ref, o_ref):
    x = x_ref[...]                                    # [tm, D] f32
    mean = jnp.mean(x, axis=-1, keepdims=True)
    var = jnp.mean((x - mean) ** 2, axis=-1, keepdims=True)
    h = (x - mean) * jax.lax.rsqrt(var + 1e-5) * g_ref[...] + b_ref[...]
    h = jnp.dot(h.astype(jnp.bfloat16), w1_ref[...],
                preferred_element_type=jnp.float32) + b1_ref[...]
    # TODO(synk): Block/MLP definition not provided; tanh-approx GELU used (PyTorch
    # nn.GELU default is the exact erf form — small systematic deviation).
    h = jax.nn.gelu(h, approximate=True)
    h = jnp.dot(h.astype(jnp.bfloat16), w2_ref[...],
                preferred_element_type=jnp.float32) + b2_ref[...]
    o_ref[...] = (x + h).astype(o_ref.dtype)


def pallas_mlp_block(x2d, p, *, tm_cap=256):
    M, D = x2d.shape
    H = p['fc1_w'].shape[1]
    tm = _pick_tile(M, tm_cap, 8)
    return pl.pallas_call(
        _mlp_block_kernel,
        out_shape=jax.ShapeDtypeStruct((M, D), jnp.float32),
        grid=(pl.cdiv(M, tm),),
        in_specs=[
            pl.BlockSpec((tm, D), lambda i: (i, 0)),
            pl.BlockSpec((1, D), lambda i: (0, 0)),
            pl.BlockSpec((1, D), lambda i: (0, 0)),
            pl.BlockSpec((D, H), lambda i: (0, 0)),
            pl.BlockSpec((1, H), lambda i: (0, 0)),
            pl.BlockSpec((H, D), lambda i: (0, 0)),
            pl.BlockSpec((1, D), lambda i: (0, 0)),
        ],
        out_specs=pl.BlockSpec((tm, D), lambda i: (i, 0)),
        compiler_params=pltpu.CompilerParams(
            dimension_semantics=("parallel",), vmem_limit_bytes=_VMEM_LIMIT),
    )(x2d, p['ln2_g'], p['ln2_b'], p['fc1_w'], p['fc1_b'], p['fc2_w'], p['fc2_b'])


def block_forward(x, p, n_head):
    # TODO(synk): Block definition not provided in source; ch_list usage unknown (ignored).
    B, T, D = x.shape
    x = pallas_attn_block(x, p, n_head)                            # x + attn(LN1(x))
    x = pallas_mlp_block(x.reshape(B * T, D), p).reshape(B, T, D)  # + mlp(LN2(x))
    return x


# ---------------------------------------------------------------------------
# Parameter initialization (deterministic, synthetic)
# ---------------------------------------------------------------------------

def get_1d_sincos_pos_embed(embed_dim, length):
    pos = np.arange(length, dtype=np.float64)
    omega = np.arange(embed_dim // 2, dtype=np.float64) / (embed_dim / 2.0)
    omega = 1.0 / 10000 ** omega
    out = np.einsum('m,d->md', pos, omega)
    return np.concatenate([np.sin(out), np.cos(out)], axis=1).astype(np.float32)


def trunc_normal(key, shape, std=0.02):
    return std * jax.random.truncated_normal(key, -2.0, 2.0, shape, jnp.float32)


def init_block(key, D, layer_id):
    ks = jax.random.split(key, 4)
    hidden = 4 * D
    scale = 1.0 / math.sqrt(2.0 * (layer_id + 1))   # fix_init_weight rescale
    return {
        'ln1_g': jnp.ones((1, D), jnp.float32), 'ln1_b': jnp.zeros((1, D), jnp.float32),
        # qkv layout [D, 3D] = [q|k|v] with heads contiguous inside each slab, so the
        # in-kernel head split is a static lane slice (no per-call transpose in HBM).
        'qkv_w': trunc_normal(ks[0], (D, 3 * D)).astype(jnp.bfloat16),
        'qkv_b': jnp.zeros((1, 3 * D), jnp.float32),
        'proj_w': (trunc_normal(ks[1], (D, D)) * scale).astype(jnp.bfloat16),
        'proj_b': jnp.zeros((1, D), jnp.float32),
        'ln2_g': jnp.ones((1, D), jnp.float32), 'ln2_b': jnp.zeros((1, D), jnp.float32),
        'fc1_w': trunc_normal(ks[2], (D, hidden)).astype(jnp.bfloat16),
        'fc1_b': jnp.zeros((1, hidden), jnp.float32),
        'fc2_w': (trunc_normal(ks[3], (hidden, D)) * scale).astype(jnp.bfloat16),
        'fc2_b': jnp.zeros((1, D), jnp.float32),
    }


def init_params(key, cfg):
    D, Dd = cfg['n_embd'], cfg['decoder_n_embd']
    e, V = cfg['e'], cfg['vocab_size']
    keys = jax.random.split(key, 8)

    def lin(k, k_in, n_out):
        # Standalone-linear weights: lane-padded to a multiple of 128 and stored bf16
        # at init (no per-call padding / weight copies in HBM); bias f32 [1, n_pad].
        w = _pad_lanes(trunc_normal(k, (k_in, n_out))).astype(jnp.bfloat16)
        b = jnp.zeros((1, w.shape[1]), jnp.float32)
        return w, b

    tconv_w, tconv_b = lin(keys[1], e, D)
    mimic_w, mimic_b = lin(keys[2], D, cfg['target_n_embd'])
    dec_embed_w, dec_embed_b = lin(keys[3], D, Dd)
    dec_pred_w, _ = lin(keys[4], Dd, V)          # decoder_pred has no bias
    vq_w, vq_b = lin(keys[5], e, V)

    return {
        'ch_emb': jnp.asarray(get_1d_sincos_pos_embed(D, 130)),
        'time_emb': jnp.asarray(get_1d_sincos_pos_embed(D, 16)),
        'dec_ch_emb': jnp.asarray(get_1d_sincos_pos_embed(Dd, 130)),
        'dec_time_emb': jnp.asarray(get_1d_sincos_pos_embed(Dd, 16)),
        'cls_token': trunc_normal(keys[0], (1, 1, D)),
        'tconv_w': tconv_w, 'tconv_b': tconv_b,
        'norm_g': jnp.ones((1, D), jnp.float32), 'norm_b': jnp.zeros((1, D), jnp.float32),
        'mimic_w': mimic_w, 'mimic_b': mimic_b,
        'dec_embed_w': dec_embed_w, 'dec_embed_b': dec_embed_b,
        'dec_norm_g': jnp.ones((1, Dd), jnp.float32), 'dec_norm_b': jnp.zeros((1, Dd), jnp.float32),
        'dec_pred_w': dec_pred_w,
        'vq_w': vq_w, 'vq_b': vq_b,
        'blocks': [init_block(k, D, i)
                   for i, k in enumerate(jax.random.split(keys[6], cfg['n_layer']))],
        'dec_blocks': [init_block(k, Dd, i)
                       for i, k in enumerate(jax.random.split(keys[7], cfg['decoder_n_layer']))],
    }


# ---------------------------------------------------------------------------
# Full forward pass
# ---------------------------------------------------------------------------

def gram_forward(params, x, ch_ids, noise, cfg):
    b, nc, e = x.shape
    C = ch_ids.shape[0]
    n = nc // C
    D, Dd, V = cfg['n_embd'], cfg['decoder_n_embd'], cfg['vocab_size']

    # --- encode_to_z: synthetic frozen tokenizer ---
    # TODO(synk): real model loads a VQKD checkpoint (load_vqgan); replaced by a
    # deterministic linear codebook projection + argmax.
    vq_logits = pallas_linear(x.reshape(b * nc, e), params['vq_w'], params['vq_b'], n_valid=V)
    indices = jnp.argmax(vq_logits, axis=-1).reshape(b, nc)

    # --- forward_encoder ---
    ch_sel = params['ch_emb'][ch_ids]                                             # [C, D]
    channel_embed = jnp.broadcast_to(ch_sel[None, None], (b, n, C, D)).reshape(b, nc, D)
    time_embed = jnp.broadcast_to(params['time_emb'][:n][None, :, None],
                                  (b, n, C, D)).reshape(b, nc, D)
    emb = time_embed + channel_embed

    len_keep = int(nc * (1 - cfg['mask_ratio']))
    ids_shuffle = jnp.argsort(noise, axis=1)
    ids_restore = jnp.argsort(ids_shuffle, axis=1)
    ids_keep = ids_shuffle[:, :len_keep]
    mask = jnp.ones((b, nc), jnp.float32).at[:, :len_keep].set(0.0)
    mask = jnp.take_along_axis(mask, ids_restore, axis=1)

    xk = jnp.take_along_axis(x, jnp.broadcast_to(ids_keep[:, :, None], (b, len_keep, e)), axis=1)
    embk = jnp.take_along_axis(emb, jnp.broadcast_to(ids_keep[:, :, None], (b, len_keep, D)), axis=1)

    # TODO(synk): TConv definition not provided; realized as a token-wise linear e -> n_embd.
    xe = pallas_linear(xk.reshape(b * len_keep, e),
                       params['tconv_w'], params['tconv_b'], n_valid=D).reshape(b, len_keep, D)
    xe = xe + embk
    cls = jnp.broadcast_to(params['cls_token'], (b, 1, D))
    h = jnp.concatenate([cls, xe], axis=1)                                        # [b, T, D]

    for blk in params['blocks']:
        h = block_forward(h, blk, cfg['n_head'])
    T = len_keep + 1
    proj_weights = jnp.ones((len(cfg['out_indices']),), jnp.float32)              # if_mff == False

    # --- mimic loss: final encoder LayerNorm fused with mimic_head (row-wise LN) ---
    rec = pallas_ln_linear(h[:, 1:].reshape(b * len_keep, D),
                           params['norm_g'], params['norm_b'],
                           params['mimic_w'], params['mimic_b'],
                           n_valid=cfg['target_n_embd'])
    rec = rec.reshape(b, len_keep, cfg['target_n_embd'])
    target = jnp.abs(jnp.fft.fft(x, axis=-1))
    targetk = jnp.take_along_axis(target,
                                  jnp.broadcast_to(ids_keep[:, :, None], (b, len_keep, e)), axis=1)

    def std_norm(t):
        mean = jnp.mean(t, axis=-1, keepdims=True)
        std = jnp.std(t, axis=-1, keepdims=True, ddof=1)   # torch.std default is unbiased
        return (t - mean) / (std + 1e-5)

    mimic_loss = jnp.mean((std_norm(rec) - std_norm(targetk)) ** 2)

    # --- forward_decoder (if_pad_with_cls_token=True path) ---
    # final encoder LayerNorm fused with decoder_embed
    y = pallas_ln_linear(h.reshape(b * T, D),
                         params['norm_g'], params['norm_b'],
                         params['dec_embed_w'], params['dec_embed_b'],
                         n_valid=Dd).reshape(b, T, Dd)
    mask_tokens = jnp.broadcast_to(y[:, 0:1], (b, nc + 1 - T, Dd))
    y_ = jnp.concatenate([y[:, 1:], mask_tokens], axis=1)                          # [b, nc, Dd]
    y_ = jnp.take_along_axis(y_, jnp.broadcast_to(ids_restore[:, :, None], (b, nc, Dd)), axis=1)

    dec_ch_sel = params['dec_ch_emb'][ch_ids]
    dec_channel_embed = jnp.broadcast_to(dec_ch_sel[None, None], (b, n, C, Dd)).reshape(b, nc, Dd)
    dec_time_embed = jnp.broadcast_to(params['dec_time_emb'][:n][None, :, None],
                                      (b, n, C, Dd)).reshape(b, nc, Dd)
    y_ = y_ + dec_time_embed + dec_channel_embed
    y = jnp.concatenate([y[:, :1], y_], axis=1)                                    # [b, nc+1, Dd]

    for blk in params['dec_blocks']:
        y = block_forward(y, blk, cfg['decoder_n_head'])
    # decoder LayerNorm fused with decoder_pred (no bias)
    pred = pallas_ln_linear(y.reshape(b * (nc + 1), Dd),
                            params['dec_norm_g'], params['dec_norm_b'],
                            params['dec_pred_w'], None, n_valid=V).reshape(b, nc + 1, V)
    pred = pred[:, 1:]                                                             # [b, nc, V]

    # --- cls_loss (cross-entropy + accuracy over masked positions) ---
    logits = pred.reshape(b * nc, V)
    gt = indices.reshape(b * nc)
    m = mask.reshape(b * nc)
    logz = jax.nn.logsumexp(logits, axis=-1)
    ll = jnp.take_along_axis(logits, gt[:, None], axis=1)[:, 0]
    ce = logz - ll
    cls_loss = jnp.sum(ce * m) / jnp.sum(m)
    mlm_acc = jnp.sum((jnp.argmax(logits, axis=-1) == gt).astype(jnp.float32) * m) / jnp.sum(m)

    return cls_loss, mimic_loss, mlm_acc, pred, mask, proj_weights


# ---------------------------------------------------------------------------

if __name__ == "__main__":
    cfg = dict(n_embd=32, n_head=4, n_layer=2,
               decoder_n_embd=32, decoder_n_head=4, decoder_n_layer=1,
               vocab_size=64, target_n_embd=32, e=32,
               mask_ratio=0.5, out_indices=[1])

    b, C, n = 2, 4, 2
    nc = n * C                      # 8 tokens (time-major, channel-minor)
    e = cfg['e']

    key = jax.random.PRNGKey(0)
    k_param, k_x, k_noise = jax.random.split(key, 3)
    params = init_params(k_param, cfg)

    all_ch_list = [f"CH{i}" for i in range(130)]
    ch_list = ["ch3", "ch10", "ch25", "ch77"]
    ch_ids = jnp.array([all_ch_list.index(c.upper()) for c in ch_list], jnp.int32)

    x = jax.random.normal(k_x, (b, nc, e), jnp.float32)
    noise = jax.random.uniform(k_noise, (b, nc), jnp.float32)

    # jit the whole forward so XLA glue (gathers, fft, losses) fuses around the kernels.
    fwd = jax.jit(lambda p_, x_, c_, n_: gram_forward(p_, x_, c_, n_, cfg))
    out = fwd(params, x, ch_ids, noise)
    out = jax.block_until_ready(out)
    cls_loss, mimic_loss, mlm_acc, pred, mask, proj_weights = out
    assert pred.shape == (b, nc, cfg['vocab_size'])
    assert mask.shape == (b, nc)
    assert proj_weights.shape == (len(cfg['out_indices']),)
    assert np.isfinite(float(cls_loss)) and np.isfinite(float(mimic_loss))
    print("KERNEL_OK")
</pallas_src>

<mosaic_0001>
module attributes {stable_mosaic.version = 11 : i64} {
  func.func @_linear_kernel(%arg0: i32, %arg1: i32, %arg2: i32, %arg3: memref<8x32xf32, #tpu.memory_space<vmem>>, %arg4: memref<32x128xbf16, #tpu.memory_space<vmem>>, %arg5: memref<1x128xf32, #tpu.memory_space<vmem>>, %arg6: memref<8x128xf32, #tpu.memory_space<vmem>>) attributes {dimension_semantics = [#tpu.dimension_semantics<parallel>, #tpu.dimension_semantics<parallel>, #tpu.dimension_semantics<arbitrary>], iteration_bounds = array<i64: 1, 1, 1>, scalar_prefetch = 0 : i64, scratch_operands = 0 : i64, tpu.core_type = #tpu.core_type<tc>, window_params = [{transform_indices = @transform_0, window_bounds = array<i64: 8, 32>}, {transform_indices = @transform_1, window_bounds = array<i64: 32, 128>}, {transform_indices = @transform_2, window_bounds = array<i64: 1, 128>}, {transform_indices = @transform_3, window_bounds = array<i64: 8, 128>}]} {
    %c0_i32 = arith.constant 0 : i32
    %0 = arith.cmpi eq, %arg2, %c0_i32 : i32
    %1 = arith.extui %0 : i1 to i32
    %c0_i32_0 = arith.constant 0 : i32
    %2 = arith.cmpi ne, %1, %c0_i32_0 : i32
    scf.if %2 {
      %cst_10 = arith.constant 0.000000e+00 : f32
      %13 = vector.broadcast %cst_10 : f32 to vector<8x128xf32>
      %c0_11 = arith.constant 0 : index
      %c0_12 = arith.constant 0 : index
      %14 = vector.load %arg6[%c0_11, %c0_12] : memref<8x128xf32, #tpu.memory_space<vmem>>, vector<8x128xf32>
      tpu.vector_store %arg6[%c0_11, %c0_12], %13 {strides = array<i32>} : memref<8x128xf32, #tpu.memory_space<vmem>>, vector<8x128xf32>,
    } else {
    }
    %c0 = arith.constant 0 : index
    %c0_1 = arith.constant 0 : index
    %3 = vector.load %arg6[%c0, %c0_1] : memref<8x128xf32, #tpu.memory_space<vmem>>, vector<8x128xf32>
    %c0_2 = arith.constant 0 : index
    %c0_3 = arith.constant 0 : index
    %4 = vector.load %arg3[%c0_2, %c0_3] : memref<8x32xf32, #tpu.memory_space<vmem>>, vector<8x32xf32>
    %5 = arith.truncf %4 : vector<8x32xf32> to vector<8x32xbf16>
    %c0_4 = arith.constant 0 : index
    %c0_5 = arith.constant 0 : index
    %6 = vector.load %arg4[%c0_4, %c0_5] : memref<32x128xbf16, #tpu.memory_space<vmem>>, vector<32x128xbf16>
    %cst = arith.constant dense<0.000000e+00> : vector<8x128xf32>
    %7 = tpu.matmul %5, %6, %cst {dimension_numbers = #tpu.dot_dimension_numbers<[1], [0], [0], [1], [0, 0, 1, 1], [], []>} : vector<8x32xbf16>, vector<32x128xbf16>, vector<8x128xf32> -> vector<8x128xf32>
    %8 = arith.addf %3, %7 : vector<8x128xf32>
    %c0_6 = arith.constant 0 : index
    %c0_7 = arith.constant 0 : index
    %9 = vector.load %arg6[%c0_6, %c0_7] : memref<8x128xf32, #tpu.memory_space<vmem>>, vector<8x128xf32>
    tpu.vector_store %arg6[%c0_6, %c0_7], %8 {strides = array<i32>} : memref<8x128xf32, #tpu.memory_space<vmem>>, vector<8x128xf32>,
    %c0_i32_8 = arith.constant 0 : i32
    %10 = arith.cmpi eq, %arg2, %c0_i32_8 : i32
    %11 = arith.extui %10 : i1 to i32
    %c0_i32_9 = arith.constant 0 : i32
    %12 = arith.cmpi ne, %11, %c0_i32_9 : i32
    scf.if %12 {
      %c0_10 = arith.constant 0 : index
      %c0_11 = arith.constant 0 : index
      %13 = vector.load %arg6[%c0_10, %c0_11] : memref<8x128xf32, #tpu.memory_space<vmem>>, vector<8x128xf32>
      %c0_12 = arith.constant 0 : index
      %c0_13 = arith.constant 0 : index
      %14 = vector.load %arg5[%c0_12, %c0_13] : memref<1x128xf32, #tpu.memory_space<vmem>>, vector<1x128xf32>
      %15 = vector.broadcast %14 : vector<1x128xf32> to vector<8x128xf32>
      %16 = arith.addf %13, %15 : vector<8x128xf32>
      %c0_14 = arith.constant 0 : index
      %c0_15 = arith.constant 0 : index
      %17 = vector.load %arg6[%c0_14, %c0_15] : memref<8x128xf32, #tpu.memory_space<vmem>>, vector<8x128xf32>
      tpu.vector_store %arg6[%c0_14, %c0_15], %16 {strides = array<i32>} : memref<8x128xf32, #tpu.memory_space<vmem>>, vector<8x128xf32>,
    } else {
    }
    return
  }
  func.func @transform_0(%arg0: i32, %arg1: i32, %arg2: i32) -> (i32, i32) {
    %c0_i32 = arith.constant 0 : i32
    return %arg0, %arg2 : i32, i32
  }
  func.func @transform_1(%arg0: i32, %arg1: i32, %arg2: i32) -> (i32, i32) {
    %c0_i32 = arith.constant 0 : i32
    return %arg2, %arg1 : i32, i32
  }
  func.func @transform_2(%arg0: i32, %arg1: i32, %arg2: i32) -> (i32, i32) {
    %c0_i32 = arith.constant 0 : i32
    %c0_i32_0 = arith.constant 0 : i32
    return %c0_i32, %arg1 : i32, i32
  }
  func.func @transform_3(%arg0: i32, %arg1: i32, %arg2: i32) -> (i32, i32) {
    %c0_i32 = arith.constant 0 : i32
    return %arg0, %arg1 : i32, i32
  }
}

module attributes {stable_mosaic.version = 11 : i64} {
  func.func @_mlp_block_kernel(%arg0: i32, %arg1: memref<10x32xf32, #tpu.memory_space<vmem>>, %arg2: memref<1x32xf32, #tpu.memory_space<vmem>>, %arg3: memref<1x32xf32, #tpu.memory_space<vmem>>, %arg4: memref<32x128xbf16, #tpu.memory_space<vmem>>, %arg5: memref<1x128xf32, #tpu.memory_space<vmem>>, %arg6: memref<128x32xbf16, #tpu.memory_space<vmem>>, %arg7: memref<1x32xf32, #tpu.memory_space<vmem>>, %arg8: memref<10x32xf32, #tpu.memory_space<vmem>>) attributes {dimension_semantics = [#tpu.dimension_semantics<parallel>], iteration_bounds = array<i64: 1>, scalar_prefetch = 0 : i64, scratch_operands = 0 : i64, tpu.core_type = #tpu.core_type<tc>, window_params = [{transform_indices = @transform_0, window_bounds = array<i64: 10, 32>}, {pipeline_mode = #tpu.pipeline_mode<synchronous>, transform_indices = @transform_1, window_bounds = array<i64: 1, 32>}, {pipeline_mode = #tpu.pipeline_mode<synchronous>, transform_indices = @transform_2, window_bounds = array<i64: 1, 32>}, {pipeline_mode = #tpu.pipeline_mode<synchronous>, transform_indices = @transform_3, window_bounds = array<i64: 32, 128>}, {pipeline_mode = #tpu.pipeline_mode<synchronous>, transform_indices = @transform_4, window_bounds = array<i64: 1, 128>}, {pipeline_mode = #tpu.pipeline_mode<synchronous>, transform_indices = @transform_5, window_bounds = array<i64: 128, 32>}, {pipeline_mode = #tpu.pipeline_mode<synchronous>, transform_indices = @transform_6, window_bounds = array<i64: 1, 32>}, {transform_indices = @transform_7, window_bounds = array<i64: 10, 32>}]} {
    %c0 = arith.constant 0 : index
    %c0_0 = arith.constant 0 : index
    %0 = vector.load %arg1[%c0, %c0_0] : memref<10x32xf32, #tpu.memory_space<vmem>>, vector<10x32xf32>
    %cst = arith.constant dense<0.000000e+00> : vector<10xf32>
    %1 = vector.multi_reduction <add>, %0, %cst [1] : vector<10x32xf32> to vector<10xf32>
    %2 = vector.shape_cast %1 : vector<10xf32> to vector<10x1xf32>
    %cst_1 = arith.constant 3.200000e+01 : f32
    %3 = vector.broadcast %cst_1 : f32 to vector<10x1xf32>
    %4 = arith.divf %2, %3 : vector<10x1xf32>
    %5 = vector.broadcast %4 : vector<10x1xf32> to vector<10x32xf32>
    %6 = arith.subf %0, %5 : vector<10x32xf32>
    %7 = arith.mulf %6, %6 : vector<10x32xf32>
    %cst_2 = arith.constant dense<0.000000e+00> : vector<10xf32>
    %8 = vector.multi_reduction <add>, %7, %cst_2 [1] : vector<10x32xf32> to vector<10xf32>
    %9 = vector.shape_cast %8 : vector<10xf32> to vector<10x1xf32>
    %cst_3 = arith.constant 3.200000e+01 : f32
    %10 = vector.broadcast %cst_3 : f32 to vector<10x1xf32>
    %11 = arith.divf %9, %10 : vector<10x1xf32>
    %12 = vector.broadcast %4 : vector<10x1xf32> to vector<10x32xf32>
    %13 = arith.subf %0, %12 : vector<10x32xf32>
    %cst_4 = arith.constant 9.99999974E-6 : f32
    %14 = vector.broadcast %cst_4 : f32 to vector<10x1xf32>
    %15 = arith.addf %11, %14 : vector<10x1xf32>
    %16 = math.rsqrt %15 : vector<10x1xf32>
    %17 = vector.broadcast %16 : vector<10x1xf32> to vector<10x32xf32>
    %18 = arith.mulf %13, %17 : vector<10x32xf32>
    %c0_5 = arith.constant 0 : index
    %c0_6 = arith.constant 0 : index
    %19 = vector.load %arg2[%c0_5, %c0_6] : memref<1x32xf32, #tpu.memory_space<vmem>>, vector<1x32xf32>
    %20 = vector.broadcast %19 : vector<1x32xf32> to vector<10x32xf32>
    %21 = arith.mulf %18, %20 : vector<10x32xf32>
    %c0_7 = arith.constant 0 : index
    %c0_8 = arith.constant 0 : index
    %22 = vector.load %arg3[%c0_7, %c0_8] : memref<1x32xf32, #tpu.memory_space<vmem>>, vector<1x32xf32>
    %23 = vector.broadcast %22 : vector<1x32xf32> to vector<10x32xf32>
    %24 = arith.addf %21, %23 : vector<10x32xf32>
    %25 = arith.truncf %24 : vector<10x32xf32> to vector<10x32xbf16>
    %c0_9 = arith.constant 0 : index
    %c0_10 = arith.constant 0 : index
    %26 = vector.load %arg4[%c0_9, %c0_10] : memref<32x128xbf16, #tpu.memory_space<vmem>>, vector<32x128xbf16>
    %cst_11 = arith.constant dense<0.000000e+00> : vector<10x128xf32>
    %27 = tpu.matmul %25, %26, %cst_11 {dimension_numbers = #tpu.dot_dimension_numbers<[1], [0], [0], [1], [0, 0, 1, 1], [], []>} : vector<10x32xbf16>, vector<32x128xbf16>, vector<10x128xf32> -> vector<10x128xf32>
    %c0_12 = arith.constant 0 : index
    %c0_13 = arith.constant 0 : index
    %28 = vector.load %arg5[%c0_12, %c0_13] : memref<1x128xf32, #tpu.memory_space<vmem>>, vector<1x128xf32>
    %29 = vector.broadcast %28 : vector<1x128xf32> to vector<10x128xf32>
    %30 = arith.addf %27, %29 : vector<10x128xf32>
    %31 = arith.mulf %30, %30 : vector<10x128xf32>
    %32 = arith.mulf %30, %31 : vector<10x128xf32>
    %cst_14 = arith.constant 4.471500e-02 : f32
    %33 = vector.broadcast %cst_14 : f32 to vector<10x128xf32>
    %34 = arith.mulf %33, %32 : vector<10x128xf32>
    %35 = arith.addf %30, %34 : vector<10x128xf32>
    %cst_15 = arith.constant 0.797884583 : f32
    %36 = vector.broadcast %cst_15 : f32 to vector<10x128xf32>
    %37 = arith.mulf %36, %35 : vector<10x128xf32>
    %38 = math.tanh %37 : vector<10x128xf32>
    %cst_16 = arith.constant 1.000000e+00 : f32
    %39 = vector.broadcast %cst_16 : f32 to vector<10x128xf32>
    %40 = arith.addf %39, %38 : vector<10x128xf32>
    %cst_17 = arith.constant 5.000000e-01 : f32
    %41 = vector.broadcast %cst_17 : f32 to vector<10x128xf32>
    %42 = arith.mulf %41, %40 : vector<10x128xf32>
    %43 = arith.mulf %30, %42 : vector<10x128xf32>
    %44 = arith.truncf %43 : vector<10x128xf32> to vector<10x128xbf16>
    %c0_18 = arith.constant 0 : index
    %c0_19 = arith.constant 0 : index
    %45 = vector.load %arg6[%c0_18, %c0_19] : memref<128x32xbf16, #tpu.memory_space<vmem>>, vector<128x32xbf16>
    %cst_20 = arith.constant dense<0.000000e+00> : vector<10x32xf32>
    %46 = tpu.matmul %44, %45, %cst_20 {dimension_numbers = #tpu.dot_dimension_numbers<[1], [0], [0], [1], [0, 0, 1, 1], [], []>} : vector<10x128xbf16>, vector<128x32xbf16>, vector<10x32xf32> -> vector<10x32xf32>
    %c0_21 = arith.constant 0 : index
    %c0_22 = arith.constant 0 : index
    %47 = vector.load %arg7[%c0_21, %c0_22] : memref<1x32xf32, #tpu.memory_space<vmem>>, vector<1x32xf32>
    %48 = vector.broadcast %47 : vector<1x32xf32> to vector<10x32xf32>
    %49 = arith.addf %46, %48 : vector<10x32xf32>
    %50 = arith.addf %0, %49 : vector<10x32xf32>
    %c0_23 = arith.constant 0 : index
    %c0_24 = arith.constant 0 : index
    %51 = vector.load %arg8[%c0_23, %c0_24] : memref<10x32xf32, #tpu.memory_space<vmem>>, vector<10x32xf32>
    tpu.vector_store %arg8[%c0_23, %c0_24], %50 {strides = array<i32>} : memref<10x32xf32, #tpu.memory_space<vmem>>, vector<10x32xf32>,
    return
  }
  func.func @transform_0(%arg0: i32) -> (i32, i32) {
    %c0_i32 = arith.constant 0 : i32
    %c0_i32_0 = arith.constant 0 : i32
    return %arg0, %c0_i32 : i32, i32
  }
  func.func @transform_1(%arg0: i32) -> (i32, i32) {
    %c0_i32 = arith.constant 0 : i32
    %c0_i32_0 = arith.constant 0 : i32
    %c0_i32_1 = arith.constant 0 : i32
    return %c0_i32, %c0_i32_0 : i32, i32
  }
  func.func @transform_2(%arg0: i32) -> (i32, i32) {
    %c0_i32 = arith.constant 0 : i32
    %c0_i32_0 = arith.constant 0 : i32
    %c0_i32_1 = arith.constant 0 : i32
    return %c0_i32, %c0_i32_0 : i32, i32
  }
  func.func @transform_3(%arg0: i32) -> (i32, i32) {
    %c0_i32 = arith.constant 0 : i32
    %c0_i32_0 = arith.constant 0 : i32
    %c0_i32_1 = arith.constant 0 : i32
    return %c0_i32, %c0_i32_0 : i32, i32
  }
  func.func @transform_4(%arg0: i32) -> (i32, i32) {
    %c0_i32 = arith.constant 0 : i32
    %c0_i32_0 = arith.constant 0 : i32
    %c0_i32_1 = arith.constant 0 : i32
    return %c0_i32, %c0_i32_0 : i32, i32
  }
  func.func @transform_5(%arg0: i32) -> (i32, i32) {
    %c0_i32 = arith.constant 0 : i32
    %c0_i32_0 = arith.constant 0 : i32
    %c0_i32_1 = arith.constant 0 : i32
    return %c0_i32, %c0_i32_0 : i32, i32
  }
  func.func @transform_6(%arg0: i32) -> (i32, i32) {
    %c0_i32 = arith.constant 0 : i32
    %c0_i32_0 = arith.constant 0 : i32
    %c0_i32_1 = arith.constant 0 : i32
    return %c0_i32, %c0_i32_0 : i32, i32
  }
  func.func @transform_7(%arg0: i32) -> (i32, i32) {
    %c0_i32 = arith.constant 0 : i32
    %c0_i32_0 = arith.constant 0 : i32
    return %arg0, %c0_i32 : i32, i32
  }
}

module attributes {stable_mosaic.version = 11 : i64} {
  func.func @_attn_block_kernel(%arg0: i32, %arg1: memref<1x5x32xf32, #tpu.memory_space<vmem>>, %arg2: memref<1x32xf32, #tpu.memory_space<vmem>>, %arg3: memref<1x32xf32, #tpu.memory_space<vmem>>, %arg4: memref<32x96xbf16, #tpu.memory_space<vmem>>, %arg5: memref<1x96xf32, #tpu.memory_space<vmem>>, %arg6: memref<32x32xbf16, #tpu.memory_space<vmem>>, %arg7: memref<1x32xf32, #tpu.memory_space<vmem>>, %arg8: memref<1x5x32xf32, #tpu.memory_space<vmem>>) attributes {dimension_semantics = [#tpu.dimension_semantics<parallel>], iteration_bounds = array<i64: 2>, scalar_prefetch = 0 : i64, scratch_operands = 0 : i64, tpu.core_type = #tpu.core_type<tc>, window_params = [{transform_indices = @transform_0, window_bounds = array<i64: 1, 5, 32>}, {pipeline_mode = #tpu.pipeline_mode<synchronous>, transform_indices = @transform_1, window_bounds = array<i64: 1, 32>}, {pipeline_mode = #tpu.pipeline_mode<synchronous>, transform_indices = @transform_2, window_bounds = array<i64: 1, 32>}, {pipeline_mode = #tpu.pipeline_mode<synchronous>, transform_indices = @transform_3, window_bounds = array<i64: 32, 96>}, {pipeline_mode = #tpu.pipeline_mode<synchronous>, transform_indices = @transform_4, window_bounds = array<i64: 1, 96>}, {pipeline_mode = #tpu.pipeline_mode<synchronous>, transform_indices = @transform_5, window_bounds = array<i64: 32, 32>}, {pipeline_mode = #tpu.pipeline_mode<synchronous>, transform_indices = @transform_6, window_bounds = array<i64: 1, 32>}, {transform_indices = @transform_7, window_bounds = array<i64: 1, 5, 32>}]} {
    %c0 = arith.constant 0 : index
    %c0_0 = arith.constant 0 : index
    %c0_1 = arith.constant 0 : index
    %0 = vector.load %arg1[%c0, %c0_0, %c0_1] : memref<1x5x32xf32, #tpu.memory_space<vmem>>, vector<1x5x32xf32>
    %1 = vector.shape_cast %0 : vector<1x5x32xf32> to vector<5x32xf32>
    %cst = arith.constant dense<0.000000e+00> : vector<5xf32>
    %2 = vector.multi_reduction <add>, %1, %cst [1] : vector<5x32xf32> to vector<5xf32>
    %3 = vector.shape_cast %2 : vector<5xf32> to vector<5x1xf32>
    %cst_2 = arith.constant 3.200000e+01 : f32
    %4 = vector.broadcast %cst_2 : f32 to vector<5x1xf32>
    %5 = arith.divf %3, %4 : vector<5x1xf32>
    %6 = vector.broadcast %5 : vector<5x1xf32> to vector<5x32xf32>
    %7 = arith.subf %1, %6 : vector<5x32xf32>
    %8 = arith.mulf %7, %7 : vector<5x32xf32>
    %cst_3 = arith.constant dense<0.000000e+00> : vector<5xf32>
    %9 = vector.multi_reduction <add>, %8, %cst_3 [1] : vector<5x32xf32> to vector<5xf32>
    %10 = vector.shape_cast %9 : vector<5xf32> to vector<5x1xf32>
    %cst_4 = arith.constant 3.200000e+01 : f32
    %11 = vector.broadcast %cst_4 : f32 to vector<5x1xf32>
    %12 = arith.divf %10, %11 : vector<5x1xf32>
    %13 = vector.broadcast %5 : vector<5x1xf32> to vector<5x32xf32>
    %14 = arith.subf %1, %13 : vector<5x32xf32>
    %cst_5 = arith.constant 9.99999974E-6 : f32
    %15 = vector.broadcast %cst_5 : f32 to vector<5x1xf32>
    %16 = arith.addf %12, %15 : vector<5x1xf32>
    %17 = math.rsqrt %16 : vector<5x1xf32>
    %18 = vector.broadcast %17 : vector<5x1xf32> to vector<5x32xf32>
    %19 = arith.mulf %14, %18 : vector<5x32xf32>
    %c0_6 = arith.constant 0 : index
    %c0_7 = arith.constant 0 : index
    %20 = vector.load %arg2[%c0_6, %c0_7] : memref<1x32xf32, #tpu.memory_space<vmem>>, vector<1x32xf32>
    %21 = vector.broadcast %20 : vector<1x32xf32> to vector<5x32xf32>
    %22 = arith.mulf %19, %21 : vector<5x32xf32>
    %c0_8 = arith.constant 0 : index
    %c0_9 = arith.constant 0 : index
    %23 = vector.load %arg3[%c0_8, %c0_9] : memref<1x32xf32, #tpu.memory_space<vmem>>, vector<1x32xf32>
    %24 = vector.broadcast %23 : vector<1x32xf32> to vector<5x32xf32>
    %25 = arith.addf %22, %24 : vector<5x32xf32>
    %26 = arith.truncf %25 : vector<5x32xf32> to vector<5x32xbf16>
    %c0_10 = arith.constant 0 : index
    %c0_11 = arith.constant 0 : index
    %27 = vector.load %arg4[%c0_10, %c0_11] : memref<32x96xbf16, #tpu.memory_space<vmem>>, vector<32x96xbf16>
    %cst_12 = arith.constant dense<0.000000e+00> : vector<5x96xf32>
    %28 = tpu.matmul %26, %27, %cst_12 {dimension_numbers = #tpu.dot_dimension_numbers<[1], [0], [0], [1], [0, 0, 1, 1], [], []>} : vector<5x32xbf16>, vector<32x96xbf16>, vector<5x96xf32> -> vector<5x96xf32>
    %c0_13 = arith.constant 0 : index
    %c0_14 = arith.constant 0 : index
    %29 = vector.load %arg5[%c0_13, %c0_14] : memref<1x96xf32, #tpu.memory_space<vmem>>, vector<1x96xf32>
    %30 = vector.broadcast %29 : vector<1x96xf32> to vector<5x96xf32>
    %31 = arith.addf %28, %30 : vector<5x96xf32>
    %32 = vector.extract_strided_slice %31 {offsets = [0, 0], sizes = [5, 8], strides = [1, 1]} : vector<5x96xf32> to vector<5x8xf32>
    %cst_15 = arith.constant 0.353553385 : f32
    %33 = vector.broadcast %cst_15 : f32 to vector<5x8xf32>
    %34 = arith.mulf %32, %33 : vector<5x8xf32>
    %35 = vector.extract_strided_slice %31 {offsets = [0, 32], sizes = [5, 8], strides = [1, 1]} : vector<5x96xf32> to vector<5x8xf32>
    %36 = vector.extract_strided_slice %31 {offsets = [0, 64], sizes = [5, 8], strides = [1, 1]} : vector<5x96xf32> to vector<5x8xf32>
    %37 = arith.truncf %34 : vector<5x8xf32> to vector<5x8xbf16>
    %38 = arith.truncf %35 : vector<5x8xf32> to vector<5x8xbf16>
    %cst_16 = arith.constant dense<0.000000e+00> : vector<5x5xf32>
    %39 = tpu.matmul %37, %38, %cst_16 {dimension_numbers = #tpu.dot_dimension_numbers<[1], [1], [0], [0], [0, 0, 1, 0], [], []>} : vector<5x8xbf16>, vector<5x8xbf16>, vector<5x5xf32> -> vector<5x5xf32>
    %cst_17 = arith.constant dense<0xFF800000> : vector<5xf32>
    %40 = vector.multi_reduction <maximumf>, %39, %cst_17 [1] : vector<5x5xf32> to vector<5xf32>
    %41 = vector.shape_cast %40 : vector<5xf32> to vector<5x1xf32>
    %42 = vector.broadcast %41 : vector<5x1xf32> to vector<5x5xf32>
    %43 = arith.subf %39, %42 : vector<5x5xf32>
    %44 = math.exp %43 : vector<5x5xf32>
    %cst_18 = arith.constant dense<0.000000e+00> : vector<5xf32>
    %45 = vector.multi_reduction <add>, %44, %cst_18 [1] : vector<5x5xf32> to vector<5xf32>
    %46 = vector.shape_cast %45 : vector<5xf32> to vector<5x1xf32>
    %47 = tpu.reciprocal %46 {approx = true} : vector<5x1xf32> -> vector<5x1xf32>
    %48 = vector.broadcast %47 : vector<5x1xf32> to vector<5x5xf32>
    %49 = arith.mulf %44, %48 : vector<5x5xf32>
    %50 = arith.truncf %49 : vector<5x5xf32> to vector<5x5xbf16>
    %51 = arith.truncf %36 : vector<5x8xf32> to vector<5x8xbf16>
    %cst_19 = arith.constant dense<0.000000e+00> : vector<5x8xf32>
    %52 = tpu.matmul %50, %51, %cst_19 {dimension_numbers = #tpu.dot_dimension_numbers<[1], [0], [0], [1], [0, 0, 1, 1], [], []>} : vector<5x5xbf16>, vector<5x8xbf16>, vector<5x8xf32> -> vector<5x8xf32>
    %53 = vector.extract_strided_slice %31 {offsets = [0, 8], sizes = [5, 8], strides = [1, 1]} : vector<5x96xf32> to vector<5x8xf32>
    %cst_20 = arith.constant 0.353553385 : f32
    %54 = vector.broadcast %cst_20 : f32 to vector<5x8xf32>
    %55 = arith.mulf %53, %54 : vector<5x8xf32>
    %56 = vector.extract_strided_slice %31 {offsets = [0, 40], sizes = [5, 8], strides = [1, 1]} : vector<5x96xf32> to vector<5x8xf32>
    %57 = vector.extract_strided_slice %31 {offsets = [0, 72], sizes = [5, 8], strides = [1, 1]} : vector<5x96xf32> to vector<5x8xf32>
    %58 = arith.truncf %55 : vector<5x8xf32> to vector<5x8xbf16>
    %59 = arith.truncf %56 : vector<5x8xf32> to vector<5x8xbf16>
    %cst_21 = arith.constant dense<0.000000e+00> : vector<5x5xf32>
    %60 = tpu.matmul %58, %59, %cst_21 {dimension_numbers = #tpu.dot_dimension_numbers<[1], [1], [0], [0], [0, 0, 1, 0], [], []>} : vector<5x8xbf16>, vector<5x8xbf16>, vector<5x5xf32> -> vector<5x5xf32>
    %cst_22 = arith.constant dense<0xFF800000> : vector<5xf32>
    %61 = vector.multi_reduction <maximumf>, %60, %cst_22 [1] : vector<5x5xf32> to vector<5xf32>
    %62 = vector.shape_cast %61 : vector<5xf32> to vector<5x1xf32>
    %63 = vector.broadcast %62 : vector<5x1xf32> to vector<5x5xf32>
    %64 = arith.subf %60, %63 : vector<5x5xf32>
    %65 = math.exp %64 : vector<5x5xf32>
    %cst_23 = arith.constant dense<0.000000e+00> : vector<5xf32>
    %66 = vector.multi_reduction <add>, %65, %cst_23 [1] : vector<5x5xf32> to vector<5xf32>
    %67 = vector.shape_cast %66 : vector<5xf32> to vector<5x1xf32>
    %68 = tpu.reciprocal %67 {approx = true} : vector<5x1xf32> -> vector<5x1xf32>
    %69 = vector.broadcast %68 : vector<5x1xf32> to vector<5x5xf32>
    %70 = arith.mulf %65, %69 : vector<5x5xf32>
    %71 = arith.truncf %70 : vector<5x5xf32> to vector<5x5xbf16>
    %72 = arith.truncf %57 : vector<5x8xf32> to vector<5x8xbf16>
    %cst_24 = arith.constant dense<0.000000e+00> : vector<5x8xf32>
    %73 = tpu.matmul %71, %72, %cst_24 {dimension_numbers = #tpu.dot_dimension_numbers<[1], [0], [0], [1], [0, 0, 1, 1], [], []>} : vector<5x5xbf16>, vector<5x8xbf16>, vector<5x8xf32> -> vector<5x8xf32>
    %74 = vector.extract_strided_slice %31 {offsets = [0, 16], sizes = [5, 8], strides = [1, 1]} : vector<5x96xf32> to vector<5x8xf32>
    %cst_25 = arith.constant 0.353553385 : f32
    %75 = vector.broadcast %cst_25 : f32 to vector<5x8xf32>
    %76 = arith.mulf %74, %75 : vector<5x8xf32>
    %77 = vector.extract_strided_slice %31 {offsets = [0, 48], sizes = [5, 8], strides = [1, 1]} : vector<5x96xf32> to vector<5x8xf32>
    %78 = vector.extract_strided_slice %31 {offsets = [0, 80], sizes = [5, 8], strides = [1, 1]} : vector<5x96xf32> to vector<5x8xf32>
    %79 = arith.truncf %76 : vector<5x8xf32> to vector<5x8xbf16>
    %80 = arith.truncf %77 : vector<5x8xf32> to vector<5x8xbf16>
    %cst_26 = arith.constant dense<0.000000e+00> : vector<5x5xf32>
    %81 = tpu.matmul %79, %80, %cst_26 {dimension_numbers = #tpu.dot_dimension_numbers<[1], [1], [0], [0], [0, 0, 1, 0], [], []>} : vector<5x8xbf16>, vector<5x8xbf16>, vector<5x5xf32> -> vector<5x5xf32>
    %cst_27 = arith.constant dense<0xFF800000> : vector<5xf32>
    %82 = vector.multi_reduction <maximumf>, %81, %cst_27 [1] : vector<5x5xf32> to vector<5xf32>
    %83 = vector.shape_cast %82 : vector<5xf32> to vector<5x1xf32>
    %84 = vector.broadcast %83 : vector<5x1xf32> to vector<5x5xf32>
    %85 = arith.subf %81, %84 : vector<5x5xf32>
    %86 = math.exp %85 : vector<5x5xf32>
    %cst_28 = arith.constant dense<0.000000e+00> : vector<5xf32>
    %87 = vector.multi_reduction <add>, %86, %cst_28 [1] : vector<5x5xf32> to vector<5xf32>
    %88 = vector.shape_cast %87 : vector<5xf32> to vector<5x1xf32>
    %89 = tpu.reciprocal %88 {approx = true} : vector<5x1xf32> -> vector<5x1xf32>
    %90 = vector.broadcast %89 : vector<5x1xf32> to vector<5x5xf32>
    %91 = arith.mulf %86, %90 : vector<5x5xf32>
    %92 = arith.truncf %91 : vector<5x5xf32> to vector<5x5xbf16>
    %93 = arith.truncf %78 : vector<5x8xf32> to vector<5x8xbf16>
    %cst_29 = arith.constant dense<0.000000e+00> : vector<5x8xf32>
    %94 = tpu.matmul %92, %93, %cst_29 {dimension_numbers = #tpu.dot_dimension_numbers<[1], [0], [0], [1], [0, 0, 1, 1], [], []>} : vector<5x5xbf16>, vector<5x8xbf16>, vector<5x8xf32> -> vector<5x8xf32>
    %95 = vector.extract_strided_slice %31 {offsets = [0, 24], sizes = [5, 8], strides = [1, 1]} : vector<5x96xf32> to vector<5x8xf32>
    %cst_30 = arith.constant 0.353553385 : f32
    %96 = vector.broadcast %cst_30 : f32 to vector<5x8xf32>
    %97 = arith.mulf %95, %96 : vector<5x8xf32>
    %98 = vector.extract_strided_slice %31 {offsets = [0, 56], sizes = [5, 8], strides = [1, 1]} : vector<5x96xf32> to vector<5x8xf32>
    %99 = vector.extract_strided_slice %31 {offsets = [0, 88], sizes = [5, 8], strides = [1, 1]} : vector<5x96xf32> to vector<5x8xf32>
    %100 = arith.truncf %97 : vector<5x8xf32> to vector<5x8xbf16>
    %101 = arith.truncf %98 : vector<5x8xf32> to vector<5x8xbf16>
    %cst_31 = arith.constant dense<0.000000e+00> : vector<5x5xf32>
    %102 = tpu.matmul %100, %101, %cst_31 {dimension_numbers = #tpu.dot_dimension_numbers<[1], [1], [0], [0], [0, 0, 1, 0], [], []>} : vector<5x8xbf16>, vector<5x8xbf16>, vector<5x5xf32> -> vector<5x5xf32>
    %cst_32 = arith.constant dense<0xFF800000> : vector<5xf32>
    %103 = vector.multi_reduction <maximumf>, %102, %cst_32 [1] : vector<5x5xf32> to vector<5xf32>
    %104 = vector.shape_cast %103 : vector<5xf32> to vector<5x1xf32>
    %105 = vector.broadcast %104 : vector<5x1xf32> to vector<5x5xf32>
    %106 = arith.subf %102, %105 : vector<5x5xf32>
    %107 = math.exp %106 : vector<5x5xf32>
    %cst_33 = arith.constant dense<0.000000e+00> : vector<5xf32>
    %108 = vector.multi_reduction <add>, %107, %cst_33 [1] : vector<5x5xf32> to vector<5xf32>
    %109 = vector.shape_cast %108 : vector<5xf32> to vector<5x1xf32>
    %110 = tpu.reciprocal %109 {approx = true} : vector<5x1xf32> -> vector<5x1xf32>
    %111 = vector.broadcast %110 : vector<5x1xf32> to vector<5x5xf32>
    %112 = arith.mulf %107, %111 : vector<5x5xf32>
    %113 = arith.truncf %112 : vector<5x5xf32> to vector<5x5xbf16>
    %114 = arith.truncf %99 : vector<5x8xf32> to vector<5x8xbf16>
    %cst_34 = arith.constant dense<0.000000e+00> : vector<5x8xf32>
    %115 = tpu.matmul %113, %114, %cst_34 {dimension_numbers = #tpu.dot_dimension_numbers<[1], [0], [0], [1], [0, 0, 1, 1], [], []>} : vector<5x5xbf16>, vector<5x8xbf16>, vector<5x8xf32> -> vector<5x8xf32>
    %116 = tpu.concatenate %52, %73, %94, %115 in 1 : vector<5x8xf32>, vector<5x8xf32>, vector<5x8xf32>, vector<5x8xf32> -> vector<5x32xf32>
    %117 = arith.truncf %116 : vector<5x32xf32> to vector<5x32xbf16>
    %c0_35 = arith.constant 0 : index
    %c0_36 = arith.constant 0 : index
    %118 = vector.load %arg6[%c0_35, %c0_36] : memref<32x32xbf16, #tpu.memory_space<vmem>>, vector<32x32xbf16>
    %cst_37 = arith.constant dense<0.000000e+00> : vector<5x32xf32>
    %119 = tpu.matmul %117, %118, %cst_37 {dimension_numbers = #tpu.dot_dimension_numbers<[1], [0], [0], [1], [0, 0, 1, 1], [], []>} : vector<5x32xbf16>, vector<32x32xbf16>, vector<5x32xf32> -> vector<5x32xf32>
    %c0_38 = arith.constant 0 : index
    %c0_39 = arith.constant 0 : index
    %120 = vector.load %arg7[%c0_38, %c0_39] : memref<1x32xf32, #tpu.memory_space<vmem>>, vector<1x32xf32>
    %121 = vector.broadcast %120 : vector<1x32xf32> to vector<5x32xf32>
    %122 = arith.addf %119, %121 : vector<5x32xf32>
    %123 = arith.addf %1, %122 : vector<5x32xf32>
    %c0_40 = arith.constant 0 : index
    %c0_41 = arith.constant 0 : index
    %c0_42 = arith.constant 0 : index
    %124 = vector.load %arg8[%c0_40, %c0_41, %c0_42] : memref<1x5x32xf32, #tpu.memory_space<vmem>>, vector<1x5x32xf32>
    %125 = vector.shape_cast %124 : vector<1x5x32xf32> to vector<5x32xf32>
    %126 = vector.shape_cast %123 : vector<5x32xf32> to vector<1x5x32xf32>
    tpu.vector_store %arg8[%c0_40, %c0_41, %c0_42], %126 {strides = array<i32>} : memref<1x5x32xf32, #tpu.memory_space<vmem>>, vector<1x5x32xf32>,
    return
  }
  func.func @transform_0(%arg0: i32) -> (i32, i32, i32) {
    %c0_i32 = arith.constant 0 : i32
    %c0_i32_0 = arith.constant 0 : i32
    %c0_i32_1 = arith.constant 0 : i32
    return %arg0, %c0_i32, %c0_i32_0 : i32, i32, i32
  }
  func.func @transform_1(%arg0: i32) -> (i32, i32) {
    %c0_i32 = arith.constant 0 : i32
    %c0_i32_0 = arith.constant 0 : i32
    %c0_i32_1 = arith.constant 0 : i32
    return %c0_i32, %c0_i32_0 : i32, i32
  }
  func.func @transform_2(%arg0: i32) -> (i32, i32) {
    %c0_i32 = arith.constant 0 : i32
    %c0_i32_0 = arith.constant 0 : i32
    %c0_i32_1 = arith.constant 0 : i32
    return %c0_i32, %c0_i32_0 : i32, i32
  }
  func.func @transform_3(%arg0: i32) -> (i32, i32) {
    %c0_i32 = arith.constant 0 : i32
    %c0_i32_0 = arith.constant 0 : i32
    %c0_i32_1 = arith.constant 0 : i32
    return %c0_i32, %c0_i32_0 : i32, i32
  }
  func.func @transform_4(%arg0: i32) -> (i32, i32) {
    %c0_i32 = arith.constant 0 : i32
    %c0_i32_0 = arith.constant 0 : i32
    %c0_i32_1 = arith.constant 0 : i32
    return %c0_i32, %c0_i32_0 : i32, i32
  }
  func.func @transform_5(%arg0: i32) -> (i32, i32) {
    %c0_i32 = arith.constant 0 : i32
    %c0_i32_0 = arith.constant 0 : i32
    %c0_i32_1 = arith.constant 0 : i32
    return %c0_i32, %c0_i32_0 : i32, i32
  }
  func.func @transform_6(%arg0: i32) -> (i32, i32) {
    %c0_i32 = arith.constant 0 : i32
    %c0_i32_0 = arith.constant 0 : i32
    %c0_i32_1 = arith.constant 0 : i32
    return %c0_i32, %c0_i32_0 : i32, i32
  }
  func.func @transform_7(%arg0: i32) -> (i32, i32, i32) {
    %c0_i32 = arith.constant 0 : i32
    %c0_i32_0 = arith.constant 0 : i32
    %c0_i32_1 = arith.constant 0 : i32
    return %arg0, %c0_i32, %c0_i32_0 : i32, i32, i32
  }
}

module attributes {stable_mosaic.version = 11 : i64} {
  func.func @_ln_linear_kernel(%arg0: i32, %arg1: memref<10x32xf32, #tpu.memory_space<vmem>>, %arg2: memref<1x32xf32, #tpu.memory_space<vmem>>, %arg3: memref<1x32xf32, #tpu.memory_space<vmem>>, %arg4: memref<32x128xbf16, #tpu.memory_space<vmem>>, %arg5: memref<1x128xf32, #tpu.memory_space<vmem>>, %arg6: memref<10x128xf32, #tpu.memory_space<vmem>>) attributes {dimension_semantics = [#tpu.dimension_semantics<parallel>], iteration_bounds = array<i64: 1>, scalar_prefetch = 0 : i64, scratch_operands = 0 : i64, tpu.core_type = #tpu.core_type<tc>, window_params = [{transform_indices = @transform_0, window_bounds = array<i64: 10, 32>}, {pipeline_mode = #tpu.pipeline_mode<synchronous>, transform_indices = @transform_1, window_bounds = array<i64: 1, 32>}, {pipeline_mode = #tpu.pipeline_mode<synchronous>, transform_indices = @transform_2, window_bounds = array<i64: 1, 32>}, {pipeline_mode = #tpu.pipeline_mode<synchronous>, transform_indices = @transform_3, window_bounds = array<i64: 32, 128>}, {pipeline_mode = #tpu.pipeline_mode<synchronous>, transform_indices = @transform_4, window_bounds = array<i64: 1, 128>}, {transform_indices = @transform_5, window_bounds = array<i64: 10, 128>}]} {
    %c0 = arith.constant 0 : index
    %c0_0 = arith.constant 0 : index
    %0 = vector.load %arg1[%c0, %c0_0] : memref<10x32xf32, #tpu.memory_space<vmem>>, vector<10x32xf32>
    %cst = arith.constant dense<0.000000e+00> : vector<10xf32>
    %1 = vector.multi_reduction <add>, %0, %cst [1] : vector<10x32xf32> to vector<10xf32>
    %2 = vector.shape_cast %1 : vector<10xf32> to vector<10x1xf32>
    %cst_1 = arith.constant 3.200000e+01 : f32
    %3 = vector.broadcast %cst_1 : f32 to vector<10x1xf32>
    %4 = arith.divf %2, %3 : vector<10x1xf32>
    %5 = vector.broadcast %4 : vector<10x1xf32> to vector<10x32xf32>
    %6 = arith.subf %0, %5 : vector<10x32xf32>
    %7 = arith.mulf %6, %6 : vector<10x32xf32>
    %cst_2 = arith.constant dense<0.000000e+00> : vector<10xf32>
    %8 = vector.multi_reduction <add>, %7, %cst_2 [1] : vector<10x32xf32> to vector<10xf32>
    %9 = vector.shape_cast %8 : vector<10xf32> to vector<10x1xf32>
    %cst_3 = arith.constant 3.200000e+01 : f32
    %10 = vector.broadcast %cst_3 : f32 to vector<10x1xf32>
    %11 = arith.divf %9, %10 : vector<10x1xf32>
    %12 = vector.broadcast %4 : vector<10x1xf32> to vector<10x32xf32>
    %13 = arith.subf %0, %12 : vector<10x32xf32>
    %cst_4 = arith.constant 9.99999974E-6 : f32
    %14 = vector.broadcast %cst_4 : f32 to vector<10x1xf32>
    %15 = arith.addf %11, %14 : vector<10x1xf32>
    %16 = math.rsqrt %15 : vector<10x1xf32>
    %17 = vector.broadcast %16 : vector<10x1xf32> to vector<10x32xf32>
    %18 = arith.mulf %13, %17 : vector<10x32xf32>
    %c0_5 = arith.constant 0 : index
    %c0_6 = arith.constant 0 : index
    %19 = vector.load %arg2[%c0_5, %c0_6] : memref<1x32xf32, #tpu.memory_space<vmem>>, vector<1x32xf32>
    %20 = vector.broadcast %19 : vector<1x32xf32> to vector<10x32xf32>
    %21 = arith.mulf %18, %20 : vector<10x32xf32>
    %c0_7 = arith.constant 0 : index
    %c0_8 = arith.constant 0 : index
    %22 = vector.load %arg3[%c0_7, %c0_8] : memref<1x32xf32, #tpu.memory_space<vmem>>, vector<1x32xf32>
    %23 = vector.broadcast %22 : vector<1x32xf32> to vector<10x32xf32>
    %24 = arith.addf %21, %23 : vector<10x32xf32>
    %25 = arith.truncf %24 : vector<10x32xf32> to vector<10x32xbf16>
    %c0_9 = arith.constant 0 : index
    %c0_10 = arith.constant 0 : index
    %26 = vector.load %arg4[%c0_9, %c0_10] : memref<32x128xbf16, #tpu.memory_space<vmem>>, vector<32x128xbf16>
    %cst_11 = arith.constant dense<0.000000e+00> : vector<10x128xf32>
    %27 = tpu.matmul %25, %26, %cst_11 {dimension_numbers = #tpu.dot_dimension_numbers<[1], [0], [0], [1], [0, 0, 1, 1], [], []>} : vector<10x32xbf16>, vector<32x128xbf16>, vector<10x128xf32> -> vector<10x128xf32>
    %c0_12 = arith.constant 0 : index
    %c0_13 = arith.constant 0 : index
    %28 = vector.load %arg5[%c0_12, %c0_13] : memref<1x128xf32, #tpu.memory_space<vmem>>, vector<1x128xf32>
    %29 = vector.broadcast %28 : vector<1x128xf32> to vector<10x128xf32>
    %30 = arith.addf %27, %29 : vector<10x128xf32>
    %c0_14 = arith.constant 0 : index
    %c0_15 = arith.constant 0 : index
    %31 = vector.load %arg6[%c0_14, %c0_15] : memref<10x128xf32, #tpu.memory_space<vmem>>, vector<10x128xf32>
    tpu.vector_store %arg6[%c0_14, %c0_15], %30 {strides = array<i32>} : memref<10x128xf32, #tpu.memory_space<vmem>>, vector<10x128xf32>,
    return
  }
  func.func @transform_0(%arg0: i32) -> (i32, i32) {
    %c0_i32 = arith.constant 0 : i32
    %c0_i32_0 = arith.constant 0 : i32
    return %arg0, %c0_i32 : i32, i32
  }
  func.func @transform_1(%arg0: i32) -> (i32, i32) {
    %c0_i32 = arith.constant 0 : i32
    %c0_i32_0 = arith.constant 0 : i32
    %c0_i32_1 = arith.constant 0 : i32
    return %c0_i32, %c0_i32_0 : i32, i32
  }
  func.func @transform_2(%arg0: i32) -> (i32, i32) {
    %c0_i32 = arith.constant 0 : i32
    %c0_i32_0 = arith.constant 0 : i32
    %c0_i32_1 = arith.constant 0 : i32
    return %c0_i32, %c0_i32_0 : i32, i32
  }
  func.func @transform_3(%arg0: i32) -> (i32, i32) {
    %c0_i32 = arith.constant 0 : i32
    %c0_i32_0 = arith.constant 0 : i32
    %c0_i32_1 = arith.constant 0 : i32
    return %c0_i32, %c0_i32_0 : i32, i32
  }
  func.func @transform_4(%arg0: i32) -> (i32, i32) {
    %c0_i32 = arith.constant 0 : i32
    %c0_i32_0 = arith.constant 0 : i32
    %c0_i32_1 = arith.constant 0 : i32
    return %c0_i32, %c0_i32_0 : i32, i32
  }
  func.func @transform_5(%arg0: i32) -> (i32, i32) {
    %c0_i32 = arith.constant 0 : i32
    %c0_i32_0 = arith.constant 0 : i32
    return %arg0, %c0_i32 : i32, i32
  }
}

module attributes {stable_mosaic.version = 11 : i64} {
  func.func @_mlp_block_kernel(%arg0: i32, %arg1: memref<18x32xf32, #tpu.memory_space<vmem>>, %arg2: memref<1x32xf32, #tpu.memory_space<vmem>>, %arg3: memref<1x32xf32, #tpu.memory_space<vmem>>, %arg4: memref<32x128xbf16, #tpu.memory_space<vmem>>, %arg5: memref<1x128xf32, #tpu.memory_space<vmem>>, %arg6: memref<128x32xbf16, #tpu.memory_space<vmem>>, %arg7: memref<1x32xf32, #tpu.memory_space<vmem>>, %arg8: memref<18x32xf32, #tpu.memory_space<vmem>>) attributes {dimension_semantics = [#tpu.dimension_semantics<parallel>], iteration_bounds = array<i64: 1>, scalar_prefetch = 0 : i64, scratch_operands = 0 : i64, tpu.core_type = #tpu.core_type<tc>, window_params = [{transform_indices = @transform_0, window_bounds = array<i64: 18, 32>}, {pipeline_mode = #tpu.pipeline_mode<synchronous>, transform_indices = @transform_1, window_bounds = array<i64: 1, 32>}, {pipeline_mode = #tpu.pipeline_mode<synchronous>, transform_indices = @transform_2, window_bounds = array<i64: 1, 32>}, {pipeline_mode = #tpu.pipeline_mode<synchronous>, transform_indices = @transform_3, window_bounds = array<i64: 32, 128>}, {pipeline_mode = #tpu.pipeline_mode<synchronous>, transform_indices = @transform_4, window_bounds = array<i64: 1, 128>}, {pipeline_mode = #tpu.pipeline_mode<synchronous>, transform_indices = @transform_5, window_bounds = array<i64: 128, 32>}, {pipeline_mode = #tpu.pipeline_mode<synchronous>, transform_indices = @transform_6, window_bounds = array<i64: 1, 32>}, {transform_indices = @transform_7, window_bounds = array<i64: 18, 32>}]} {
    %c0 = arith.constant 0 : index
    %c0_0 = arith.constant 0 : index
    %0 = vector.load %arg1[%c0, %c0_0] : memref<18x32xf32, #tpu.memory_space<vmem>>, vector<18x32xf32>
    %cst = arith.constant dense<0.000000e+00> : vector<18xf32>
    %1 = vector.multi_reduction <add>, %0, %cst [1] : vector<18x32xf32> to vector<18xf32>
    %2 = vector.shape_cast %1 : vector<18xf32> to vector<18x1xf32>
    %cst_1 = arith.constant 3.200000e+01 : f32
    %3 = vector.broadcast %cst_1 : f32 to vector<18x1xf32>
    %4 = arith.divf %2, %3 : vector<18x1xf32>
    %5 = vector.broadcast %4 : vector<18x1xf32> to vector<18x32xf32>
    %6 = arith.subf %0, %5 : vector<18x32xf32>
    %7 = arith.mulf %6, %6 : vector<18x32xf32>
    %cst_2 = arith.constant dense<0.000000e+00> : vector<18xf32>
    %8 = vector.multi_reduction <add>, %7, %cst_2 [1] : vector<18x32xf32> to vector<18xf32>
    %9 = vector.shape_cast %8 : vector<18xf32> to vector<18x1xf32>
    %cst_3 = arith.constant 3.200000e+01 : f32
    %10 = vector.broadcast %cst_3 : f32 to vector<18x1xf32>
    %11 = arith.divf %9, %10 : vector<18x1xf32>
    %12 = vector.broadcast %4 : vector<18x1xf32> to vector<18x32xf32>
    %13 = arith.subf %0, %12 : vector<18x32xf32>
    %cst_4 = arith.constant 9.99999974E-6 : f32
    %14 = vector.broadcast %cst_4 : f32 to vector<18x1xf32>
    %15 = arith.addf %11, %14 : vector<18x1xf32>
    %16 = math.rsqrt %15 : vector<18x1xf32>
    %17 = vector.broadcast %16 : vector<18x1xf32> to vector<18x32xf32>
    %18 = arith.mulf %13, %17 : vector<18x32xf32>
    %c0_5 = arith.constant 0 : index
    %c0_6 = arith.constant 0 : index
    %19 = vector.load %arg2[%c0_5, %c0_6] : memref<1x32xf32, #tpu.memory_space<vmem>>, vector<1x32xf32>
    %20 = vector.broadcast %19 : vector<1x32xf32> to vector<18x32xf32>
    %21 = arith.mulf %18, %20 : vector<18x32xf32>
    %c0_7 = arith.constant 0 : index
    %c0_8 = arith.constant 0 : index
    %22 = vector.load %arg3[%c0_7, %c0_8] : memref<1x32xf32, #tpu.memory_space<vmem>>, vector<1x32xf32>
    %23 = vector.broadcast %22 : vector<1x32xf32> to vector<18x32xf32>
    %24 = arith.addf %21, %23 : vector<18x32xf32>
    %25 = arith.truncf %24 : vector<18x32xf32> to vector<18x32xbf16>
    %c0_9 = arith.constant 0 : index
    %c0_10 = arith.constant 0 : index
    %26 = vector.load %arg4[%c0_9, %c0_10] : memref<32x128xbf16, #tpu.memory_space<vmem>>, vector<32x128xbf16>
    %cst_11 = arith.constant dense<0.000000e+00> : vector<18x128xf32>
    %27 = tpu.matmul %25, %26, %cst_11 {dimension_numbers = #tpu.dot_dimension_numbers<[1], [0], [0], [1], [0, 0, 1, 1], [], []>} : vector<18x32xbf16>, vector<32x128xbf16>, vector<18x128xf32> -> vector<18x128xf32>
    %c0_12 = arith.constant 0 : index
    %c0_13 = arith.constant 0 : index
    %28 = vector.load %arg5[%c0_12, %c0_13] : memref<1x128xf32, #tpu.memory_space<vmem>>, vector<1x128xf32>
    %29 = vector.broadcast %28 : vector<1x128xf32> to vector<18x128xf32>
    %30 = arith.addf %27, %29 : vector<18x128xf32>
    %31 = arith.mulf %30, %30 : vector<18x128xf32>
    %32 = arith.mulf %30, %31 : vector<18x128xf32>
    %cst_14 = arith.constant 4.471500e-02 : f32
    %33 = vector.broadcast %cst_14 : f32 to vector<18x128xf32>
    %34 = arith.mulf %33, %32 : vector<18x128xf32>
    %35 = arith.addf %30, %34 : vector<18x128xf32>
    %cst_15 = arith.constant 0.797884583 : f32
    %36 = vector.broadcast %cst_15 : f32 to vector<18x128xf32>
    %37 = arith.mulf %36, %35 : vector<18x128xf32>
    %38 = math.tanh %37 : vector<18x128xf32>
    %cst_16 = arith.constant 1.000000e+00 : f32
    %39 = vector.broadcast %cst_16 : f32 to vector<18x128xf32>
    %40 = arith.addf %39, %38 : vector<18x128xf32>
    %cst_17 = arith.constant 5.000000e-01 : f32
    %41 = vector.broadcast %cst_17 : f32 to vector<18x128xf32>
    %42 = arith.mulf %41, %40 : vector<18x128xf32>
    %43 = arith.mulf %30, %42 : vector<18x128xf32>
    %44 = arith.truncf %43 : vector<18x128xf32> to vector<18x128xbf16>
    %c0_18 = arith.constant 0 : index
    %c0_19 = arith.constant 0 : index
    %45 = vector.load %arg6[%c0_18, %c0_19] : memref<128x32xbf16, #tpu.memory_space<vmem>>, vector<128x32xbf16>
    %cst_20 = arith.constant dense<0.000000e+00> : vector<18x32xf32>
    %46 = tpu.matmul %44, %45, %cst_20 {dimension_numbers = #tpu.dot_dimension_numbers<[1], [0], [0], [1], [0, 0, 1, 1], [], []>} : vector<18x128xbf16>, vector<128x32xbf16>, vector<18x32xf32> -> vector<18x32xf32>
    %c0_21 = arith.constant 0 : index
    %c0_22 = arith.constant 0 : index
    %47 = vector.load %arg7[%c0_21, %c0_22] : memref<1x32xf32, #tpu.memory_space<vmem>>, vector<1x32xf32>
    %48 = vector.broadcast %47 : vector<1x32xf32> to vector<18x32xf32>
    %49 = arith.addf %46, %48 : vector<18x32xf32>
    %50 = arith.addf %0, %49 : vector<18x32xf32>
    %c0_23 = arith.constant 0 : index
    %c0_24 = arith.constant 0 : index
    %51 = vector.load %arg8[%c0_23, %c0_24] : memref<18x32xf32, #tpu.memory_space<vmem>>, vector<18x32xf32>
    tpu.vector_store %arg8[%c0_23, %c0_24], %50 {strides = array<i32>} : memref<18x32xf32, #tpu.memory_space<vmem>>, vector<18x32xf32>,
    return
  }
  func.func @transform_0(%arg0: i32) -> (i32, i32) {
    %c0_i32 = arith.constant 0 : i32
    %c0_i32_0 = arith.constant 0 : i32
    return %arg0, %c0_i32 : i32, i32
  }
  func.func @transform_1(%arg0: i32) -> (i32, i32) {
    %c0_i32 = arith.constant 0 : i32
    %c0_i32_0 = arith.constant 0 : i32
    %c0_i32_1 = arith.constant 0 : i32
    return %c0_i32, %c0_i32_0 : i32, i32
  }
  func.func @transform_2(%arg0: i32) -> (i32, i32) {
    %c0_i32 = arith.constant 0 : i32
    %c0_i32_0 = arith.constant 0 : i32
    %c0_i32_1 = arith.constant 0 : i32
    return %c0_i32, %c0_i32_0 : i32, i32
  }
  func.func @transform_3(%arg0: i32) -> (i32, i32) {
    %c0_i32 = arith.constant 0 : i32
    %c0_i32_0 = arith.constant 0 : i32
    %c0_i32_1 = arith.constant 0 : i32
    return %c0_i32, %c0_i32_0 : i32, i32
  }
  func.func @transform_4(%arg0: i32) -> (i32, i32) {
    %c0_i32 = arith.constant 0 : i32
    %c0_i32_0 = arith.constant 0 : i32
    %c0_i32_1 = arith.constant 0 : i32
    return %c0_i32, %c0_i32_0 : i32, i32
  }
  func.func @transform_5(%arg0: i32) -> (i32, i32) {
    %c0_i32 = arith.constant 0 : i32
    %c0_i32_0 = arith.constant 0 : i32
    %c0_i32_1 = arith.constant 0 : i32
    return %c0_i32, %c0_i32_0 : i32, i32
  }
  func.func @transform_6(%arg0: i32) -> (i32, i32) {
    %c0_i32 = arith.constant 0 : i32
    %c0_i32_0 = arith.constant 0 : i32
    %c0_i32_1 = arith.constant 0 : i32
    return %c0_i32, %c0_i32_0 : i32, i32
  }
  func.func @transform_7(%arg0: i32) -> (i32, i32) {
    %c0_i32 = arith.constant 0 : i32
    %c0_i32_0 = arith.constant 0 : i32
    return %arg0, %c0_i32 : i32, i32
  }
}

module attributes {stable_mosaic.version = 11 : i64} {
  func.func @_attn_block_kernel(%arg0: i32, %arg1: memref<1x9x32xf32, #tpu.memory_space<vmem>>, %arg2: memref<1x32xf32, #tpu.memory_space<vmem>>, %arg3: memref<1x32xf32, #tpu.memory_space<vmem>>, %arg4: memref<32x96xbf16, #tpu.memory_space<vmem>>, %arg5: memref<1x96xf32, #tpu.memory_space<vmem>>, %arg6: memref<32x32xbf16, #tpu.memory_space<vmem>>, %arg7: memref<1x32xf32, #tpu.memory_space<vmem>>, %arg8: memref<1x9x32xf32, #tpu.memory_space<vmem>>) attributes {dimension_semantics = [#tpu.dimension_semantics<parallel>], iteration_bounds = array<i64: 2>, scalar_prefetch = 0 : i64, scratch_operands = 0 : i64, tpu.core_type = #tpu.core_type<tc>, window_params = [{transform_indices = @transform_0, window_bounds = array<i64: 1, 9, 32>}, {pipeline_mode = #tpu.pipeline_mode<synchronous>, transform_indices = @transform_1, window_bounds = array<i64: 1, 32>}, {pipeline_mode = #tpu.pipeline_mode<synchronous>, transform_indices = @transform_2, window_bounds = array<i64: 1, 32>}, {pipeline_mode = #tpu.pipeline_mode<synchronous>, transform_indices = @transform_3, window_bounds = array<i64: 32, 96>}, {pipeline_mode = #tpu.pipeline_mode<synchronous>, transform_indices = @transform_4, window_bounds = array<i64: 1, 96>}, {pipeline_mode = #tpu.pipeline_mode<synchronous>, transform_indices = @transform_5, window_bounds = array<i64: 32, 32>}, {pipeline_mode = #tpu.pipeline_mode<synchronous>, transform_indices = @transform_6, window_bounds = array<i64: 1, 32>}, {transform_indices = @transform_7, window_bounds = array<i64: 1, 9, 32>}]} {
    %c0 = arith.constant 0 : index
    %c0_0 = arith.constant 0 : index
    %c0_1 = arith.constant 0 : index
    %0 = vector.load %arg1[%c0, %c0_0, %c0_1] : memref<1x9x32xf32, #tpu.memory_space<vmem>>, vector<1x9x32xf32>
    %1 = vector.shape_cast %0 : vector<1x9x32xf32> to vector<9x32xf32>
    %cst = arith.constant dense<0.000000e+00> : vector<9xf32>
    %2 = vector.multi_reduction <add>, %1, %cst [1] : vector<9x32xf32> to vector<9xf32>
    %3 = vector.shape_cast %2 : vector<9xf32> to vector<9x1xf32>
    %cst_2 = arith.constant 3.200000e+01 : f32
    %4 = vector.broadcast %cst_2 : f32 to vector<9x1xf32>
    %5 = arith.divf %3, %4 : vector<9x1xf32>
    %6 = vector.broadcast %5 : vector<9x1xf32> to vector<9x32xf32>
    %7 = arith.subf %1, %6 : vector<9x32xf32>
    %8 = arith.mulf %7, %7 : vector<9x32xf32>
    %cst_3 = arith.constant dense<0.000000e+00> : vector<9xf32>
    %9 = vector.multi_reduction <add>, %8, %cst_3 [1] : vector<9x32xf32> to vector<9xf32>
    %10 = vector.shape_cast %9 : vector<9xf32> to vector<9x1xf32>
    %cst_4 = arith.constant 3.200000e+01 : f32
    %11 = vector.broadcast %cst_4 : f32 to vector<9x1xf32>
    %12 = arith.divf %10, %11 : vector<9x1xf32>
    %13 = vector.broadcast %5 : vector<9x1xf32> to vector<9x32xf32>
    %14 = arith.subf %1, %13 : vector<9x32xf32>
    %cst_5 = arith.constant 9.99999974E-6 : f32
    %15 = vector.broadcast %cst_5 : f32 to vector<9x1xf32>
    %16 = arith.addf %12, %15 : vector<9x1xf32>
    %17 = math.rsqrt %16 : vector<9x1xf32>
    %18 = vector.broadcast %17 : vector<9x1xf32> to vector<9x32xf32>
    %19 = arith.mulf %14, %18 : vector<9x32xf32>
    %c0_6 = arith.constant 0 : index
    %c0_7 = arith.constant 0 : index
    %20 = vector.load %arg2[%c0_6, %c0_7] : memref<1x32xf32, #tpu.memory_space<vmem>>, vector<1x32xf32>
    %21 = vector.broadcast %20 : vector<1x32xf32> to vector<9x32xf32>
    %22 = arith.mulf %19, %21 : vector<9x32xf32>
    %c0_8 = arith.constant 0 : index
    %c0_9 = arith.constant 0 : index
    %23 = vector.load %arg3[%c0_8, %c0_9] : memref<1x32xf32, #tpu.memory_space<vmem>>, vector<1x32xf32>
    %24 = vector.broadcast %23 : vector<1x32xf32> to vector<9x32xf32>
    %25 = arith.addf %22, %24 : vector<9x32xf32>
    %26 = arith.truncf %25 : vector<9x32xf32> to vector<9x32xbf16>
    %c0_10 = arith.constant 0 : index
    %c0_11 = arith.constant 0 : index
    %27 = vector.load %arg4[%c0_10, %c0_11] : memref<32x96xbf16, #tpu.memory_space<vmem>>, vector<32x96xbf16>
    %cst_12 = arith.constant dense<0.000000e+00> : vector<9x96xf32>
    %28 = tpu.matmul %26, %27, %cst_12 {dimension_numbers = #tpu.dot_dimension_numbers<[1], [0], [0], [1], [0, 0, 1, 1], [], []>} : vector<9x32xbf16>, vector<32x96xbf16>, vector<9x96xf32> -> vector<9x96xf32>
    %c0_13 = arith.constant 0 : index
    %c0_14 = arith.constant 0 : index
    %29 = vector.load %arg5[%c0_13, %c0_14] : memref<1x96xf32, #tpu.memory_space<vmem>>, vector<1x96xf32>
    %30 = vector.broadcast %29 : vector<1x96xf32> to vector<9x96xf32>
    %31 = arith.addf %28, %30 : vector<9x96xf32>
    %32 = vector.extract_strided_slice %31 {offsets = [0, 0], sizes = [9, 8], strides = [1, 1]} : vector<9x96xf32> to vector<9x8xf32>
    %cst_15 = arith.constant 0.353553385 : f32
    %33 = vector.broadcast %cst_15 : f32 to vector<9x8xf32>
    %34 = arith.mulf %32, %33 : vector<9x8xf32>
    %35 = vector.extract_strided_slice %31 {offsets = [0, 32], sizes = [9, 8], strides = [1, 1]} : vector<9x96xf32> to vector<9x8xf32>
    %36 = vector.extract_strided_slice %31 {offsets = [0, 64], sizes = [9, 8], strides = [1, 1]} : vector<9x96xf32> to vector<9x8xf32>
    %37 = arith.truncf %34 : vector<9x8xf32> to vector<9x8xbf16>
    %38 = arith.truncf %35 : vector<9x8xf32> to vector<9x8xbf16>
    %cst_16 = arith.constant dense<0.000000e+00> : vector<9x9xf32>
    %39 = tpu.matmul %37, %38, %cst_16 {dimension_numbers = #tpu.dot_dimension_numbers<[1], [1], [0], [0], [0, 0, 1, 0], [], []>} : vector<9x8xbf16>, vector<9x8xbf16>, vector<9x9xf32> -> vector<9x9xf32>
    %cst_17 = arith.constant dense<0xFF800000> : vector<9xf32>
    %40 = vector.multi_reduction <maximumf>, %39, %cst_17 [1] : vector<9x9xf32> to vector<9xf32>
    %41 = vector.shape_cast %40 : vector<9xf32> to vector<9x1xf32>
    %42 = vector.broadcast %41 : vector<9x1xf32> to vector<9x9xf32>
    %43 = arith.subf %39, %42 : vector<9x9xf32>
    %44 = math.exp %43 : vector<9x9xf32>
    %cst_18 = arith.constant dense<0.000000e+00> : vector<9xf32>
    %45 = vector.multi_reduction <add>, %44, %cst_18 [1] : vector<9x9xf32> to vector<9xf32>
    %46 = vector.shape_cast %45 : vector<9xf32> to vector<9x1xf32>
    %47 = tpu.reciprocal %46 {approx = true} : vector<9x1xf32> -> vector<9x1xf32>
    %48 = vector.broadcast %47 : vector<9x1xf32> to vector<9x9xf32>
    %49 = arith.mulf %44, %48 : vector<9x9xf32>
    %50 = arith.truncf %49 : vector<9x9xf32> to vector<9x9xbf16>
    %51 = arith.truncf %36 : vector<9x8xf32> to vector<9x8xbf16>
    %cst_19 = arith.constant dense<0.000000e+00> : vector<9x8xf32>
    %52 = tpu.matmul %50, %51, %cst_19 {dimension_numbers = #tpu.dot_dimension_numbers<[1], [0], [0], [1], [0, 0, 1, 1], [], []>} : vector<9x9xbf16>, vector<9x8xbf16>, vector<9x8xf32> -> vector<9x8xf32>
    %53 = vector.extract_strided_slice %31 {offsets = [0, 8], sizes = [9, 8], strides = [1, 1]} : vector<9x96xf32> to vector<9x8xf32>
    %cst_20 = arith.constant 0.353553385 : f32
    %54 = vector.broadcast %cst_20 : f32 to vector<9x8xf32>
    %55 = arith.mulf %53, %54 : vector<9x8xf32>
    %56 = vector.extract_strided_slice %31 {offsets = [0, 40], sizes = [9, 8], strides = [1, 1]} : vector<9x96xf32> to vector<9x8xf32>
    %57 = vector.extract_strided_slice %31 {offsets = [0, 72], sizes = [9, 8], strides = [1, 1]} : vector<9x96xf32> to vector<9x8xf32>
    %58 = arith.truncf %55 : vector<9x8xf32> to vector<9x8xbf16>
    %59 = arith.truncf %56 : vector<9x8xf32> to vector<9x8xbf16>
    %cst_21 = arith.constant dense<0.000000e+00> : vector<9x9xf32>
    %60 = tpu.matmul %58, %59, %cst_21 {dimension_numbers = #tpu.dot_dimension_numbers<[1], [1], [0], [0], [0, 0, 1, 0], [], []>} : vector<9x8xbf16>, vector<9x8xbf16>, vector<9x9xf32> -> vector<9x9xf32>
    %cst_22 = arith.constant dense<0xFF800000> : vector<9xf32>
    %61 = vector.multi_reduction <maximumf>, %60, %cst_22 [1] : vector<9x9xf32> to vector<9xf32>
    %62 = vector.shape_cast %61 : vector<9xf32> to vector<9x1xf32>
    %63 = vector.broadcast %62 : vector<9x1xf32> to vector<9x9xf32>
    %64 = arith.subf %60, %63 : vector<9x9xf32>
    %65 = math.exp %64 : vector<9x9xf32>
    %cst_23 = arith.constant dense<0.000000e+00> : vector<9xf32>
    %66 = vector.multi_reduction <add>, %65, %cst_23 [1] : vector<9x9xf32> to vector<9xf32>
    %67 = vector.shape_cast %66 : vector<9xf32> to vector<9x1xf32>
    %68 = tpu.reciprocal %67 {approx = true} : vector<9x1xf32> -> vector<9x1xf32>
    %69 = vector.broadcast %68 : vector<9x1xf32> to vector<9x9xf32>
    %70 = arith.mulf %65, %69 : vector<9x9xf32>
    %71 = arith.truncf %70 : vector<9x9xf32> to vector<9x9xbf16>
    %72 = arith.truncf %57 : vector<9x8xf32> to vector<9x8xbf16>
    %cst_24 = arith.constant dense<0.000000e+00> : vector<9x8xf32>
    %73 = tpu.matmul %71, %72, %cst_24 {dimension_numbers = #tpu.dot_dimension_numbers<[1], [0], [0], [1], [0, 0, 1, 1], [], []>} : vector<9x9xbf16>, vector<9x8xbf16>, vector<9x8xf32> -> vector<9x8xf32>
    %74 = vector.extract_strided_slice %31 {offsets = [0, 16], sizes = [9, 8], strides = [1, 1]} : vector<9x96xf32> to vector<9x8xf32>
    %cst_25 = arith.constant 0.353553385 : f32
    %75 = vector.broadcast %cst_25 : f32 to vector<9x8xf32>
    %76 = arith.mulf %74, %75 : vector<9x8xf32>
    %77 = vector.extract_strided_slice %31 {offsets = [0, 48], sizes = [9, 8], strides = [1, 1]} : vector<9x96xf32> to vector<9x8xf32>
    %78 = vector.extract_strided_slice %31 {offsets = [0, 80], sizes = [9, 8], strides = [1, 1]} : vector<9x96xf32> to vector<9x8xf32>
    %79 = arith.truncf %76 : vector<9x8xf32> to vector<9x8xbf16>
    %80 = arith.truncf %77 : vector<9x8xf32> to vector<9x8xbf16>
    %cst_26 = arith.constant dense<0.000000e+00> : vector<9x9xf32>
    %81 = tpu.matmul %79, %80, %cst_26 {dimension_numbers = #tpu.dot_dimension_numbers<[1], [1], [0], [0], [0, 0, 1, 0], [], []>} : vector<9x8xbf16>, vector<9x8xbf16>, vector<9x9xf32> -> vector<9x9xf32>
    %cst_27 = arith.constant dense<0xFF800000> : vector<9xf32>
    %82 = vector.multi_reduction <maximumf>, %81, %cst_27 [1] : vector<9x9xf32> to vector<9xf32>
    %83 = vector.shape_cast %82 : vector<9xf32> to vector<9x1xf32>
    %84 = vector.broadcast %83 : vector<9x1xf32> to vector<9x9xf32>
    %85 = arith.subf %81, %84 : vector<9x9xf32>
    %86 = math.exp %85 : vector<9x9xf32>
    %cst_28 = arith.constant dense<0.000000e+00> : vector<9xf32>
    %87 = vector.multi_reduction <add>, %86, %cst_28 [1] : vector<9x9xf32> to vector<9xf32>
    %88 = vector.shape_cast %87 : vector<9xf32> to vector<9x1xf32>
    %89 = tpu.reciprocal %88 {approx = true} : vector<9x1xf32> -> vector<9x1xf32>
    %90 = vector.broadcast %89 : vector<9x1xf32> to vector<9x9xf32>
    %91 = arith.mulf %86, %90 : vector<9x9xf32>
    %92 = arith.truncf %91 : vector<9x9xf32> to vector<9x9xbf16>
    %93 = arith.truncf %78 : vector<9x8xf32> to vector<9x8xbf16>
    %cst_29 = arith.constant dense<0.000000e+00> : vector<9x8xf32>
    %94 = tpu.matmul %92, %93, %cst_29 {dimension_numbers = #tpu.dot_dimension_numbers<[1], [0], [0], [1], [0, 0, 1, 1], [], []>} : vector<9x9xbf16>, vector<9x8xbf16>, vector<9x8xf32> -> vector<9x8xf32>
    %95 = vector.extract_strided_slice %31 {offsets = [0, 24], sizes = [9, 8], strides = [1, 1]} : vector<9x96xf32> to vector<9x8xf32>
    %cst_30 = arith.constant 0.353553385 : f32
    %96 = vector.broadcast %cst_30 : f32 to vector<9x8xf32>
    %97 = arith.mulf %95, %96 : vector<9x8xf32>
    %98 = vector.extract_strided_slice %31 {offsets = [0, 56], sizes = [9, 8], strides = [1, 1]} : vector<9x96xf32> to vector<9x8xf32>
    %99 = vector.extract_strided_slice %31 {offsets = [0, 88], sizes = [9, 8], strides = [1, 1]} : vector<9x96xf32> to vector<9x8xf32>
    %100 = arith.truncf %97 : vector<9x8xf32> to vector<9x8xbf16>
    %101 = arith.truncf %98 : vector<9x8xf32> to vector<9x8xbf16>
    %cst_31 = arith.constant dense<0.000000e+00> : vector<9x9xf32>
    %102 = tpu.matmul %100, %101, %cst_31 {dimension_numbers = #tpu.dot_dimension_numbers<[1], [1], [0], [0], [0, 0, 1, 0], [], []>} : vector<9x8xbf16>, vector<9x8xbf16>, vector<9x9xf32> -> vector<9x9xf32>
    %cst_32 = arith.constant dense<0xFF800000> : vector<9xf32>
    %103 = vector.multi_reduction <maximumf>, %102, %cst_32 [1] : vector<9x9xf32> to vector<9xf32>
    %104 = vector.shape_cast %103 : vector<9xf32> to vector<9x1xf32>
    %105 = vector.broadcast %104 : vector<9x1xf32> to vector<9x9xf32>
    %106 = arith.subf %102, %105 : vector<9x9xf32>
    %107 = math.exp %106 : vector<9x9xf32>
    %cst_33 = arith.constant dense<0.000000e+00> : vector<9xf32>
    %108 = vector.multi_reduction <add>, %107, %cst_33 [1] : vector<9x9xf32> to vector<9xf32>
    %109 = vector.shape_cast %108 : vector<9xf32> to vector<9x1xf32>
    %110 = tpu.reciprocal %109 {approx = true} : vector<9x1xf32> -> vector<9x1xf32>
    %111 = vector.broadcast %110 : vector<9x1xf32> to vector<9x9xf32>
    %112 = arith.mulf %107, %111 : vector<9x9xf32>
    %113 = arith.truncf %112 : vector<9x9xf32> to vector<9x9xbf16>
    %114 = arith.truncf %99 : vector<9x8xf32> to vector<9x8xbf16>
    %cst_34 = arith.constant dense<0.000000e+00> : vector<9x8xf32>
    %115 = tpu.matmul %113, %114, %cst_34 {dimension_numbers = #tpu.dot_dimension_numbers<[1], [0], [0], [1], [0, 0, 1, 1], [], []>} : vector<9x9xbf16>, vector<9x8xbf16>, vector<9x8xf32> -> vector<9x8xf32>
    %116 = tpu.concatenate %52, %73, %94, %115 in 1 : vector<9x8xf32>, vector<9x8xf32>, vector<9x8xf32>, vector<9x8xf32> -> vector<9x32xf32>
    %117 = arith.truncf %116 : vector<9x32xf32> to vector<9x32xbf16>
    %c0_35 = arith.constant 0 : index
    %c0_36 = arith.constant 0 : index
    %118 = vector.load %arg6[%c0_35, %c0_36] : memref<32x32xbf16, #tpu.memory_space<vmem>>, vector<32x32xbf16>
    %cst_37 = arith.constant dense<0.000000e+00> : vector<9x32xf32>
    %119 = tpu.matmul %117, %118, %cst_37 {dimension_numbers = #tpu.dot_dimension_numbers<[1], [0], [0], [1], [0, 0, 1, 1], [], []>} : vector<9x32xbf16>, vector<32x32xbf16>, vector<9x32xf32> -> vector<9x32xf32>
    %c0_38 = arith.constant 0 : index
    %c0_39 = arith.constant 0 : index
    %120 = vector.load %arg7[%c0_38, %c0_39] : memref<1x32xf32, #tpu.memory_space<vmem>>, vector<1x32xf32>
    %121 = vector.broadcast %120 : vector<1x32xf32> to vector<9x32xf32>
    %122 = arith.addf %119, %121 : vector<9x32xf32>
    %123 = arith.addf %1, %122 : vector<9x32xf32>
    %c0_40 = arith.constant 0 : index
    %c0_41 = arith.constant 0 : index
    %c0_42 = arith.constant 0 : index
    %124 = vector.load %arg8[%c0_40, %c0_41, %c0_42] : memref<1x9x32xf32, #tpu.memory_space<vmem>>, vector<1x9x32xf32>
    %125 = vector.shape_cast %124 : vector<1x9x32xf32> to vector<9x32xf32>
    %126 = vector.shape_cast %123 : vector<9x32xf32> to vector<1x9x32xf32>
    tpu.vector_store %arg8[%c0_40, %c0_41, %c0_42], %126 {strides = array<i32>} : memref<1x9x32xf32, #tpu.memory_space<vmem>>, vector<1x9x32xf32>,
    return
  }
  func.func @transform_0(%arg0: i32) -> (i32, i32, i32) {
    %c0_i32 = arith.constant 0 : i32
    %c0_i32_0 = arith.constant 0 : i32
    %c0_i32_1 = arith.constant 0 : i32
    return %arg0, %c0_i32, %c0_i32_0 : i32, i32, i32
  }
  func.func @transform_1(%arg0: i32) -> (i32, i32) {
    %c0_i32 = arith.constant 0 : i32
    %c0_i32_0 = arith.constant 0 : i32
    %c0_i32_1 = arith.constant 0 : i32
    return %c0_i32, %c0_i32_0 : i32, i32
  }
  func.func @transform_2(%arg0: i32) -> (i32, i32) {
    %c0_i32 = arith.constant 0 : i32
    %c0_i32_0 = arith.constant 0 : i32
    %c0_i32_1 = arith.constant 0 : i32
    return %c0_i32, %c0_i32_0 : i32, i32
  }
  func.func @transform_3(%arg0: i32) -> (i32, i32) {
    %c0_i32 = arith.constant 0 : i32
    %c0_i32_0 = arith.constant 0 : i32
    %c0_i32_1 = arith.constant 0 : i32
    return %c0_i32, %c0_i32_0 : i32, i32
  }
  func.func @transform_4(%arg0: i32) -> (i32, i32) {
    %c0_i32 = arith.constant 0 : i32
    %c0_i32_0 = arith.constant 0 : i32
    %c0_i32_1 = arith.constant 0 : i32
    return %c0_i32, %c0_i32_0 : i32, i32
  }
  func.func @transform_5(%arg0: i32) -> (i32, i32) {
    %c0_i32 = arith.constant 0 : i32
    %c0_i32_0 = arith.constant 0 : i32
    %c0_i32_1 = arith.constant 0 : i32
    return %c0_i32, %c0_i32_0 : i32, i32
  }
  func.func @transform_6(%arg0: i32) -> (i32, i32) {
    %c0_i32 = arith.constant 0 : i32
    %c0_i32_0 = arith.constant 0 : i32
    %c0_i32_1 = arith.constant 0 : i32
    return %c0_i32, %c0_i32_0 : i32, i32
  }
  func.func @transform_7(%arg0: i32) -> (i32, i32, i32) {
    %c0_i32 = arith.constant 0 : i32
    %c0_i32_0 = arith.constant 0 : i32
    %c0_i32_1 = arith.constant 0 : i32
    return %arg0, %c0_i32, %c0_i32_0 : i32, i32, i32
  }
}

module attributes {stable_mosaic.version = 11 : i64} {
  func.func @_ln_linear_kernel(%arg0: i32, %arg1: memref<18x32xf32, #tpu.memory_space<vmem>>, %arg2: memref<1x32xf32, #tpu.memory_space<vmem>>, %arg3: memref<1x32xf32, #tpu.memory_space<vmem>>, %arg4: memref<32x128xbf16, #tpu.memory_space<vmem>>, %arg5: memref<18x128xf32, #tpu.memory_space<vmem>>) attributes {dimension_semantics = [#tpu.dimension_semantics<parallel>], iteration_bounds = array<i64: 1>, scalar_prefetch = 0 : i64, scratch_operands = 0 : i64, tpu.core_type = #tpu.core_type<tc>, window_params = [{transform_indices = @transform_0, window_bounds = array<i64: 18, 32>}, {pipeline_mode = #tpu.pipeline_mode<synchronous>, transform_indices = @transform_1, window_bounds = array<i64: 1, 32>}, {pipeline_mode = #tpu.pipeline_mode<synchronous>, transform_indices = @transform_2, window_bounds = array<i64: 1, 32>}, {pipeline_mode = #tpu.pipeline_mode<synchronous>, transform_indices = @transform_3, window_bounds = array<i64: 32, 128>}, {transform_indices = @transform_4, window_bounds = array<i64: 18, 128>}]} {
    %c0 = arith.constant 0 : index
    %c0_0 = arith.constant 0 : index
    %0 = vector.load %arg1[%c0, %c0_0] : memref<18x32xf32, #tpu.memory_space<vmem>>, vector<18x32xf32>
    %cst = arith.constant dense<0.000000e+00> : vector<18xf32>
    %1 = vector.multi_reduction <add>, %0, %cst [1] : vector<18x32xf32> to vector<18xf32>
    %2 = vector.shape_cast %1 : vector<18xf32> to vector<18x1xf32>
    %cst_1 = arith.constant 3.200000e+01 : f32
    %3 = vector.broadcast %cst_1 : f32 to vector<18x1xf32>
    %4 = arith.divf %2, %3 : vector<18x1xf32>
    %5 = vector.broadcast %4 : vector<18x1xf32> to vector<18x32xf32>
    %6 = arith.subf %0, %5 : vector<18x32xf32>
    %7 = arith.mulf %6, %6 : vector<18x32xf32>
    %cst_2 = arith.constant dense<0.000000e+00> : vector<18xf32>
    %8 = vector.multi_reduction <add>, %7, %cst_2 [1] : vector<18x32xf32> to vector<18xf32>
    %9 = vector.shape_cast %8 : vector<18xf32> to vector<18x1xf32>
    %cst_3 = arith.constant 3.200000e+01 : f32
    %10 = vector.broadcast %cst_3 : f32 to vector<18x1xf32>
    %11 = arith.divf %9, %10 : vector<18x1xf32>
    %12 = vector.broadcast %4 : vector<18x1xf32> to vector<18x32xf32>
    %13 = arith.subf %0, %12 : vector<18x32xf32>
    %cst_4 = arith.constant 9.99999974E-6 : f32
    %14 = vector.broadcast %cst_4 : f32 to vector<18x1xf32>
    %15 = arith.addf %11, %14 : vector<18x1xf32>
    %16 = math.rsqrt %15 : vector<18x1xf32>
    %17 = vector.broadcast %16 : vector<18x1xf32> to vector<18x32xf32>
    %18 = arith.mulf %13, %17 : vector<18x32xf32>
    %c0_5 = arith.constant 0 : index
    %c0_6 = arith.constant 0 : index
    %19 = vector.load %arg2[%c0_5, %c0_6] : memref<1x32xf32, #tpu.memory_space<vmem>>, vector<1x32xf32>
    %20 = vector.broadcast %19 : vector<1x32xf32> to vector<18x32xf32>
    %21 = arith.mulf %18, %20 : vector<18x32xf32>
    %c0_7 = arith.constant 0 : index
    %c0_8 = arith.constant 0 : index
    %22 = vector.load %arg3[%c0_7, %c0_8] : memref<1x32xf32, #tpu.memory_space<vmem>>, vector<1x32xf32>
    %23 = vector.broadcast %22 : vector<1x32xf32> to vector<18x32xf32>
    %24 = arith.addf %21, %23 : vector<18x32xf32>
    %25 = arith.truncf %24 : vector<18x32xf32> to vector<18x32xbf16>
    %c0_9 = arith.constant 0 : index
    %c0_10 = arith.constant 0 : index
    %26 = vector.load %arg4[%c0_9, %c0_10] : memref<32x128xbf16, #tpu.memory_space<vmem>>, vector<32x128xbf16>
    %cst_11 = arith.constant dense<0.000000e+00> : vector<18x128xf32>
    %27 = tpu.matmul %25, %26, %cst_11 {dimension_numbers = #tpu.dot_dimension_numbers<[1], [0], [0], [1], [0, 0, 1, 1], [], []>} : vector<18x32xbf16>, vector<32x128xbf16>, vector<18x128xf32> -> vector<18x128xf32>
    %c0_12 = arith.constant 0 : index
    %c0_13 = arith.constant 0 : index
    %28 = vector.load %arg5[%c0_12, %c0_13] : memref<18x128xf32, #tpu.memory_space<vmem>>, vector<18x128xf32>
    tpu.vector_store %arg5[%c0_12, %c0_13], %27 {strides = array<i32>} : memref<18x128xf32, #tpu.memory_space<vmem>>, vector<18x128xf32>,
    return
  }
  func.func @transform_0(%arg0: i32) -> (i32, i32) {
    %c0_i32 = arith.constant 0 : i32
    %c0_i32_0 = arith.constant 0 : i32
    return %arg0, %c0_i32 : i32, i32
  }
  func.func @transform_1(%arg0: i32) -> (i32, i32) {
    %c0_i32 = arith.constant 0 : i32
    %c0_i32_0 = arith.constant 0 : i32
    %c0_i32_1 = arith.constant 0 : i32
    return %c0_i32, %c0_i32_0 : i32, i32
  }
  func.func @transform_2(%arg0: i32) -> (i32, i32) {
    %c0_i32 = arith.constant 0 : i32
    %c0_i32_0 = arith.constant 0 : i32
    %c0_i32_1 = arith.constant 0 : i32
    return %c0_i32, %c0_i32_0 : i32, i32
  }
  func.func @transform_3(%arg0: i32) -> (i32, i32) {
    %c0_i32 = arith.constant 0 : i32
    %c0_i32_0 = arith.constant 0 : i32
    %c0_i32_1 = arith.constant 0 : i32
    return %c0_i32, %c0_i32_0 : i32, i32
  }
  func.func @transform_4(%arg0: i32) -> (i32, i32) {
    %c0_i32 = arith.constant 0 : i32
    %c0_i32_0 = arith.constant 0 : i32
    return %arg0, %c0_i32 : i32, i32
  }
}

module attributes {stable_mosaic.version = 11 : i64} {
  func.func @_linear_kernel(%arg0: i32, %arg1: i32, %arg2: i32, %arg3: memref<16x32xf32, #tpu.memory_space<vmem>>, %arg4: memref<32x128xbf16, #tpu.memory_space<vmem>>, %arg5: memref<1x128xf32, #tpu.memory_space<vmem>>, %arg6: memref<16x128xf32, #tpu.memory_space<vmem>>) attributes {dimension_semantics = [#tpu.dimension_semantics<parallel>, #tpu.dimension_semantics<parallel>, #tpu.dimension_semantics<arbitrary>], iteration_bounds = array<i64: 1, 1, 1>, scalar_prefetch = 0 : i64, scratch_operands = 0 : i64, tpu.core_type = #tpu.core_type<tc>, window_params = [{transform_indices = @transform_0, window_bounds = array<i64: 16, 32>}, {transform_indices = @transform_1, window_bounds = array<i64: 32, 128>}, {transform_indices = @transform_2, window_bounds = array<i64: 1, 128>}, {transform_indices = @transform_3, window_bounds = array<i64: 16, 128>}]} {
    %c0_i32 = arith.constant 0 : i32
    %0 = arith.cmpi eq, %arg2, %c0_i32 : i32
    %1 = arith.extui %0 : i1 to i32
    %c0_i32_0 = arith.constant 0 : i32
    %2 = arith.cmpi ne, %1, %c0_i32_0 : i32
    scf.if %2 {
      %cst_10 = arith.constant 0.000000e+00 : f32
      %13 = vector.broadcast %cst_10 : f32 to vector<16x128xf32>
      %c0_11 = arith.constant 0 : index
      %c0_12 = arith.constant 0 : index
      %14 = vector.load %arg6[%c0_11, %c0_12] : memref<16x128xf32, #tpu.memory_space<vmem>>, vector<16x128xf32>
      tpu.vector_store %arg6[%c0_11, %c0_12], %13 {strides = array<i32>} : memref<16x128xf32, #tpu.memory_space<vmem>>, vector<16x128xf32>,
    } else {
    }
    %c0 = arith.constant 0 : index
    %c0_1 = arith.constant 0 : index
    %3 = vector.load %arg6[%c0, %c0_1] : memref<16x128xf32, #tpu.memory_space<vmem>>, vector<16x128xf32>
    %c0_2 = arith.constant 0 : index
    %c0_3 = arith.constant 0 : index
    %4 = vector.load %arg3[%c0_2, %c0_3] : memref<16x32xf32, #tpu.memory_space<vmem>>, vector<16x32xf32>
    %5 = arith.truncf %4 : vector<16x32xf32> to vector<16x32xbf16>
    %c0_4 = arith.constant 0 : index
    %c0_5 = arith.constant 0 : index
    %6 = vector.load %arg4[%c0_4, %c0_5] : memref<32x128xbf16, #tpu.memory_space<vmem>>, vector<32x128xbf16>
    %cst = arith.constant dense<0.000000e+00> : vector<16x128xf32>
    %7 = tpu.matmul %5, %6, %cst {dimension_numbers = #tpu.dot_dimension_numbers<[1], [0], [0], [1], [0, 0, 1, 1], [], []>} : vector<16x32xbf16>, vector<32x128xbf16>, vector<16x128xf32> -> vector<16x128xf32>
    %8 = arith.addf %3, %7 : vector<16x128xf32>
    %c0_6 = arith.constant 0 : index
    %c0_7 = arith.constant 0 : index
    %9 = vector.load %arg6[%c0_6, %c0_7] : memref<16x128xf32, #tpu.memory_space<vmem>>, vector<16x128xf32>
    tpu.vector_store %arg6[%c0_6, %c0_7], %8 {strides = array<i32>} : memref<16x128xf32, #tpu.memory_space<vmem>>, vector<16x128xf32>,
    %c0_i32_8 = arith.constant 0 : i32
    %10 = arith.cmpi eq, %arg2, %c0_i32_8 : i32
    %11 = arith.extui %10 : i1 to i32
    %c0_i32_9 = arith.constant 0 : i32
    %12 = arith.cmpi ne, %11, %c0_i32_9 : i32
    scf.if %12 {
      %c0_10 = arith.constant 0 : index
      %c0_11 = arith.constant 0 : index
      %13 = vector.load %arg6[%c0_10, %c0_11] : memref<16x128xf32, #tpu.memory_space<vmem>>, vector<16x128xf32>
      %c0_12 = arith.constant 0 : index
      %c0_13 = arith.constant 0 : index
      %14 = vector.load %arg5[%c0_12, %c0_13] : memref<1x128xf32, #tpu.memory_space<vmem>>, vector<1x128xf32>
      %15 = vector.broadcast %14 : vector<1x128xf32> to vector<16x128xf32>
      %16 = arith.addf %13, %15 : vector<16x128xf32>
      %c0_14 = arith.constant 0 : index
      %c0_15 = arith.constant 0 : index
      %17 = vector.load %arg6[%c0_14, %c0_15] : memref<16x128xf32, #tpu.memory_space<vmem>>, vector<16x128xf32>
      tpu.vector_store %arg6[%c0_14, %c0_15], %16 {strides = array<i32>} : memref<16x128xf32, #tpu.memory_space<vmem>>, vector<16x128xf32>,
    } else {
    }
    return
  }
  func.func @transform_0(%arg0: i32, %arg1: i32, %arg2: i32) -> (i32, i32) {
    %c0_i32 = arith.constant 0 : i32
    return %arg0, %arg2 : i32, i32
  }
  func.func @transform_1(%arg0: i32, %arg1: i32, %arg2: i32) -> (i32, i32) {
    %c0_i32 = arith.constant 0 : i32
    return %arg2, %arg1 : i32, i32
  }
  func.func @transform_2(%arg0: i32, %arg1: i32, %arg2: i32) -> (i32, i32) {
    %c0_i32 = arith.constant 0 : i32
    %c0_i32_0 = arith.constant 0 : i32
    return %c0_i32, %arg1 : i32, i32
  }
  func.func @transform_3(%arg0: i32, %arg1: i32, %arg2: i32) -> (i32, i32) {
    %c0_i32 = arith.constant 0 : i32
    return %arg0, %arg1 : i32, i32
  }
}

module attributes {stable_mosaic.version = 11 : i64} {
  func.func @_ln_linear_kernel(%arg0: i32, %arg1: memref<8x32xf32, #tpu.memory_space<vmem>>, %arg2: memref<1x32xf32, #tpu.memory_space<vmem>>, %arg3: memref<1x32xf32, #tpu.memory_space<vmem>>, %arg4: memref<32x128xbf16, #tpu.memory_space<vmem>>, %arg5: memref<1x128xf32, #tpu.memory_space<vmem>>, %arg6: memref<8x128xf32, #tpu.memory_space<vmem>>) attributes {dimension_semantics = [#tpu.dimension_semantics<parallel>], iteration_bounds = array<i64: 1>, scalar_prefetch = 0 : i64, scratch_operands = 0 : i64, tpu.core_type = #tpu.core_type<tc>, window_params = [{transform_indices = @transform_0, window_bounds = array<i64: 8, 32>}, {pipeline_mode = #tpu.pipeline_mode<synchronous>, transform_indices = @transform_1, window_bounds = array<i64: 1, 32>}, {pipeline_mode = #tpu.pipeline_mode<synchronous>, transform_indices = @transform_2, window_bounds = array<i64: 1, 32>}, {pipeline_mode = #tpu.pipeline_mode<synchronous>, transform_indices = @transform_3, window_bounds = array<i64: 32, 128>}, {pipeline_mode = #tpu.pipeline_mode<synchronous>, transform_indices = @transform_4, window_bounds = array<i64: 1, 128>}, {transform_indices = @transform_5, window_bounds = array<i64: 8, 128>}]} {
    %c0 = arith.constant 0 : index
    %c0_0 = arith.constant 0 : index
    %0 = vector.load %arg1[%c0, %c0_0] : memref<8x32xf32, #tpu.memory_space<vmem>>, vector<8x32xf32>
    %cst = arith.constant dense<0.000000e+00> : vector<8xf32>
    %1 = vector.multi_reduction <add>, %0, %cst [1] : vector<8x32xf32> to vector<8xf32>
    %2 = vector.shape_cast %1 : vector<8xf32> to vector<8x1xf32>
    %cst_1 = arith.constant 3.200000e+01 : f32
    %3 = vector.broadcast %cst_1 : f32 to vector<8x1xf32>
    %4 = arith.divf %2, %3 : vector<8x1xf32>
    %5 = vector.broadcast %4 : vector<8x1xf32> to vector<8x32xf32>
    %6 = arith.subf %0, %5 : vector<8x32xf32>
    %7 = arith.mulf %6, %6 : vector<8x32xf32>
    %cst_2 = arith.constant dense<0.000000e+00> : vector<8xf32>
    %8 = vector.multi_reduction <add>, %7, %cst_2 [1] : vector<8x32xf32> to vector<8xf32>
    %9 = vector.shape_cast %8 : vector<8xf32> to vector<8x1xf32>
    %cst_3 = arith.constant 3.200000e+01 : f32
    %10 = vector.broadcast %cst_3 : f32 to vector<8x1xf32>
    %11 = arith.divf %9, %10 : vector<8x1xf32>
    %12 = vector.broadcast %4 : vector<8x1xf32> to vector<8x32xf32>
    %13 = arith.subf %0, %12 : vector<8x32xf32>
    %cst_4 = arith.constant 9.99999974E-6 : f32
    %14 = vector.broadcast %cst_4 : f32 to vector<8x1xf32>
    %15 = arith.addf %11, %14 : vector<8x1xf32>
    %16 = math.rsqrt %15 : vector<8x1xf32>
    %17 = vector.broadcast %16 : vector<8x1xf32> to vector<8x32xf32>
    %18 = arith.mulf %13, %17 : vector<8x32xf32>
    %c0_5 = arith.constant 0 : index
    %c0_6 = arith.constant 0 : index
    %19 = vector.load %arg2[%c0_5, %c0_6] : memref<1x32xf32, #tpu.memory_space<vmem>>, vector<1x32xf32>
    %20 = vector.broadcast %19 : vector<1x32xf32> to vector<8x32xf32>
    %21 = arith.mulf %18, %20 : vector<8x32xf32>
    %c0_7 = arith.constant 0 : index
    %c0_8 = arith.constant 0 : index
    %22 = vector.load %arg3[%c0_7, %c0_8] : memref<1x32xf32, #tpu.memory_space<vmem>>, vector<1x32xf32>
    %23 = vector.broadcast %22 : vector<1x32xf32> to vector<8x32xf32>
    %24 = arith.addf %21, %23 : vector<8x32xf32>
    %25 = arith.truncf %24 : vector<8x32xf32> to vector<8x32xbf16>
    %c0_9 = arith.constant 0 : index
    %c0_10 = arith.constant 0 : index
    %26 = vector.load %arg4[%c0_9, %c0_10] : memref<32x128xbf16, #tpu.memory_space<vmem>>, vector<32x128xbf16>
    %cst_11 = arith.constant dense<0.000000e+00> : vector<8x128xf32>
    %27 = tpu.matmul %25, %26, %cst_11 {dimension_numbers = #tpu.dot_dimension_numbers<[1], [0], [0], [1], [0, 0, 1, 1], [], []>} : vector<8x32xbf16>, vector<32x128xbf16>, vector<8x128xf32> -> vector<8x128xf32>
    %c0_12 = arith.constant 0 : index
    %c0_13 = arith.constant 0 : index
    %28 = vector.load %arg5[%c0_12, %c0_13] : memref<1x128xf32, #tpu.memory_space<vmem>>, vector<1x128xf32>
    %29 = vector.broadcast %28 : vector<1x128xf32> to vector<8x128xf32>
    %30 = arith.addf %27, %29 : vector<8x128xf32>
    %c0_14 = arith.constant 0 : index
    %c0_15 = arith.constant 0 : index
    %31 = vector.load %arg6[%c0_14, %c0_15] : memref<8x128xf32, #tpu.memory_space<vmem>>, vector<8x128xf32>
    tpu.vector_store %arg6[%c0_14, %c0_15], %30 {strides = array<i32>} : memref<8x128xf32, #tpu.memory_space<vmem>>, vector<8x128xf32>,
    return
  }
  func.func @transform_0(%arg0: i32) -> (i32, i32) {
    %c0_i32 = arith.constant 0 : i32
    %c0_i32_0 = arith.constant 0 : i32
    return %arg0, %c0_i32 : i32, i32
  }
  func.func @transform_1(%arg0: i32) -> (i32, i32) {
    %c0_i32 = arith.constant 0 : i32
    %c0_i32_0 = arith.constant 0 : i32
    %c0_i32_1 = arith.constant 0 : i32
    return %c0_i32, %c0_i32_0 : i32, i32
  }
  func.func @transform_2(%arg0: i32) -> (i32, i32) {
    %c0_i32 = arith.constant 0 : i32
    %c0_i32_0 = arith.constant 0 : i32
    %c0_i32_1 = arith.constant 0 : i32
    return %c0_i32, %c0_i32_0 : i32, i32
  }
  func.func @transform_3(%arg0: i32) -> (i32, i32) {
    %c0_i32 = arith.constant 0 : i32
    %c0_i32_0 = arith.constant 0 : i32
    %c0_i32_1 = arith.constant 0 : i32
    return %c0_i32, %c0_i32_0 : i32, i32
  }
  func.func @transform_4(%arg0: i32) -> (i32, i32) {
    %c0_i32 = arith.constant 0 : i32
    %c0_i32_0 = arith.constant 0 : i32
    %c0_i32_1 = arith.constant 0 : i32
    return %c0_i32, %c0_i32_0 : i32, i32
  }
  func.func @transform_5(%arg0: i32) -> (i32, i32) {
    %c0_i32 = arith.constant 0 : i32
    %c0_i32_0 = arith.constant 0 : i32
    return %arg0, %c0_i32 : i32, i32
  }
}

</mosaic_0001>

<llo_original>
// kernel: _lambda_.11
$region0: #{_lambda_.11}
  #allocation0 [shape = 'u32[]', space=smem, size = 0x4, offset = 0x4, fixed_abs, tag = 'smem constant byte address 0x4 - core index']
  #allocation1 [shape = 'u32[72,128]{1,0:T(1,128)}', space=vmem, size = 0x9000, scoped, tag = 'internal scratch']
  %s0 = inlined_call_operand.vmem [shape: f32[8,32], index: 0, kind: input, shape index: {}]
  %s1 = inlined_call_operand.vmem [shape: bf16[32,128], index: 1, kind: input, shape index: {}]
  %s2 = inlined_call_operand.vmem [shape: f32[1,128], index: 2, kind: input, shape index: {}]
  %s3 = inlined_call_operand.vmem [shape: f32[8,128], index: 3, kind: output, shape index: {}]
  %s4 = sld [smem:[#allocation0]]
  $region30: #{_lambda_.11} parent=0
    _
  %s6 = ssub.s32 1, %s4
  %s7 = scalar_select 0, %s6, %s4
  // Predicated region
  $region2: #{_lambda_.11} parent=0 // pred_check
    _
  $region3: #{_lambda_.11} parent=0 // pred_check_branch
    %9 = sbr.rel (0) target = $region5
  $region4: #{_lambda_.11} parent=0 // pred_region
    _
  $region5: #{_lambda_.11} parent=0 // pred_fallthru
    _
  // Predicated region
  $region6: #{_lambda_.11} parent=0 // pred_check
    _
  $region7: #{_lambda_.11} parent=0 // pred_check_branch
    %11 = sbr.rel (0) target = $region9
  $region8: #{_lambda_.11} parent=0 // pred_region
    _
  $region9: #{_lambda_.11} parent=0 // pred_fallthru
    _
  // Predicated region
  $region10: #{_lambda_.11} parent=0 // pred_check
    _
  $region11: #{_lambda_.11} parent=0 // pred_check_branch
    %13 = sbr.rel (0) target = $region13
  $region12: #{_lambda_.11} parent=0 // pred_region
    _
  $region13: #{_lambda_.11} parent=0 // pred_fallthru
    _
  %p15 = scmp.eq.s32.totalorder 0, 0
  // Predicated region
  $region14: #{_lambda_.11} parent=0 // pred_check
    %p16 = pneg %p15
  $region15: #{_lambda_.11} parent=0 // pred_check_branch
    %18 = sbr.rel (%p16) target = $region17
  $region16: #{_lambda_.11} parent=0 // pred_region
    %19 = vst [vmem:[%s3] sm:$0xff] 0.0
  $region17: #{_lambda_.11} parent=0 // pred_fallthru
    _
  %v20 = vld [vmem:[%s3] sm:$0xff]
  %v21 = vld [vmem:[%s0] sm:$0xff]
  %v22 = vpack.c.bf16 %v21, %v21
  %v23 = vld [vmem:[%s1] sm:$0xf]
  %v24 = vld [vmem:[%s1 + $0x4] sm:$0xf]
  %v25 = vld [vmem:[%s1 + $0x8] sm:$0xf]
  %v26 = vld [vmem:[%s1 + $0xc] sm:$0xf]
  %v31 = vunpack.c.l.b16 %v23
  %v32 = vunpack.c.l.b16 %v24
  %v33 = vunpack.c.l.b16 %v25
  %v34 = vunpack.c.l.b16 %v26
  %v35 = vpack.c.b16 %v32, %v31
  %v36 = vpack.c.b16 %v34, %v33
  %vm39 = vcmask 261120
  %v41 = vsel %vm39, %v22, 0
  %43 = vmatpush.bf16.msra.mxu0 0
  %44 = vmatpush.bf16.msra.mxu0 0
  %45 = vmatpush.bf16.msra.mxu0 0
  %46 = vmatpush.bf16.msra.mxu0 0
  %47 = vmatpush.bf16.msra.mxu0 0
  %48 = vmatpush.bf16.msra.mxu0 0
  %49 = vmatpush.bf16.msra.mxu0 %v36
  %50 = vmatpush.bf16.msra.mxu0 %v35
  %51 = vmatmul.bf16.gmra.mxu0 %v41
  %v52 = vpop.f32.mrf.mxu0
  %v53 = vadd.f32 0.0, %v52
  %v54 = vpop.f32.mrf.mxu0
  %55 = vdwg.mxu0
  %v56 = vadd.f32 %v20, %v53
  %57 = vst [vmem:[%s3] sm:$0xff] %v56
  // Predicated region
  $region18: #{_lambda_.11} parent=0 // pred_check
    %p58 = pneg %p15
  $region19: #{_lambda_.11} parent=0 // pred_check_branch
    %60 = sbr.rel (%p58) target = $region21
  $region20: #{_lambda_.11} parent=0 // pred_region
    %v61 = vld [vmem:[%s3] sm:$0xff]
    %v62 = vld [vmem:[%s2] sm:$0x1]
    %v64 = vperm.slane %v62, 0
    %v66 = vadd.f32 %v61, %v64
    %67 = vst [vmem:[%s3] sm:$0xff] %v66
  $region21: #{_lambda_.11} parent=0 // pred_fallthru
    _
  // Predicated region
  $region22: #{_lambda_.11} parent=0 // pred_check
    _
  $region23: #{_lambda_.11} parent=0 // pred_check_branch
    %69 = sbr.rel (0) target = $region25
  $region24: #{_lambda_.11} parent=0 // pred_region
    _
  $region25: #{_lambda_.11} parent=0 // pred_fallthru
    _
  // Predicated region
  $region26: #{_lambda_.11} parent=0 // pred_check
    _
  $region27: #{_lambda_.11} parent=0 // pred_check_branch
    %71 = sbr.rel (0) target = $region29
  $region28: #{_lambda_.11} parent=0 // pred_region
    _
  $region29: #{_lambda_.11} parent=0 // pred_fallthru
    _

// kernel: _lambda_.13
$region0: #{_lambda_.13}
  #allocation0 [shape = 'u32[]', space=smem, size = 0x4, offset = 0x4, fixed_abs, tag = 'smem constant byte address 0x4 - core index']
  #allocation1 [shape = 'u32[72,128]{1,0:T(1,128)}', space=vmem, size = 0x9000, scoped, tag = 'internal scratch']
  %s0 = inlined_call_operand.vmem [shape: f32[10,32], index: 0, kind: input, shape index: {}]
  %s1 = inlined_call_operand.vmem [shape: f32[1,32], index: 1, kind: input, shape index: {}]
  %s2 = inlined_call_operand.vmem [shape: f32[1,32], index: 2, kind: input, shape index: {}]
  %s3 = inlined_call_operand.vmem [shape: bf16[32,128], index: 3, kind: input, shape index: {}]
  %s4 = inlined_call_operand.vmem [shape: f32[1,128], index: 4, kind: input, shape index: {}]
  %s5 = inlined_call_operand.vmem [shape: bf16[128,32], index: 5, kind: input, shape index: {}]
  %s6 = inlined_call_operand.vmem [shape: f32[1,32], index: 6, kind: input, shape index: {}]
  %s7 = inlined_call_operand.vmem [shape: f32[10,32], index: 7, kind: output, shape index: {}]
  %s8 = sld [smem:[#allocation0]]
  $region38: #{_lambda_.13} parent=0
    _
  %s10 = ssub.s32 1, %s8
  %s11 = scalar_select 0, %s10, %s8
  // Predicated region
  $region2: #{_lambda_.13} parent=0 // pred_check
    _
  $region3: #{_lambda_.13} parent=0 // pred_check_branch
    %13 = sbr.rel (0) target = $region5
  $region4: #{_lambda_.13} parent=0 // pred_region
    _
  $region5: #{_lambda_.13} parent=0 // pred_fallthru
    _
  // Predicated region
  $region6: #{_lambda_.13} parent=0 // pred_check
    _
  $region7: #{_lambda_.13} parent=0 // pred_check_branch
    %15 = sbr.rel (0) target = $region9
  $region8: #{_lambda_.13} parent=0 // pred_region
    _
  $region9: #{_lambda_.13} parent=0 // pred_fallthru
    _
  // Predicated region
  $region10: #{_lambda_.13} parent=0 // pred_check
    _
  $region11: #{_lambda_.13} parent=0 // pred_check_branch
    %17 = sbr.rel (0) target = $region13
  $region12: #{_lambda_.13} parent=0 // pred_region
    _
  $region13: #{_lambda_.13} parent=0 // pred_fallthru
    _
  // Predicated region
  $region14: #{_lambda_.13} parent=0 // pred_check
    _
  $region15: #{_lambda_.13} parent=0 // pred_check_branch
    %19 = sbr.rel (0) target = $region17
  $region16: #{_lambda_.13} parent=0 // pred_region
    _
  $region17: #{_lambda_.13} parent=0 // pred_fallthru
    _
  // Predicated region
  $region18: #{_lambda_.13} parent=0 // pred_check
    _
  $region19: #{_lambda_.13} parent=0 // pred_check_branch
    %21 = sbr.rel (0) target = $region21
  $region20: #{_lambda_.13} parent=0 // pred_region
    _
  $region21: #{_lambda_.13} parent=0 // pred_fallthru
    _
  // Predicated region
  $region22: #{_lambda_.13} parent=0 // pred_check
    _
  $region23: #{_lambda_.13} parent=0 // pred_check_branch
    %23 = sbr.rel (0) target = $region25
  $region24: #{_lambda_.13} parent=0 // pred_region
    _
  $region25: #{_lambda_.13} parent=0 // pred_fallthru
    _
  // Predicated region
  $region26: #{_lambda_.13} parent=0 // pred_check
    _
  $region27: #{_lambda_.13} parent=0 // pred_check_branch
    %25 = sbr.rel (0) target = $region29
  $region28: #{_lambda_.13} parent=0 // pred_region
    _
  $region29: #{_lambda_.13} parent=0 // pred_fallthru
    _
  %v27 = vld [vmem:[%s0] sm:$0xff]
  %v28 = vld [vmem:[%s0 + $0x8] sm:$0x3]
  %vm29 = vcmask 261120
  %v30 = vsel %vm29, %v27, 0.0
  %31 = vadd.xlane.f32.xlu0 %v30
  %v32 = vpop.xlane.xlu0 %31
  %vm33 = vcmask 254976
  %v34 = vsel %vm33, %v28, 0.0
  %35 = vadd.xlane.f32.xlu0 %v34
  %v36 = vpop.xlane.xlu0 %35
  %v37 = vrcp.pop 32.0
  %v38 = vmul.f32 32.0, %v37
  %v39 = vsub.f32 1.0, %v38
  %v40 = vmul.f32 %v37, %v39
  %v41 = vadd.f32 %v37, %v40
  %vm42 = vweird.f32 %v37
  %v43 = vsel %vm42, %v37, %v41
  %v44 = vmul.f32 %v32, %v43
  %v45 = vmul.f32 %v36, %v43
  %v46 = vsub.f32 %v27, %v44
  %v47 = vsub.f32 %v28, %v45
  %v48 = vmul.f32 %v46, %v46
  %v49 = vmul.f32 %v47, %v47
  %v50 = vsel %vm29, %v48, 0.0
  %51 = vadd.xlane.f32.xlu0 %v50
  %v52 = vpop.xlane.xlu0 %51
  %v53 = vsel %vm33, %v49, 0.0
  %54 = vadd.xlane.f32.xlu0 %v53
  %v55 = vpop.xlane.xlu0 %54
  %v56 = vmul.f32 %v52, %v43
  %v57 = vmul.f32 %v55, %v43
  %v58 = vadd.f32 %v56, 1e-05
  %v59 = vadd.f32 %v57, 1e-05
  %v60 = vrsqrt.pop %v58
  %v61 = vmul.f32 %v60, %v58
  %v62 = vmul.f32 %v61, %v60
  %v63 = vmul.f32 0.5, %v62
  %v64 = vsub.f32 1.5, %v63
  %v65 = vmul.f32 %v60, %v64
  %vm66 = vweird.f32 %v58
  %vm67 = vweird.f32 %v60
  %vm68 = vmor %vm66, %vm67
  %v69 = vsel %vm68, %v60, %v65
  %v70 = vrsqrt.pop %v59
  %v71 = vmul.f32 %v70, %v59
  %v72 = vmul.f32 %v71, %v70
  %v73 = vmul.f32 0.5, %v72
  %v74 = vsub.f32 1.5, %v73
  %v75 = vmul.f32 %v70, %v74
  %vm76 = vweird.f32 %v59
  %vm77 = vweird.f32 %v70
  %vm78 = vmor %vm76, %vm77
  %v79 = vsel %vm78, %v70, %v75
  %v80 = vmul.f32 %v46, %v69
  %v81 = vmul.f32 %v47, %v79
  %v82 = vld [vmem:[%s1] sm:$0x1]
  %v84 = vperm.slane %v82, 0
  %v86 = vmul.f32 %v80, %v84
  %v87 = vmul.f32 %v81, %v84
  %v88 = vld [vmem:[%s2] sm:$0x1]
  %v90 = vperm.slane %v88, 0
  %v92 = vadd.f32 %v86, %v90
  %v93 = vadd.f32 %v87, %v90
  %v94 = vpack.c.bf16 %v93, %v92
  %v95 = vld [vmem:[%s3] sm:$0xf]
  %v96 = vld [vmem:[%s3 + $0x4] sm:$0xf]
  %v97 = vld [vmem:[%s3 + $0x8] sm:$0xf]
  %v98 = vld [vmem:[%s3 + $0xc] sm:$0xf]
  %v99 = vld [vmem:[%s4] sm:$0x1]
  %v101 = vperm.slane %v99, 0
  %v107 = vunpack.c.l.b16 %v95
  %v108 = vunpack.c.l.b16 %v96
  %v109 = vunpack.c.l.b16 %v97
  %v110 = vunpack.c.l.b16 %v98
  %v111 = vpack.c.b16 %v108, %v107
  %v112 = vpack.c.b16 %v110, %v109
  %v116 = vsel %vm29, %v94, 0
  %118 = vmatpush.bf16.msra.mxu0 0
  %119 = vmatpush.bf16.msra.mxu0 0
  %120 = vmatpush.bf16.msra.mxu0 0
  %121 = vmatpush.bf16.msra.mxu0 0
  %122 = vmatpush.bf16.msra.mxu0 0
  %123 = vmatpush.bf16.msra.mxu0 0
  %124 = vmatpush.bf16.msra.mxu0 %v112
  %125 = vmatpush.bf16.msra.mxu0 %v111
  %126 = vmatmul.bf16.gmra.mxu0 %v116
  %v127 = vpop.f32.mrf.mxu0
  %v128 = vadd.f32 %v101, %v127
  %v129 = vpop.f32.mrf.mxu0
  %v130 = vadd.f32 %v101, %v129
  %131 = vdwg.mxu0
  %v132 = vmul.f32 %v128, %v128
  %v133 = vmul.f32 %v130, %v130
  %v134 = vmul.f32 %v128, %v132
  %v135 = vmul.f32 %v130, %v133
  %v136 = vmul.f32 %v134, 0.044715
  %v137 = vmul.f32 %v135, 0.044715
  %v138 = vadd.f32 %v128, %v136
  %v139 = vadd.f32 %v130, %v137
  %v140 = vmul.f32 %v138, 0.7978846
  %v141 = vmul.f32 %v139, 0.7978846
  %v142 = vtanh.pop %v140
  %v143 = vtanh.pop %v141
  %v144 = vadd.f32 %v142, 1.0
  %v145 = vadd.f32 %v143, 1.0
  %v146 = vmul.f32 %v144, 0.5
  %v147 = vmul.f32 %v145, 0.5
  %v148 = vmul.f32 %v128, %v146
  %v149 = vmul.f32 %v130, %v147
  %v150 = vpack.c.bf16 %v149, %v148
  %v151 = vld [vmem:[%s5] sm:$0xf]
  %v152 = vld [vmem:[%s5 + $0x4] sm:$0xf]
  %v153 = vld [vmem:[%s5 + $0x8] sm:$0xf]
  %v154 = vld [vmem:[%s5 + $0xc] sm:$0xf]
  %v155 = vld [vmem:[%s5 + $0x10] sm:$0xf]
  %v156 = vld [vmem:[%s5 + $0x14] sm:$0xf]
  %v157 = vld [vmem:[%s5 + $0x18] sm:$0xf]
  %v158 = vld [vmem:[%s5 + $0x1c] sm:$0xf]
  %v159 = vld [vmem:[%s5 + $0x20] sm:$0xf]
  %v160 = vld [vmem:[%s5 + $0x24] sm:$0xf]
  %v161 = vld [vmem:[%s5 + $0x28] sm:$0xf]
  %v162 = vld [vmem:[%s5 + $0x2c] sm:$0xf]
  %v163 = vld [vmem:[%s5 + $0x30] sm:$0xf]
  %v164 = vld [vmem:[%s5 + $0x34] sm:$0xf]
  %v165 = vld [vmem:[%s5 + $0x38] sm:$0xf]
  %v166 = vld [vmem:[%s5 + $0x3c] sm:$0xf]
  %v167 = vld [vmem:[%s6] sm:$0x1]
  %v169 = vperm.slane %v167, 0
  %v187 = vunpack.c.l.b16 %v151
  %v188 = vunpack.c.l.b16 %v152
  %v189 = vunpack.c.l.b16 %v153
  %v190 = vunpack.c.l.b16 %v154
  %v191 = vunpack.c.l.b16 %v155
  %v192 = vunpack.c.l.b16 %v156
  %v193 = vunpack.c.l.b16 %v157
  %v194 = vunpack.c.l.b16 %v158
  %v195 = vunpack.c.l.b16 %v159
  %v196 = vunpack.c.l.b16 %v160
  %v197 = vunpack.c.l.b16 %v161
  %v198 = vunpack.c.l.b16 %v162
  %v199 = vunpack.c.l.b16 %v163
  %v200 = vunpack.c.l.b16 %v164
  %v201 = vunpack.c.l.b16 %v165
  %v202 = vunpack.c.l.b16 %v166
  %v203 = vpack.c.b16 %v188, %v187
  %v204 = vpack.c.b16 %v190, %v189
  %v205 = vpack.c.b16 %v192, %v191
  %v206 = vpack.c.b16 %v194, %v193
  %v207 = vpack.c.b16 %v196, %v195
  %v208 = vpack.c.b16 %v198, %v197
  %v209 = vpack.c.b16 %v200, %v199
  %v210 = vpack.c.b16 %v202, %v201
  %219 = vmatpush.bf16.msra.mxu0 %v210
  %220 = vmatpush.bf16.msra.mxu0 %v209
  %221 = vmatpush.bf16.msra.mxu0 %v208
  %222 = vmatpush.bf16.msra.mxu0 %v207
  %223 = vmatpush.bf16.msra.mxu0 %v206
  %224 = vmatpush.bf16.msra.mxu0 %v205
  %225 = vmatpush.bf16.msra.mxu0 %v204
  %226 = vmatpush.bf16.msra.mxu0 %v203
  %227 = vmatmul.bf16.gmra.mxu0 %v150
  %v228 = vpop.f32.mrf.mxu0
  %v229 = vadd.f32 %v169, %v228
  %v230 = vpop.f32.mrf.mxu0
  %v231 = vadd.f32 %v169, %v230
  %232 = vdwg.mxu0
  %v233 = vadd.f32 %v27, %v229
  %v234 = vadd.f32 %v28, %v231
  %235 = vst.msk [vmem:[%s7] sm:$0xff] %vm29, %v233
  %236 = vst.msk [vmem:[%s7 + $0x8] sm:$0x3] %vm33, %v234
  // Predicated region
  $region30: #{_lambda_.13} parent=0 // pred_check
    _
  $region31: #{_lambda_.13} parent=0 // pred_check_branch
    %238 = sbr.rel (0) target = $region33
  $region32: #{_lambda_.13} parent=0 // pred_region
    _
  $region33: #{_lambda_.13} parent=0 // pred_fallthru
    _
  // Predicated region
  $region34: #{_lambda_.13} parent=0 // pred_check
    _
  $region35: #{_lambda_.13} parent=0 // pred_check_branch
    %240 = sbr.rel (0) target = $region37
  $region36: #{_lambda_.13} parent=0 // pred_region
    _
  $region37: #{_lambda_.13} parent=0 // pred_fallthru
    _

// kernel: _lambda_.12
$region0: #{_lambda_.12}
  #allocation0 [shape = 'u32[]', space=smem, size = 0x4, offset = 0x4, fixed_abs, tag = 'smem constant byte address 0x4 - core index']
  #allocation1 [shape = 'u32[72,128]{1,0:T(1,128)}', space=vmem, size = 0x9000, scoped, tag = 'internal scratch']
  %s0 = inlined_call_operand.vmem [shape: f32[2,5,32], index: 0, kind: input, shape index: {}]
  %s1 = inlined_call_operand.vmem [shape: f32[1,32], index: 1, kind: input, shape index: {}]
  %s2 = inlined_call_operand.vmem [shape: f32[1,32], index: 2, kind: input, shape index: {}]
  %s3 = inlined_call_operand.vmem [shape: bf16[32,96], index: 3, kind: input, shape index: {}]
  %s4 = inlined_call_operand.vmem [shape: f32[1,96], index: 4, kind: input, shape index: {}]
  %s5 = inlined_call_operand.vmem [shape: bf16[32,32], index: 5, kind: input, shape index: {}]
  %s6 = inlined_call_operand.vmem [shape: f32[1,32], index: 6, kind: input, shape index: {}]
  %s7 = inlined_call_operand.vmem [shape: f32[2,5,32], index: 7, kind: output, shape index: {}]
  %s8 = sld [smem:[#allocation0]]
  $region61: #{_lambda_.12} parent=0
    _
  %s10 = ssub.s32 1, %s8
  %s11 = scalar_select 0, %s10, %s8
  loop: start=0, step=1, limit=4
  $region2: #{_lambda_.12} parent=0 // loop_pre_header
    _
  $region3: #{_lambda_.12} parent=0 // loop_header
    %s13 = sphi 0, %s17
    %p14 = scmp.ge.s32.totalorder %s13, 4
    %s23 = sphi 0, %s25
    %s26 = sphi 0, %s23
    %s27 = sphi 0, %s26
    %s43 = sphi 0, %s27
    %s47 = sphi 0, %s47
    %s49 = sphi 0, %s47
    %s50 = sphi 0, %s49
    %s64 = sphi 0, %s50
    %s68 = sphi 0, %s68
    %s70 = sphi 0, %s68
    %s71 = sphi 0, %s70
    %s85 = sphi 0, %s71
    %s89 = sphi 0, %s89
    %s91 = sphi 0, %s89
    %s92 = sphi 0, %s91
    %s106 = sphi 0, %s92
    %s110 = sphi 0, %s110
    %s112 = sphi 0, %s110
    %s113 = sphi 0, %s112
    %s127 = sphi 0, %s113
    %s131 = sphi 0, %s131
    %s133 = sphi 0, %s131
    %s134 = sphi 0, %s133
    %s148 = sphi 0, %s134
    %s152 = sphi 0, %s152
    %s154 = sphi 0, %s152
    %s155 = sphi 0, %s154
    %s169 = sphi 0, %s155
    %s175 = sphi 0, %s177
    %s178 = sphi 0, %s175
    %s179 = sphi 0, %s178
    %s195 = sphi 0, %s179
  $region4: #{_lambda_.12} parent=0 // loop_header_branch
    %16 = sbr.rel (%p14) target = $region8
  $region5: #{_lambda_.12} parent=0 // loop_body
    %s18 = ssub.s32 %s13, 1
    %s19 = ssub.s32 %s13, 2
    %s20 = sadd.s32 %s13, 1
    %s21 = ssub.s32 %s13, %s20
    %p22 = scmp.eq.s32.totalorder %s21, 0
    %s24 = sadd.s32 %s23, 1
    %s25 = scalar_select %p22, %s23, %s24
    %p28 = pneg %p22
    %p29 = scmp.eq.s32.totalorder %s13, 1
    %p30 = por %p28, %p29
    %p31 = scmp.ne.s32.totalorder %s23, %s26
    %p32 = scmp.eq.s32.totalorder %s13, 0
    %p33 = por %p31, %p32
    %p34 = scmp.ne.s32.totalorder %s23, %s26
    %p35 = scmp.eq.s32.totalorder %s18, 1
    %p36 = por %p34, %p35
    %p37 = scmp.ne.s32.totalorder %s26, %s27
    %p38 = scmp.eq.s32.totalorder %s18, 0
    %p39 = por %p37, %p38
    %p40 = scmp.ne.s32.totalorder %s26, %s27
    %p41 = scmp.eq.s32.totalorder %s19, 1
    %p42 = por %p40, %p41
    %p44 = scmp.ne.s32.totalorder %s27, %s43
    %p45 = scmp.eq.s32.totalorder %s19, 0
    %p46 = por %p44, %p45
    %s48 = sadd.s32 %s47, 1
    %p51 = scmp.eq.s32.totalorder %s13, 1
    %p52 = scmp.ne.s32.totalorder %s47, %s49
    %p53 = scmp.eq.s32.totalorder %s13, 0
    %p54 = por %p52, %p53
    %p55 = scmp.ne.s32.totalorder %s47, %s49
    %p56 = scmp.eq.s32.totalorder %s18, 1
    %p57 = por %p55, %p56
    %p58 = scmp.ne.s32.totalorder %s49, %s50
    %p59 = scmp.eq.s32.totalorder %s18, 0
    %p60 = por %p58, %p59
    %p61 = scmp.ne.s32.totalorder %s49, %s50
    %p62 = scmp.eq.s32.totalorder %s19, 1
    %p63 = por %p61, %p62
    %p65 = scmp.ne.s32.totalorder %s50, %s64
    %p66 = scmp.eq.s32.totalorder %s19, 0
    %p67 = por %p65, %p66
    %s69 = sadd.s32 %s68, 1
    %p72 = scmp.eq.s32.totalorder %s13, 1
    %p73 = scmp.ne.s32.totalorder %s68, %s70
    %p74 = scmp.eq.s32.totalorder %s13, 0
    %p75 = por %p73, %p74
    %p76 = scmp.ne.s32.totalorder %s68, %s70
    %p77 = scmp.eq.s32.totalorder %s18, 1
    %p78 = por %p76, %p77
    %p79 = scmp.ne.s32.totalorder %s70, %s71
    %p80 = scmp.eq.s32.totalorder %s18, 0
    %p81 = por %p79, %p80
    %p82 = scmp.ne.s32.totalorder %s70, %s71
    %p83 = scmp.eq.s32.totalorder %s19, 1
    %p84 = por %p82, %p83
    %p86 = scmp.ne.s32.totalorder %s71, %s85
    %p87 = scmp.eq.s32.totalorder %s19, 0
    %p88 = por %p86, %p87
    %s90 = sadd.s32 %s89, 1
    %p93 = scmp.eq.s32.totalorder %s13, 1
    %p94 = scmp.ne.s32.totalorder %s89, %s91
    %p95 = scmp.eq.s32.totalorder %s13, 0
    %p96 = por %p94, %p95
    %p97 = scmp.ne.s32.totalorder %s89, %s91
    %p98 = scmp.eq.s32.totalorder %s18, 1
    %p99 = por %p97, %p98
    %p100 = scmp.ne.s32.totalorder %s91, %s92
    %p101 = scmp.eq.s32.totalorder %s18, 0
    %p102 = por %p100, %p101
    %p103 = scmp.ne.s32.totalorder %s91, %s92
    %p104 = scmp.eq.s32.totalorder %s19, 1
    %p105 = por %p103, %p104
    %p107 = scmp.ne.s32.totalorder %s92, %s106
    %p108 = scmp.eq.s32.totalorder %s19, 0
    %p109 = por %p107, %p108
    %s111 = sadd.s32 %s110, 1
    %p114 = scmp.eq.s32.totalorder %s13, 1
    %p115 = scmp.ne.s32.totalorder %s110, %s112
    %p116 = scmp.eq.s32.totalorder %s13, 0
    %p117 = por %p115, %p116
    %p118 = scmp.ne.s32.totalorder %s110, %s112
    %p119 = scmp.eq.s32.totalorder %s18, 1
    %p120 = por %p118, %p119
    %p121 = scmp.ne.s32.totalorder %s112, %s113
    %p122 = scmp.eq.s32.totalorder %s18, 0
    %p123 = por %p121, %p122
    %p124 = scmp.ne.s32.totalorder %s112, %s113
    %p125 = scmp.eq.s32.totalorder %s19, 1
    %p126 = por %p124, %p125
    %p128 = scmp.ne.s32.totalorder %s113, %s127
    %p129 = scmp.eq.s32.totalorder %s19, 0
    %p130 = por %p128, %p129
    %s132 = sadd.s32 %s131, 1
    %p135 = scmp.eq.s32.totalorder %s13, 1
    %p136 = scmp.ne.s32.totalorder %s131, %s133
    %p137 = scmp.eq.s32.totalorder %s13, 0
    %p138 = por %p136, %p137
    %p139 = scmp.ne.s32.totalorder %s131, %s133
    %p140 = scmp.eq.s32.totalorder %s18, 1
    %p141 = por %p139, %p140
    %p142 = scmp.ne.s32.totalorder %s133, %s134
    %p143 = scmp.eq.s32.totalorder %s18, 0
    %p144 = por %p142, %p143
    %p145 = scmp.ne.s32.totalorder %s133, %s134
    %p146 = scmp.eq.s32.totalorder %s19, 1
    %p147 = por %p145, %p146
    %p149 = scmp.ne.s32.totalorder %s134, %s148
    %p150 = scmp.eq.s32.totalorder %s19, 0
    %p151 = por %p149, %p150
    %s153 = sadd.s32 %s152, 1
    %p156 = scmp.eq.s32.totalorder %s13, 1
    %p157 = scmp.ne.s32.totalorder %s152, %s154
    %p158 = scmp.eq.s32.totalorder %s13, 0
    %p159 = por %p157, %p158
    %p160 = scmp.ne.s32.totalorder %s152, %s154
    %p161 = scmp.eq.s32.totalorder %s18, 1
    %p162 = por %p160, %p161
    %p163 = scmp.ne.s32.totalorder %s154, %s155
    %p164 = scmp.eq.s32.totalorder %s18, 0
    %p165 = por %p163, %p164
    %p166 = scmp.ne.s32.totalorder %s154, %s155
    %p167 = scmp.eq.s32.totalorder %s19, 1
    %p168 = por %p166, %p167
    %p170 = scmp.ne.s32.totalorder %s155, %s169
    %p171 = scmp.eq.s32.totalorder %s19, 0
    %p172 = por %p170, %p171
    %s173 = ssub.s32 %s13, %s20
    %p174 = scmp.eq.s32.totalorder %s173, 0
    %s176 = sadd.s32 %s175, 1
    %s177 = scalar_select %p174, %s175, %s176
    %p180 = pneg %p174
    %p181 = scmp.eq.s32.totalorder %s13, 1
    %p182 = por %p180, %p181
    %p183 = scmp.ne.s32.totalorder %s175, %s178
    %p184 = scmp.eq.s32.totalorder %s13, 0
    %p185 = por %p183, %p184
    %p186 = scmp.ne.s32.totalorder %s175, %s178
    %p187 = scmp.eq.s32.totalorder %s18, 1
    %p188 = por %p186, %p187
    %p189 = scmp.ne.s32.totalorder %s178, %s179
    %p190 = scmp.eq.s32.totalorder %s18, 0
    %p191 = por %p189, %p190
    %p192 = scmp.ne.s32.totalorder %s178, %s179
    %p193 = scmp.eq.s32.totalorder %s19, 1
    %p194 = por %p192, %p193
    %p196 = scmp.ne.s32.totalorder %s179, %s195
    %p197 = scmp.eq.s32.totalorder %s19, 0
    %p198 = por %p196, %p197
    %p199 = scmp.le.s32.totalorder 1, %s13
    %p200 = scmp.lt.s32.totalorder %s13, 3
    %p201 = pnand %p199, %p200
    %p202 = pneg %p201
    // Predicated region
    $region9: #{_lambda_.12} parent=5 // pred_check
      _
    $region10: #{_lambda_.12} parent=5 // pred_check_branch
      %204 = sbr.rel (%p201) target = $region12
    $region11: #{_lambda_.12} parent=5 // pred_region
      %s205 = ssub.s32 %s13, 1
      // Predicated region
      $region13: #{_lambda_.12} parent=11 // pred_check
        %p206 = pneg %p60
      $region14: #{_lambda_.12} parent=11 // pred_check_branch
        %208 = sbr.rel (%p206) target = $region16
      $region15: #{_lambda_.12} parent=11 // pred_region
        _
      $region16: #{_lambda_.12} parent=11 // pred_fallthru
        _
      // Predicated region
      $region17: #{_lambda_.12} parent=11 // pred_check
        %p209 = pneg %p81
      $region18: #{_lambda_.12} parent=11 // pred_check_branch
        %211 = sbr.rel (%p209) target = $region20
      $region19: #{_lambda_.12} parent=11 // pred_region
        _
      $region20: #{_lambda_.12} parent=11 // pred_fallthru
        _
      // Predicated region
      $region21: #{_lambda_.12} parent=11 // pred_check
        %p212 = pneg %p102
      $region22: #{_lambda_.12} parent=11 // pred_check_branch
        %214 = sbr.rel (%p212) target = $region24
      $region23: #{_lambda_.12} parent=11 // pred_region
        _
      $region24: #{_lambda_.12} parent=11 // pred_fallthru
        _
      // Predicated region
      $region25: #{_lambda_.12} parent=11 // pred_check
        %p215 = pneg %p123
      $region26: #{_lambda_.12} parent=11 // pred_check_branch
        %217 = sbr.rel (%p215) target = $region28
      $region27: #{_lambda_.12} parent=11 // pred_region
        _
      $region28: #{_lambda_.12} parent=11 // pred_fallthru
        _
      // Predicated region
      $region29: #{_lambda_.12} parent=11 // pred_check
        %p218 = pneg %p144
      $region30: #{_lambda_.12} parent=11 // pred_check_branch
        %220 = sbr.rel (%p218) target = $region32
      $region31: #{_lambda_.12} parent=11 // pred_region
        _
      $region32: #{_lambda_.12} parent=11 // pred_fallthru
        _
      // Predicated region
      $region33: #{_lambda_.12} parent=11 // pred_check
        %p221 = pneg %p165
      $region34: #{_lambda_.12} parent=11 // pred_check_branch
        %223 = sbr.rel (%p221) target = $region36
      $region35: #{_lambda_.12} parent=11 // pred_region
        _
      $region36: #{_lambda_.12} parent=11 // pred_fallthru
        _
    $region12: #{_lambda_.12} parent=5 // pred_fallthru
      _
    %p224 = scmp.lt.s32.totalorder %s13, 2
    // Predicated region
    $region37: #{_lambda_.12} parent=5 // pred_check
      %p225 = pneg %p224
    $region38: #{_lambda_.12} parent=5 // pred_check_branch
      %227 = sbr.rel (%p225) target = $region40
    $region39: #{_lambda_.12} parent=5 // pred_region
      // Predicated region
      $region41: #{_lambda_.12} parent=39 // pred_check
        %p228 = pneg %p33
      $region42: #{_lambda_.12} parent=39 // pred_check_branch
        %230 = sbr.rel (%p228) target = $region44
      $region43: #{_lambda_.12} parent=39 // pred_region
        %p231 = scmp.lt.s32.totalorder %s13, 1
        %s232 = scalar_select %p231, %s13, 1
        %s233 = smul.addr %s232, 8
        %s234 = scalar_lea.vmem %s0, %s233
      $region44: #{_lambda_.12} parent=39 // pred_fallthru
        _
    $region40: #{_lambda_.12} parent=5 // pred_fallthru
      _
    %p235 = scmp.le.s32.totalorder 1, %s13
    %p236 = scmp.lt.s32.totalorder %s13, 3
    %p237 = pnand %p235, %p236
    %p238 = pneg %p237
    // Predicated region
    $region45: #{_lambda_.12} parent=5 // pred_check
      _
    $region46: #{_lambda_.12} parent=5 // pred_check_branch
      %240 = sbr.rel (%p237) target = $region48
    $region47: #{_lambda_.12} parent=5 // pred_region
      %s241 = ssub.s32 %s13, 1
      %p242 = scmp.lt.s32.totalorder %s18, 1
      %s243 = scalar_select %p242, %s18, 1
      %s244 = smul.addr %s243, 8
      %s245 = scalar_lea.vmem %s0, %s244
      %p246 = pneg %p39
      %p247 = pneg %p36
      %p248 = pneg %p60
      %p249 = pneg %p57
      %p250 = pneg %p81
      %p251 = pneg %p78
      %p252 = pneg %p102
      %p253 = pneg %p99
      %p254 = pneg %p123
      %p255 = pneg %p120
      %p256 = pneg %p144
      %p257 = pneg %p141
      %p258 = pneg %p165
      %p259 = pneg %p162
      %p260 = pneg %p191
      %p261 = pneg %p188
      %p262 = scmp.lt.s32.totalorder %s18, 1
      %s263 = scalar_select %p262, %s18, 1
      %s264 = smul.addr %s263, 8
      %s265 = scalar_lea.vmem %s7, %s264
      %p266 = scmp.lt.s32.totalorder %s18, 1
      %s267 = scalar_select %p266, %s18, 1
      %s268 = smul.addr %s267, 8
      %s269 = scalar_lea.vmem %s0, %s268
      %p270 = scmp.lt.s32.totalorder %s18, 1
      %s271 = scalar_select %p270, %s18, 1
      %s272 = smul.addr %s271, 8
      %s273 = scalar_lea.vmem %s7, %s272
      %v275 = vld [vmem:[%s269] sm:$0x1f]
      %vm276 = vcmask 258048
      %v277 = vsel %vm276, %v275, 0.0
      %278 = vadd.xlane.f32.xlu0 %v277
      %v279 = vpop.xlane.xlu0 %278
      %v280 = vrcp.pop 32.0
      %v281 = vmul.f32 32.0, %v280
      %v282 = vsub.f32 1.0, %v281
      %v283 = vmul.f32 %v280, %v282
      %v284 = vadd.f32 %v280, %v283
      %vm285 = vweird.f32 %v280
      %v286 = vsel %vm285, %v280, %v284
      %v287 = vmul.f32 %v279, %v286
      %v288 = vsub.f32 %v275, %v287
      %v289 = vmul.f32 %v288, %v288
      %v290 = vsel %vm276, %v289, 0.0
      %291 = vadd.xlane.f32.xlu0 %v290
      %v292 = vpop.xlane.xlu0 %291
      %v293 = vmul.f32 %v292, %v286
      %v294 = vadd.f32 %v293, 1e-05
      %v295 = vrsqrt.pop %v294
      %v296 = vmul.f32 %v295, %v294
      %v297 = vmul.f32 %v296, %v295
      %v298 = vmul.f32 0.5, %v297
      %v299 = vsub.f32 1.5, %v298
      %v300 = vmul.f32 %v295, %v299
      %vm301 = vweird.f32 %v294
      %vm302 = vweird.f32 %v295
      %vm303 = vmor %vm301, %vm302
      %v304 = vsel %vm303, %v295, %v300
      %v305 = vmul.f32 %v288, %v304
      %v306 = vld [vmem:[%s1] sm:$0x1]
      %v308 = vperm.slane %v306, 0
      %v310 = vmul.f32 %v305, %v308
      %v311 = vld [vmem:[%s2] sm:$0x1]
      %v313 = vperm.slane %v311, 0
      %v315 = vadd.f32 %v310, %v313
      %v316 = vpack.c.bf16 %v315, %v315
      %v317 = vld [vmem:[%s3] sm:$0xf]
      %v318 = vld [vmem:[%s3 + $0x4] sm:$0xf]
      %v319 = vld [vmem:[%s3 + $0x8] sm:$0xf]
      %v320 = vld [vmem:[%s3 + $0xc] sm:$0xf]
      %v321 = vld [vmem:[%s4] sm:$0x1]
      %v323 = vperm.slane %v321, 0
      %v329 = vunpack.c.l.b16 %v317
      %v330 = vunpack.c.l.b16 %v318
      %v331 = vunpack.c.l.b16 %v319
      %v332 = vunpack.c.l.b16 %v320
      %v333 = vpack.c.b16 %v330, %v329
      %v334 = vpack.c.b16 %v332, %v331
      %vm337 = vcmask 261120
      %v339 = vsel %vm337, %v316, 0
      %341 = vmatpush.bf16.msra.mxu0 0
      %342 = vmatpush.bf16.msra.mxu0 0
      %343 = vmatpush.bf16.msra.mxu0 0
      %344 = vmatpush.bf16.msra.mxu0 0
      %345 = vmatpush.bf16.msra.mxu0 0
      %346 = vmatpush.bf16.msra.mxu0 0
      %347 = vmatpush.bf16.msra.mxu0 %v334
      %348 = vmatpush.bf16.msra.mxu0 %v333
      %349 = vmatmul.bf16.gmra.mxu0 %v339
      %v350 = vpop.f32.mrf.mxu0
      %v351 = vadd.f32 %v323, %v350
      %v352 = vpop.f32.mrf.mxu0
      %353 = vdwg.mxu0
      %v354 = vmul.f32 %v351, 0.35355338
      %v355 = vpack.c.bf16 %v354, %v354
      %v356 = vpack.c.bf16 %v351, %v351
      %358 = vrot.lane.b32.xlu0 %v356, 96
      %v359 = vpop.permute.xlu0 %358
      %vm360 = vcmask 64512
      %v362 = vsel %vm360, %v355, 0
      %v365 = vsel %vm360, %v359, 0
      %367 = vmatpush.bf16.xpose.msra.mxu0 0
      %368 = vmatpush.bf16.xpose.msra.mxu0 0
      %369 = vmatpush.bf16.xpose.msra.mxu0 0
      %370 = vmatpush.bf16.xpose.msra.mxu0 0
      %371 = vmatpush.bf16.xpose.msra.mxu0 0
      %372 = vmatpush.bf16.xpose.msra.mxu0 0
      %373 = vmatpush.bf16.xpose.msra.mxu0 0
      %374 = vmatpush.bf16.xpose.msra.mxu0 %v365
      %375 = vmatmul.bf16.gmra.mxu0 %v362
      %v376 = vpop.f32.mrf.mxu0
      %v377 = vadd.f32 0.0, %v376
      %v378 = vpop.f32.mrf.mxu0
      %379 = vdwg.mxu0
      %vm380 = vcmask 36864
      %v381 = vsel %vm380, %v377, -inf
      %382 = vmax.xlane.f32.xlu0 %v381
      %v383 = vpop.xlane.xlu0 %382
      %v384 = vsub.f32 %v377, %v383
      %v385 = vmul.f32 %v384, 1.442695
      %v386 = vpow.pop %v385
      %v387 = vsel %vm380, %v386, 0.0
      %388 = vadd.xlane.f32.xlu0 %v387
      %v389 = vpop.xlane.xlu0 %388
      %v390 = vrcp.pop %v389
      %v391 = vmul.f32 %v386, %v390
      %v392 = vpack.c.bf16 %v391, %v391
      %393 = vrot.lane.b32.xlu0 %v356, 64
      %v394 = vpop.permute.xlu0 %393
      %vm395 = vcmask 39936
      %v397 = vsel %vm395, %v392, 0
      %vm399 = vcmask 1041408
      %vm400 = vcmask 1042432
      %v401 = vsel %vm399, 4294967295, 65535
      %v402 = vsel %vm400, %v401, 0
      %v404 = vand.u32 %v394, %v402
      %406 = vmatpush.bf16.msra.mxu0 0
      %407 = vmatpush.bf16.msra.mxu0 0
      %408 = vmatpush.bf16.msra.mxu0 0
      %409 = vmatpush.bf16.msra.mxu0 0
      %410 = vmatpush.bf16.msra.mxu0 0
      %411 = vmatpush.bf16.msra.mxu0 0
      %412 = vmatpush.bf16.msra.mxu0 0
      %413 = vmatpush.bf16.msra.mxu0 %v404
      %414 = vmatmul.bf16.gmra.mxu0 %v397
      %v415 = vpop.f32.mrf.mxu0
      %v416 = vadd.f32 0.0, %v415
      %v417 = vpop.f32.mrf.mxu0
      %418 = vdwg.mxu0
      %420 = vrot.lane.b32.xlu0 %v355, 120
      %v421 = vpop.permute.xlu0 %420
      %422 = vrot.lane.b32.xlu0 %v356, 88
      %v423 = vpop.permute.xlu0 %422
      %v425 = vsel %vm360, %v421, 0
      %v428 = vsel %vm360, %v423, 0
      %430 = vmatpush.bf16.xpose.msra.mxu0 0
      %431 = vmatpush.bf16.xpose.msra.mxu0 0
      %432 = vmatpush.bf16.xpose.msra.mxu0 0
      %433 = vmatpush.bf16.xpose.msra.mxu0 0
      %434 = vmatpush.bf16.xpose.msra.mxu0 0
      %435 = vmatpush.bf16.xpose.msra.mxu0 0
      %436 = vmatpush.bf16.xpose.msra.mxu0 0
      %437 = vmatpush.bf16.xpose.msra.mxu0 %v428
      %438 = vmatmul.bf16.gmra.mxu0 %v425
      %v439 = vpop.f32.mrf.mxu0
      %v440 = vadd.f32 0.0, %v439
      %v441 = vpop.f32.mrf.mxu0
      %442 = vdwg.mxu0
      %v443 = vsel %vm380, %v440, -inf
      %444 = vmax.xlane.f32.xlu0 %v443
      %v445 = vpop.xlane.xlu0 %444
      %v446 = vsub.f32 %v440, %v445
      %v447 = vmul.f32 %v446, 1.442695
      %v448 = vpow.pop %v447
      %v449 = vsel %vm380, %v448, 0.0
      %450 = vadd.xlane.f32.xlu0 %v449
      %v451 = vpop.xlane.xlu0 %450
      %v452 = vrcp.pop %v451
      %v453 = vmul.f32 %v448, %v452
      %v454 = vpack.c.bf16 %v453, %v453
      %455 = vrot.lane.b32.xlu0 %v356, 56
      %v456 = vpop.permute.xlu0 %455
      %v458 = vsel %vm395, %v454, 0
      %v461 = vand.u32 %v456, %v402
      %463 = vmatpush.bf16.msra.mxu0 0
      %464 = vmatpush.bf16.msra.mxu0 0
      %465 = vmatpush.bf16.msra.mxu0 0
      %466 = vmatpush.bf16.msra.mxu0 0
      %467 = vmatpush.bf16.msra.mxu0 0
      %468 = vmatpush.bf16.msra.mxu0 0
      %469 = vmatpush.bf16.msra.mxu0 0
      %470 = vmatpush.bf16.msra.mxu0 %v461
      %471 = vmatmul.bf16.gmra.mxu0 %v458
      %v472 = vpop.f32.mrf.mxu0
      %v473 = vadd.f32 0.0, %v472
      %v474 = vpop.f32.mrf.mxu0
      %475 = vdwg.mxu0
      %476 = vrot.lane.b32.xlu0 %v355, 112
      %v477 = vpop.permute.xlu0 %476
      %478 = vrot.lane.b32.xlu0 %v356, 80
      %v479 = vpop.permute.xlu0 %478
      %v481 = vsel %vm360, %v477, 0
      %v484 = vsel %vm360, %v479, 0
      %486 = vmatpush.bf16.xpose.msra.mxu0 0
      %487 = vmatpush.bf16.xpose.msra.mxu0 0
      %488 = vmatpush.bf16.xpose.msra.mxu0 0
      %489 = vmatpush.bf16.xpose.msra.mxu0 0
      %490 = vmatpush.bf16.xpose.msra.mxu0 0
      %491 = vmatpush.bf16.xpose.msra.mxu0 0
      %492 = vmatpush.bf16.xpose.msra.mxu0 0
      %493 = vmatpush.bf16.xpose.msra.mxu0 %v484
      %494 = vmatmul.bf16.gmra.mxu0 %v481
      %v495 = vpop.f32.mrf.mxu0
      %v496 = vadd.f32 0.0, %v495
      %v497 = vpop.f32.mrf.mxu0
      %498 = vdwg.mxu0
      %v499 = vsel %vm380, %v496, -inf
      %500 = vmax.xlane.f32.xlu0 %v499
      %v501 = vpop.xlane.xlu0 %500
      %v502 = vsub.f32 %v496, %v501
      %v503 = vmul.f32 %v502, 1.442695
      %v504 = vpow.pop %v503
      %v505 = vsel %vm380, %v504, 0.0
      %506 = vadd.xlane.f32.xlu0 %v505
      %v507 = vpop.xlane.xlu0 %506
      %v508 = vrcp.pop %v507
      %v509 = vmul.f32 %v504, %v508
      %v510 = vpack.c.bf16 %v509, %v509
      %511 = vrot.lane.b32.xlu0 %v356, 48
      %v512 = vpop.permute.xlu0 %511
      %v514 = vsel %vm395, %v510, 0
      %v517 = vand.u32 %v512, %v402
      %519 = vmatpush.bf16.msra.mxu0 0
      %520 = vmatpush.bf16.msra.mxu0 0
      %521 = vmatpush.bf16.msra.mxu0 0
      %522 = vmatpush.bf16.msra.mxu0 0
      %523 = vmatpush.bf16.msra.mxu0 0
      %524 = vmatpush.bf16.msra.mxu0 0
      %525 = vmatpush.bf16.msra.mxu0 0
      %526 = vmatpush.bf16.msra.mxu0 %v517
      %527 = vmatmul.bf16.gmra.mxu0 %v514
      %v528 = vpop.f32.mrf.mxu0
      %v529 = vadd.f32 0.0, %v528
      %v530 = vpop.f32.mrf.mxu0
      %531 = vdwg.mxu0
      %532 = vrot.lane.b32.xlu0 %v355, 104
      %v533 = vpop.permute.xlu0 %532
      %534 = vrot.lane.b32.xlu0 %v356, 72
      %v535 = vpop.permute.xlu0 %534
      %v537 = vsel %vm360, %v533, 0
      %v540 = vsel %vm360, %v535, 0
      %542 = vmatpush.bf16.xpose.msra.mxu0 0
      %543 = vmatpush.bf16.xpose.msra.mxu0 0
      %544 = vmatpush.bf16.xpose.msra.mxu0 0
      %545 = vmatpush.bf16.xpose.msra.mxu0 0
      %546 = vmatpush.bf16.xpose.msra.mxu0 0
      %547 = vmatpush.bf16.xpose.msra.mxu0 0
      %548 = vmatpush.bf16.xpose.msra.mxu0 0
      %549 = vmatpush.bf16.xpose.msra.mxu0 %v540
      %550 = vmatmul.bf16.gmra.mxu0 %v537
      %v551 = vpop.f32.mrf.mxu0
      %v552 = vadd.f32 0.0, %v551
      %v553 = vpop.f32.mrf.mxu0
      %554 = vdwg.mxu0
      %v555 = vsel %vm380, %v552, -inf
      %556 = vmax.xlane.f32.xlu0 %v555
      %v557 = vpop.xlane.xlu0 %556
      %v558 = vsub.f32 %v552, %v557
      %v559 = vmul.f32 %v558, 1.442695
      %v560 = vpow.pop %v559
      %v561 = vsel %vm380, %v560, 0.0
      %562 = vadd.xlane.f32.xlu0 %v561
      %v563 = vpop.xlane.xlu0 %562
      %v564 = vrcp.pop %v563
      %v565 = vmul.f32 %v560, %v564
      %v566 = vpack.c.bf16 %v565, %v565
      %567 = vrot.lane.b32.xlu0 %v356, 40
      %v568 = vpop.permute.xlu0 %567
      %v570 = vsel %vm395, %v566, 0
      %v573 = vand.u32 %v568, %v402
      %575 = vmatpush.bf16.msra.mxu0 0
      %576 = vmatpush.bf16.msra.mxu0 0
      %577 = vmatpush.bf16.msra.mxu0 0
      %578 = vmatpush.bf16.msra.mxu0 0
      %579 = vmatpush.bf16.msra.mxu0 0
      %580 = vmatpush.bf16.msra.mxu0 0
      %581 = vmatpush.bf16.msra.mxu0 0
      %582 = vmatpush.bf16.msra.mxu0 %v573
      %583 = vmatmul.bf16.gmra.mxu0 %v570
      %v584 = vpop.f32.mrf.mxu0
      %v585 = vadd.f32 0.0, %v584
      %v586 = vpop.f32.mrf.mxu0
      %587 = vdwg.mxu0
      %589 = vrot.lane.b32.xlu0 %v473, 8
      %v590 = vpop.permute.xlu0 %589
      %593 = vrot.lane.b32.xlu0 %v529, 16
      %v594 = vpop.permute.xlu0 %593
      %597 = vrot.lane.b32.xlu0 %v585, 24
      %v598 = vpop.permute.xlu0 %597
      %v600 = vsel %vm360, %v416, %v590
      %vm601 = vcmask 130048
      %v602 = vsel %vm601, %v600, %v594
      %vm603 = vcmask 195584
      %v604 = vsel %vm603, %v602, %v598
      %v605 = vpack.c.bf16 %v604, %v604
      %v606 = vld [vmem:[%s5] sm:$0xf]
      %v607 = vld [vmem:[%s5 + $0x4] sm:$0xf]
      %v608 = vld [vmem:[%s5 + $0x8] sm:$0xf]
      %v609 = vld [vmem:[%s5 + $0xc] sm:$0xf]
      %v610 = vld [vmem:[%s6] sm:$0x1]
      %v612 = vperm.slane %v610, 0
      %v618 = vunpack.c.l.b16 %v606
      %v619 = vunpack.c.l.b16 %v607
      %v620 = vunpack.c.l.b16 %v608
      %v621 = vunpack.c.l.b16 %v609
      %v622 = vpack.c.b16 %v619, %v618
      %v623 = vpack.c.b16 %v621, %v620
      %v627 = vsel %vm337, %v605, 0
      %629 = vmatpush.bf16.msra.mxu0 0
      %630 = vmatpush.bf16.msra.mxu0 0
      %631 = vmatpush.bf16.msra.mxu0 0
      %632 = vmatpush.bf16.msra.mxu0 0
      %633 = vmatpush.bf16.msra.mxu0 0
      %634 = vmatpush.bf16.msra.mxu0 0
      %635 = vmatpush.bf16.msra.mxu0 %v623
      %636 = vmatpush.bf16.msra.mxu0 %v622
      %637 = vmatmul.bf16.gmra.mxu0 %v627
      %v638 = vpop.f32.mrf.mxu0
      %v639 = vadd.f32 %v612, %v638
      %v640 = vpop.f32.mrf.mxu0
      %641 = vdwg.mxu0
      %v642 = vadd.f32 %v275, %v639
      %643 = vst.msk [vmem:[%s273] sm:$0x1f] %vm276, %v642
      %p644 = scmp.lt.s32.totalorder %s18, 1
      %s645 = scalar_select %p644, %s18, 1
      %s646 = smul.addr %s645, 8
      %s647 = scalar_lea.vmem %s7, %s646
      // Predicated region
      $region49: #{_lambda_.12} parent=47 // pred_check
        %p648 = pneg %p188
      $region50: #{_lambda_.12} parent=47 // pred_check_branch
        %650 = sbr.rel (%p648) target = $region52
      $region51: #{_lambda_.12} parent=47 // pred_region
        _
      $region52: #{_lambda_.12} parent=47 // pred_fallthru
        _
    $region48: #{_lambda_.12} parent=5 // pred_fallthru
      _
    %p651 = scmp.le.s32.totalorder 2, %s13
    // Predicated region
    $region53: #{_lambda_.12} parent=5 // pred_check
      %p652 = pneg %p651
    $region54: #{_lambda_.12} parent=5 // pred_check_branch
      %654 = sbr.rel (%p652) target = $region56
    $region55: #{_lambda_.12} parent=5 // pred_region
      %s655 = ssub.s32 %s13, 2
      // Predicated region
      $region57: #{_lambda_.12} parent=55 // pred_check
        %p656 = pneg %p194
      $region58: #{_lambda_.12} parent=55 // pred_check_branch
        %658 = sbr.rel (%p656) target = $region60
      $region59: #{_lambda_.12} parent=55 // pred_region
        %p659 = scmp.lt.s32.totalorder %s19, 1
        %s660 = scalar_select %p659, %s19, 1
        %s661 = smul.addr %s660, 8
        %s662 = scalar_lea.vmem %s7, %s661
      $region60: #{_lambda_.12} parent=55 // pred_fallthru
        _
    $region56: #{_lambda_.12} parent=5 // pred_fallthru
      _
  $region6: #{_lambda_.12} parent=0 // loop_footer
    %s17 = sadd.s32 1, %s13
  $region7: #{_lambda_.12} parent=0 // loop_footer_branch
    %12 = sbr.rel target = $region3
  $region8: #{_lambda_.12} parent=0 // loop_exit
    _

// kernel: _lambda_.16
$region0: #{_lambda_.16}
  #allocation0 [shape = 'u32[]', space=smem, size = 0x4, offset = 0x4, fixed_abs, tag = 'smem constant byte address 0x4 - core index']
  #allocation1 [shape = 'u32[72,128]{1,0:T(1,128)}', space=vmem, size = 0x9000, scoped, tag = 'internal scratch']
  %s0 = inlined_call_operand.vmem [shape: f32[10,32], index: 0, kind: input, shape index: {}]
  %s1 = inlined_call_operand.vmem [shape: f32[1,32], index: 1, kind: input, shape index: {}]
  %s2 = inlined_call_operand.vmem [shape: f32[1,32], index: 2, kind: input, shape index: {}]
  %s3 = inlined_call_operand.vmem [shape: bf16[32,128], index: 3, kind: input, shape index: {}]
  %s4 = inlined_call_operand.vmem [shape: f32[1,128], index: 4, kind: input, shape index: {}]
  %s5 = inlined_call_operand.vmem [shape: f32[10,128], index: 5, kind: output, shape index: {}]
  %s6 = sld [smem:[#allocation0]]
  $region30: #{_lambda_.16} parent=0
    _
  %s8 = ssub.s32 1, %s6
  %s9 = scalar_select 0, %s8, %s6
  // Predicated region
  $region2: #{_lambda_.16} parent=0 // pred_check
    _
  $region3: #{_lambda_.16} parent=0 // pred_check_branch
    %11 = sbr.rel (0) target = $region5
  $region4: #{_lambda_.16} parent=0 // pred_region
    _
  $region5: #{_lambda_.16} parent=0 // pred_fallthru
    _
  // Predicated region
  $region6: #{_lambda_.16} parent=0 // pred_check
    _
  $region7: #{_lambda_.16} parent=0 // pred_check_branch
    %13 = sbr.rel (0) target = $region9
  $region8: #{_lambda_.16} parent=0 // pred_region
    _
  $region9: #{_lambda_.16} parent=0 // pred_fallthru
    _
  // Predicated region
  $region10: #{_lambda_.16} parent=0 // pred_check
    _
  $region11: #{_lambda_.16} parent=0 // pred_check_branch
    %15 = sbr.rel (0) target = $region13
  $region12: #{_lambda_.16} parent=0 // pred_region
    _
  $region13: #{_lambda_.16} parent=0 // pred_fallthru
    _
  // Predicated region
  $region14: #{_lambda_.16} parent=0 // pred_check
    _
  $region15: #{_lambda_.16} parent=0 // pred_check_branch
    %17 = sbr.rel (0) target = $region17
  $region16: #{_lambda_.16} parent=0 // pred_region
    _
  $region17: #{_lambda_.16} parent=0 // pred_fallthru
    _
  // Predicated region
  $region18: #{_lambda_.16} parent=0 // pred_check
    _
  $region19: #{_lambda_.16} parent=0 // pred_check_branch
    %19 = sbr.rel (0) target = $region21
  $region20: #{_lambda_.16} parent=0 // pred_region
    _
  $region21: #{_lambda_.16} parent=0 // pred_fallthru
    _
  %v21 = vld [vmem:[%s0] sm:$0xff]
  %v22 = vld [vmem:[%s0 + $0x8] sm:$0x3]
  %vm23 = vcmask 261120
  %v24 = vsel %vm23, %v21, 0.0
  %25 = vadd.xlane.f32.xlu0 %v24
  %v26 = vpop.xlane.xlu0 %25
  %vm27 = vcmask 254976
  %v28 = vsel %vm27, %v22, 0.0
  %29 = vadd.xlane.f32.xlu0 %v28
  %v30 = vpop.xlane.xlu0 %29
  %v31 = vrcp.pop 32.0
  %v32 = vmul.f32 32.0, %v31
  %v33 = vsub.f32 1.0, %v32
  %v34 = vmul.f32 %v31, %v33
  %v35 = vadd.f32 %v31, %v34
  %vm36 = vweird.f32 %v31
  %v37 = vsel %vm36, %v31, %v35
  %v38 = vmul.f32 %v26, %v37
  %v39 = vmul.f32 %v30, %v37
  %v40 = vsub.f32 %v21, %v38
  %v41 = vsub.f32 %v22, %v39
  %v42 = vmul.f32 %v40, %v40
  %v43 = vmul.f32 %v41, %v41
  %v44 = vsel %vm23, %v42, 0.0
  %45 = vadd.xlane.f32.xlu0 %v44
  %v46 = vpop.xlane.xlu0 %45
  %v47 = vsel %vm27, %v43, 0.0
  %48 = vadd.xlane.f32.xlu0 %v47
  %v49 = vpop.xlane.xlu0 %48
  %v50 = vmul.f32 %v46, %v37
  %v51 = vmul.f32 %v49, %v37
  %v52 = vadd.f32 %v50, 1e-05
  %v53 = vadd.f32 %v51, 1e-05
  %v54 = vrsqrt.pop %v52
  %v55 = vmul.f32 %v54, %v52
  %v56 = vmul.f32 %v55, %v54
  %v57 = vmul.f32 0.5, %v56
  %v58 = vsub.f32 1.5, %v57
  %v59 = vmul.f32 %v54, %v58
  %vm60 = vweird.f32 %v52
  %vm61 = vweird.f32 %v54
  %vm62 = vmor %vm60, %vm61
  %v63 = vsel %vm62, %v54, %v59
  %v64 = vrsqrt.pop %v53
  %v65 = vmul.f32 %v64, %v53
  %v66 = vmul.f32 %v65, %v64
  %v67 = vmul.f32 0.5, %v66
  %v68 = vsub.f32 1.5, %v67
  %v69 = vmul.f32 %v64, %v68
  %vm70 = vweird.f32 %v53
  %vm71 = vweird.f32 %v64
  %vm72 = vmor %vm70, %vm71
  %v73 = vsel %vm72, %v64, %v69
  %v74 = vmul.f32 %v40, %v63
  %v75 = vmul.f32 %v41, %v73
  %v76 = vld [vmem:[%s1] sm:$0x1]
  %v78 = vperm.slane %v76, 0
  %v80 = vmul.f32 %v74, %v78
  %v81 = vmul.f32 %v75, %v78
  %v82 = vld [vmem:[%s2] sm:$0x1]
  %v84 = vperm.slane %v82, 0
  %v86 = vadd.f32 %v80, %v84
  %v87 = vadd.f32 %v81, %v84
  %v88 = vpack.c.bf16 %v87, %v86
  %v89 = vld [vmem:[%s3] sm:$0xf]
  %v90 = vld [vmem:[%s3 + $0x4] sm:$0xf]
  %v91 = vld [vmem:[%s3 + $0x8] sm:$0xf]
  %v92 = vld [vmem:[%s3 + $0xc] sm:$0xf]
  %v93 = vld [vmem:[%s4] sm:$0x1]
  %v95 = vperm.slane %v93, 0
  %v101 = vunpack.c.l.b16 %v89
  %v102 = vunpack.c.l.b16 %v90
  %v103 = vunpack.c.l.b16 %v91
  %v104 = vunpack.c.l.b16 %v92
  %v105 = vpack.c.b16 %v102, %v101
  %v106 = vpack.c.b16 %v104, %v103
  %v110 = vsel %vm23, %v88, 0
  %112 = vmatpush.bf16.msra.mxu0 0
  %113 = vmatpush.bf16.msra.mxu0 0
  %114 = vmatpush.bf16.msra.mxu0 0
  %115 = vmatpush.bf16.msra.mxu0 0
  %116 = vmatpush.bf16.msra.mxu0 0
  %117 = vmatpush.bf16.msra.mxu0 0
  %118 = vmatpush.bf16.msra.mxu0 %v106
  %119 = vmatpush.bf16.msra.mxu0 %v105
  %120 = vmatmul.bf16.gmra.mxu0 %v110
  %v121 = vpop.f32.mrf.mxu0
  %v122 = vadd.f32 %v95, %v121
  %v123 = vpop.f32.mrf.mxu0
  %v124 = vadd.f32 %v95, %v123
  %125 = vdwg.mxu0
  %126 = vst [vmem:[%s5] sm:$0xff] %v122
  %127 = vst [vmem:[%s5 + $0x8] sm:$0x3] %v124
  // Predicated region
  $region22: #{_lambda_.16} parent=0 // pred_check
    _
  $region23: #{_lambda_.16} parent=0 // pred_check_branch
    %129 = sbr.rel (0) target = $region25
  $region24: #{_lambda_.16} parent=0 // pred_region
    _
  $region25: #{_lambda_.16} parent=0 // pred_fallthru
    _
  // Predicated region
  $region26: #{_lambda_.16} parent=0 // pred_check
    _
  $region27: #{_lambda_.16} parent=0 // pred_check_branch
    %131 = sbr.rel (0) target = $region29
  $region28: #{_lambda_.16} parent=0 // pred_region
    _
  $region29: #{_lambda_.16} parent=0 // pred_fallthru
    _

// kernel: _lambda_.18
$region0: #{_lambda_.18}
  #allocation0 [shape = 'u32[]', space=smem, size = 0x4, offset = 0x4, fixed_abs, tag = 'smem constant byte address 0x4 - core index']
  #allocation1 [shape = 'u32[72,128]{1,0:T(1,128)}', space=vmem, size = 0x9000, scoped, tag = 'internal scratch']
  %s0 = inlined_call_operand.vmem [shape: f32[18,32], index: 0, kind: input, shape index: {}]
  %s1 = inlined_call_operand.vmem [shape: f32[1,32], index: 1, kind: input, shape index: {}]
  %s2 = inlined_call_operand.vmem [shape: f32[1,32], index: 2, kind: input, shape index: {}]
  %s3 = inlined_call_operand.vmem [shape: bf16[32,128], index: 3, kind: input, shape index: {}]
  %s4 = inlined_call_operand.vmem [shape: f32[1,128], index: 4, kind: input, shape index: {}]
  %s5 = inlined_call_operand.vmem [shape: bf16[128,32], index: 5, kind: input, shape index: {}]
  %s6 = inlined_call_operand.vmem [shape: f32[1,32], index: 6, kind: input, shape index: {}]
  %s7 = inlined_call_operand.vmem [shape: f32[18,32], index: 7, kind: output, shape index: {}]
  %s8 = sld [smem:[#allocation0]]
  $region38: #{_lambda_.18} parent=0
    _
  %s10 = ssub.s32 1, %s8
  %s11 = scalar_select 0, %s10, %s8
  // Predicated region
  $region2: #{_lambda_.18} parent=0 // pred_check
    _
  $region3: #{_lambda_.18} parent=0 // pred_check_branch
    %13 = sbr.rel (0) target = $region5
  $region4: #{_lambda_.18} parent=0 // pred_region
    _
  $region5: #{_lambda_.18} parent=0 // pred_fallthru
    _
  // Predicated region
  $region6: #{_lambda_.18} parent=0 // pred_check
    _
  $region7: #{_lambda_.18} parent=0 // pred_check_branch
    %15 = sbr.rel (0) target = $region9
  $region8: #{_lambda_.18} parent=0 // pred_region
    _
  $region9: #{_lambda_.18} parent=0 // pred_fallthru
    _
  // Predicated region
  $region10: #{_lambda_.18} parent=0 // pred_check
    _
  $region11: #{_lambda_.18} parent=0 // pred_check_branch
    %17 = sbr.rel (0) target = $region13
  $region12: #{_lambda_.18} parent=0 // pred_region
    _
  $region13: #{_lambda_.18} parent=0 // pred_fallthru
    _
  // Predicated region
  $region14: #{_lambda_.18} parent=0 // pred_check
    _
  $region15: #{_lambda_.18} parent=0 // pred_check_branch
    %19 = sbr.rel (0) target = $region17
  $region16: #{_lambda_.18} parent=0 // pred_region
    _
  $region17: #{_lambda_.18} parent=0 // pred_fallthru
    _
  // Predicated region
  $region18: #{_lambda_.18} parent=0 // pred_check
    _
  $region19: #{_lambda_.18} parent=0 // pred_check_branch
    %21 = sbr.rel (0) target = $region21
  $region20: #{_lambda_.18} parent=0 // pred_region
    _
  $region21: #{_lambda_.18} parent=0 // pred_fallthru
    _
  // Predicated region
  $region22: #{_lambda_.18} parent=0 // pred_check
    _
  $region23: #{_lambda_.18} parent=0 // pred_check_branch
    %23 = sbr.rel (0) target = $region25
  $region24: #{_lambda_.18} parent=0 // pred_region
    _
  $region25: #{_lambda_.18} parent=0 // pred_fallthru
    _
  // Predicated region
  $region26: #{_lambda_.18} parent=0 // pred_check
    _
  $region27: #{_lambda_.18} parent=0 // pred_check_branch
    %25 = sbr.rel (0) target = $region29
  $region28: #{_lambda_.18} parent=0 // pred_region
    _
  $region29: #{_lambda_.18} parent=0 // pred_fallthru
    _
  %v27 = vld [vmem:[%s0] sm:$0xff]
  %v28 = vld [vmem:[%s0 + $0x8] sm:$0xff]
  %v29 = vld [vmem:[%s0 + $0x10] sm:$0x3]
  %vm30 = vcmask 261120
  %v31 = vsel %vm30, %v27, 0.0
  %32 = vadd.xlane.f32.xlu0 %v31
  %v33 = vpop.xlane.xlu0 %32
  %v34 = vsel %vm30, %v28, 0.0
  %35 = vadd.xlane.f32.xlu0 %v34
  %v36 = vpop.xlane.xlu0 %35
  %vm37 = vcmask 254976
  %v38 = vsel %vm37, %v29, 0.0
  %39 = vadd.xlane.f32.xlu0 %v38
  %v40 = vpop.xlane.xlu0 %39
  %v41 = vrcp.pop 32.0
  %v42 = vmul.f32 32.0, %v41
  %v43 = vsub.f32 1.0, %v42
  %v44 = vmul.f32 %v41, %v43
  %v45 = vadd.f32 %v41, %v44
  %vm46 = vweird.f32 %v41
  %v47 = vsel %vm46, %v41, %v45
  %v48 = vmul.f32 %v33, %v47
  %v49 = vmul.f32 %v36, %v47
  %v50 = vmul.f32 %v40, %v47
  %v51 = vsub.f32 %v27, %v48
  %v52 = vsub.f32 %v28, %v49
  %v53 = vsub.f32 %v29, %v50
  %v54 = vmul.f32 %v51, %v51
  %v55 = vmul.f32 %v52, %v52
  %v56 = vmul.f32 %v53, %v53
  %v57 = vsel %vm30, %v54, 0.0
  %58 = vadd.xlane.f32.xlu0 %v57
  %v59 = vpop.xlane.xlu0 %58
  %v60 = vsel %vm30, %v55, 0.0
  %61 = vadd.xlane.f32.xlu0 %v60
  %v62 = vpop.xlane.xlu0 %61
  %v63 = vsel %vm37, %v56, 0.0
  %64 = vadd.xlane.f32.xlu0 %v63
  %v65 = vpop.xlane.xlu0 %64
  %v66 = vmul.f32 %v59, %v47
  %v67 = vmul.f32 %v62, %v47
  %v68 = vmul.f32 %v65, %v47
  %v69 = vadd.f32 %v66, 1e-05
  %v70 = vadd.f32 %v67, 1e-05
  %v71 = vadd.f32 %v68, 1e-05
  %v72 = vrsqrt.pop %v69
  %v73 = vmul.f32 %v72, %v69
  %v74 = vmul.f32 %v73, %v72
  %v75 = vmul.f32 0.5, %v74
  %v76 = vsub.f32 1.5, %v75
  %v77 = vmul.f32 %v72, %v76
  %vm78 = vweird.f32 %v69
  %vm79 = vweird.f32 %v72
  %vm80 = vmor %vm78, %vm79
  %v81 = vsel %vm80, %v72, %v77
  %v82 = vrsqrt.pop %v70
  %v83 = vmul.f32 %v82, %v70
  %v84 = vmul.f32 %v83, %v82
  %v85 = vmul.f32 0.5, %v84
  %v86 = vsub.f32 1.5, %v85
  %v87 = vmul.f32 %v82, %v86
  %vm88 = vweird.f32 %v70
  %vm89 = vweird.f32 %v82
  %vm90 = vmor %vm88, %vm89
  %v91 = vsel %vm90, %v82, %v87
  %v92 = vrsqrt.pop %v71
  %v93 = vmul.f32 %v92, %v71
  %v94 = vmul.f32 %v93, %v92
  %v95 = vmul.f32 0.5, %v94
  %v96 = vsub.f32 1.5, %v95
  %v97 = vmul.f32 %v92, %v96
  %vm98 = vweird.f32 %v71
  %vm99 = vweird.f32 %v92
  %vm100 = vmor %vm98, %vm99
  %v101 = vsel %vm100, %v92, %v97
  %v102 = vmul.f32 %v51, %v81
  %v103 = vmul.f32 %v52, %v91
  %v104 = vmul.f32 %v53, %v101
  %v105 = vld [vmem:[%s1] sm:$0x1]
  %v107 = vperm.slane %v105, 0
  %v109 = vmul.f32 %v102, %v107
  %v110 = vmul.f32 %v103, %v107
  %v111 = vmul.f32 %v104, %v107
  %v112 = vld [vmem:[%s2] sm:$0x1]
  %v114 = vperm.slane %v112, 0
  %v116 = vadd.f32 %v109, %v114
  %v117 = vadd.f32 %v110, %v114
  %v118 = vadd.f32 %v111, %v114
  %v119 = vpack.c.bf16 %v117, %v116
  %v120 = vpack.c.bf16 %v118, %v118
  %v121 = vld [vmem:[%s3] sm:$0xf]
  %v122 = vld [vmem:[%s3 + $0x4] sm:$0xf]
  %v123 = vld [vmem:[%s3 + $0x8] sm:$0xf]
  %v124 = vld [vmem:[%s3 + $0xc] sm:$0xf]
  %v125 = vld [vmem:[%s4] sm:$0x1]
  %v127 = vperm.slane %v125, 0
  %v133 = vunpack.c.l.b16 %v121
  %v134 = vunpack.c.l.b16 %v122
  %v135 = vunpack.c.l.b16 %v123
  %v136 = vunpack.c.l.b16 %v124
  %v137 = vpack.c.b16 %v134, %v133
  %v138 = vpack.c.b16 %v136, %v135
  %v142 = vsel %vm30, %v119, 0
  %v145 = vsel %vm30, %v120, 0
  %147 = vmatpush.bf16.msra.mxu0 0
  %148 = vmatpush.bf16.msra.mxu0 0
  %149 = vmatpush.bf16.msra.mxu0 0
  %150 = vmatpush.bf16.msra.mxu0 0
  %151 = vmatpush.bf16.msra.mxu0 0
  %152 = vmatpush.bf16.msra.mxu0 0
  %153 = vmatpush.bf16.msra.mxu0 %v138
  %154 = vmatpush.bf16.msra.mxu0 %v137
  %155 = vmatmul.bf16.gmra.mxu0 %v142
  %v156 = vpop.f32.mrf.mxu0
  %v157 = vadd.f32 %v127, %v156
  %v158 = vpop.f32.mrf.mxu0
  %v159 = vadd.f32 %v127, %v158
  %160 = vmatmul.bf16.gmra.mxu0 %v145
  %v161 = vpop.f32.mrf.mxu0
  %v162 = vadd.f32 %v127, %v161
  %v163 = vpop.f32.mrf.mxu0
  %164 = vdwg.mxu0
  %v165 = vmul.f32 %v157, %v157
  %v166 = vmul.f32 %v159, %v159
  %v167 = vmul.f32 %v162, %v162
  %v168 = vmul.f32 %v157, %v165
  %v169 = vmul.f32 %v159, %v166
  %v170 = vmul.f32 %v162, %v167
  %v171 = vmul.f32 %v168, 0.044715
  %v172 = vmul.f32 %v169, 0.044715
  %v173 = vmul.f32 %v170, 0.044715
  %v174 = vadd.f32 %v157, %v171
  %v175 = vadd.f32 %v159, %v172
  %v176 = vadd.f32 %v162, %v173
  %v177 = vmul.f32 %v174, 0.7978846
  %v178 = vmul.f32 %v175, 0.7978846
  %v179 = vmul.f32 %v176, 0.7978846
  %v180 = vtanh.pop %v177
  %v181 = vtanh.pop %v178
  %v182 = vtanh.pop %v179
  %v183 = vadd.f32 %v180, 1.0
  %v184 = vadd.f32 %v181, 1.0
  %v185 = vadd.f32 %v182, 1.0
  %v186 = vmul.f32 %v183, 0.5
  %v187 = vmul.f32 %v184, 0.5
  %v188 = vmul.f32 %v185, 0.5
  %v189 = vmul.f32 %v157, %v186
  %v190 = vmul.f32 %v159, %v187
  %v191 = vmul.f32 %v162, %v188
  %v192 = vpack.c.bf16 %v190, %v189
  %v193 = vpack.c.bf16 %v191, %v191
  %v194 = vld [vmem:[%s5] sm:$0xf]
  %v195 = vld [vmem:[%s5 + $0x4] sm:$0xf]
  %v196 = vld [vmem:[%s5 + $0x8] sm:$0xf]
  %v197 = vld [vmem:[%s5 + $0xc] sm:$0xf]
  %v198 = vld [vmem:[%s5 + $0x10] sm:$0xf]
  %v199 = vld [vmem:[%s5 + $0x14] sm:$0xf]
  %v200 = vld [vmem:[%s5 + $0x18] sm:$0xf]
  %v201 = vld [vmem:[%s5 + $0x1c] sm:$0xf]
  %v202 = vld [vmem:[%s5 + $0x20] sm:$0xf]
  %v203 = vld [vmem:[%s5 + $0x24] sm:$0xf]
  %v204 = vld [vmem:[%s5 + $0x28] sm:$0xf]
  %v205 = vld [vmem:[%s5 + $0x2c] sm:$0xf]
  %v206 = vld [vmem:[%s5 + $0x30] sm:$0xf]
  %v207 = vld [vmem:[%s5 + $0x34] sm:$0xf]
  %v208 = vld [vmem:[%s5 + $0x38] sm:$0xf]
  %v209 = vld [vmem:[%s5 + $0x3c] sm:$0xf]
  %v210 = vld [vmem:[%s6] sm:$0x1]
  %v212 = vperm.slane %v210, 0
  %v230 = vunpack.c.l.b16 %v194
  %v231 = vunpack.c.l.b16 %v195
  %v232 = vunpack.c.l.b16 %v196
  %v233 = vunpack.c.l.b16 %v197
  %v234 = vunpack.c.l.b16 %v198
  %v235 = vunpack.c.l.b16 %v199
  %v236 = vunpack.c.l.b16 %v200
  %v237 = vunpack.c.l.b16 %v201
  %v238 = vunpack.c.l.b16 %v202
  %v239 = vunpack.c.l.b16 %v203
  %v240 = vunpack.c.l.b16 %v204
  %v241 = vunpack.c.l.b16 %v205
  %v242 = vunpack.c.l.b16 %v206
  %v243 = vunpack.c.l.b16 %v207
  %v244 = vunpack.c.l.b16 %v208
  %v245 = vunpack.c.l.b16 %v209
  %v246 = vpack.c.b16 %v231, %v230
  %v247 = vpack.c.b16 %v233, %v232
  %v248 = vpack.c.b16 %v235, %v234
  %v249 = vpack.c.b16 %v237, %v236
  %v250 = vpack.c.b16 %v239, %v238
  %v251 = vpack.c.b16 %v241, %v240
  %v252 = vpack.c.b16 %v243, %v242
  %v253 = vpack.c.b16 %v245, %v244
  %262 = vmatpush.bf16.msra.mxu0 %v253
  %263 = vmatpush.bf16.msra.mxu0 %v252
  %264 = vmatpush.bf16.msra.mxu0 %v251
  %265 = vmatpush.bf16.msra.mxu0 %v250
  %266 = vmatpush.bf16.msra.mxu0 %v249
  %267 = vmatpush.bf16.msra.mxu0 %v248
  %268 = vmatpush.bf16.msra.mxu0 %v247
  %269 = vmatpush.bf16.msra.mxu0 %v246
  %270 = vmatmul.bf16.gmra.mxu0 %v192
  %v271 = vpop.f32.mrf.mxu0
  %v272 = vadd.f32 %v212, %v271
  %v273 = vpop.f32.mrf.mxu0
  %v274 = vadd.f32 %v212, %v273
  %275 = vmatmul.bf16.gmra.mxu0 %v193
  %v276 = vpop.f32.mrf.mxu0
  %v277 = vadd.f32 %v212, %v276
  %v278 = vpop.f32.mrf.mxu0
  %279 = vdwg.mxu0
  %v280 = vadd.f32 %v27, %v272
  %v281 = vadd.f32 %v28, %v274
  %v282 = vadd.f32 %v29, %v277
  %283 = vst.msk [vmem:[%s7] sm:$0xff] %vm30, %v280
  %284 = vst.msk [vmem:[%s7 + $0x8] sm:$0xff] %vm30, %v281
  %285 = vst.msk [vmem:[%s7 + $0x10] sm:$0x3] %vm37, %v282
  // Predicated region
  $region30: #{_lambda_.18} parent=0 // pred_check
    _
  $region31: #{_lambda_.18} parent=0 // pred_check_branch
    %287 = sbr.rel (0) target = $region33
  $region32: #{_lambda_.18} parent=0 // pred_region
    _
  $region33: #{_lambda_.18} parent=0 // pred_fallthru
    _
  // Predicated region
  $region34: #{_lambda_.18} parent=0 // pred_check
    _
  $region35: #{_lambda_.18} parent=0 // pred_check_branch
    %289 = sbr.rel (0) target = $region37
  $region36: #{_lambda_.18} parent=0 // pred_region
    _
  $region37: #{_lambda_.18} parent=0 // pred_fallthru
    _

// kernel: _lambda_.19
$region0: #{_lambda_.19}
  #allocation0 [shape = 'u32[]', space=smem, size = 0x4, offset = 0x4, fixed_abs, tag = 'smem constant byte address 0x4 - core index']
  #allocation1 [shape = 'u32[72,128]{1,0:T(1,128)}', space=vmem, size = 0x9000, scoped, tag = 'internal scratch']
  %s0 = inlined_call_operand.vmem [shape: f32[18,32], index: 0, kind: input, shape index: {}]
  %s1 = inlined_call_operand.vmem [shape: f32[1,32], index: 1, kind: input, shape index: {}]
  %s2 = inlined_call_operand.vmem [shape: f32[1,32], index: 2, kind: input, shape index: {}]
  %s3 = inlined_call_operand.vmem [shape: bf16[32,128], index: 3, kind: input, shape index: {}]
  %s4 = inlined_call_operand.vmem [shape: f32[18,128], index: 4, kind: output, shape index: {}]
  %s5 = sld [smem:[#allocation0]]
  $region26: #{_lambda_.19} parent=0
    _
  %s7 = ssub.s32 1, %s5
  %s8 = scalar_select 0, %s7, %s5
  // Predicated region
  $region2: #{_lambda_.19} parent=0 // pred_check
    _
  $region3: #{_lambda_.19} parent=0 // pred_check_branch
    %10 = sbr.rel (0) target = $region5
  $region4: #{_lambda_.19} parent=0 // pred_region
    _
  $region5: #{_lambda_.19} parent=0 // pred_fallthru
    _
  // Predicated region
  $region6: #{_lambda_.19} parent=0 // pred_check
    _
  $region7: #{_lambda_.19} parent=0 // pred_check_branch
    %12 = sbr.rel (0) target = $region9
  $region8: #{_lambda_.19} parent=0 // pred_region
    _
  $region9: #{_lambda_.19} parent=0 // pred_fallthru
    _
  // Predicated region
  $region10: #{_lambda_.19} parent=0 // pred_check
    _
  $region11: #{_lambda_.19} parent=0 // pred_check_branch
    %14 = sbr.rel (0) target = $region13
  $region12: #{_lambda_.19} parent=0 // pred_region
    _
  $region13: #{_lambda_.19} parent=0 // pred_fallthru
    _
  // Predicated region
  $region14: #{_lambda_.19} parent=0 // pred_check
    _
  $region15: #{_lambda_.19} parent=0 // pred_check_branch
    %16 = sbr.rel (0) target = $region17
  $region16: #{_lambda_.19} parent=0 // pred_region
    _
  $region17: #{_lambda_.19} parent=0 // pred_fallthru
    _
  %v18 = vld [vmem:[%s0] sm:$0xff]
  %v19 = vld [vmem:[%s0 + $0x8] sm:$0xff]
  %v20 = vld [vmem:[%s0 + $0x10] sm:$0x3]
  %vm21 = vcmask 261120
  %v22 = vsel %vm21, %v18, 0.0
  %23 = vadd.xlane.f32.xlu0 %v22
  %v24 = vpop.xlane.xlu0 %23
  %v25 = vsel %vm21, %v19, 0.0
  %26 = vadd.xlane.f32.xlu0 %v25
  %v27 = vpop.xlane.xlu0 %26
  %vm28 = vcmask 254976
  %v29 = vsel %vm28, %v20, 0.0
  %30 = vadd.xlane.f32.xlu0 %v29
  %v31 = vpop.xlane.xlu0 %30
  %v32 = vrcp.pop 32.0
  %v33 = vmul.f32 32.0, %v32
  %v34 = vsub.f32 1.0, %v33
  %v35 = vmul.f32 %v32, %v34
  %v36 = vadd.f32 %v32, %v35
  %vm37 = vweird.f32 %v32
  %v38 = vsel %vm37, %v32, %v36
  %v39 = vmul.f32 %v24, %v38
  %v40 = vmul.f32 %v27, %v38
  %v41 = vmul.f32 %v31, %v38
  %v42 = vsub.f32 %v18, %v39
  %v43 = vsub.f32 %v19, %v40
  %v44 = vsub.f32 %v20, %v41
  %v45 = vmul.f32 %v42, %v42
  %v46 = vmul.f32 %v43, %v43
  %v47 = vmul.f32 %v44, %v44
  %v48 = vsel %vm21, %v45, 0.0
  %49 = vadd.xlane.f32.xlu0 %v48
  %v50 = vpop.xlane.xlu0 %49
  %v51 = vsel %vm21, %v46, 0.0
  %52 = vadd.xlane.f32.xlu0 %v51
  %v53 = vpop.xlane.xlu0 %52
  %v54 = vsel %vm28, %v47, 0.0
  %55 = vadd.xlane.f32.xlu0 %v54
  %v56 = vpop.xlane.xlu0 %55
  %v57 = vmul.f32 %v50, %v38
  %v58 = vmul.f32 %v53, %v38
  %v59 = vmul.f32 %v56, %v38
  %v60 = vadd.f32 %v57, 1e-05
  %v61 = vadd.f32 %v58, 1e-05
  %v62 = vadd.f32 %v59, 1e-05
  %v63 = vrsqrt.pop %v60
  %v64 = vmul.f32 %v63, %v60
  %v65 = vmul.f32 %v64, %v63
  %v66 = vmul.f32 0.5, %v65
  %v67 = vsub.f32 1.5, %v66
  %v68 = vmul.f32 %v63, %v67
  %vm69 = vweird.f32 %v60
  %vm70 = vweird.f32 %v63
  %vm71 = vmor %vm69, %vm70
  %v72 = vsel %vm71, %v63, %v68
  %v73 = vrsqrt.pop %v61
  %v74 = vmul.f32 %v73, %v61
  %v75 = vmul.f32 %v74, %v73
  %v76 = vmul.f32 0.5, %v75
  %v77 = vsub.f32 1.5, %v76
  %v78 = vmul.f32 %v73, %v77
  %vm79 = vweird.f32 %v61
  %vm80 = vweird.f32 %v73
  %vm81 = vmor %vm79, %vm80
  %v82 = vsel %vm81, %v73, %v78
  %v83 = vrsqrt.pop %v62
  %v84 = vmul.f32 %v83, %v62
  %v85 = vmul.f32 %v84, %v83
  %v86 = vmul.f32 0.5, %v85
  %v87 = vsub.f32 1.5, %v86
  %v88 = vmul.f32 %v83, %v87
  %vm89 = vweird.f32 %v62
  %vm90 = vweird.f32 %v83
  %vm91 = vmor %vm89, %vm90
  %v92 = vsel %vm91, %v83, %v88
  %v93 = vmul.f32 %v42, %v72
  %v94 = vmul.f32 %v43, %v82
  %v95 = vmul.f32 %v44, %v92
  %v96 = vld [vmem:[%s1] sm:$0x1]
  %v98 = vperm.slane %v96, 0
  %v100 = vmul.f32 %v93, %v98
  %v101 = vmul.f32 %v94, %v98
  %v102 = vmul.f32 %v95, %v98
  %v103 = vld [vmem:[%s2] sm:$0x1]
  %v105 = vperm.slane %v103, 0
  %v107 = vadd.f32 %v100, %v105
  %v108 = vadd.f32 %v101, %v105
  %v109 = vadd.f32 %v102, %v105
  %v110 = vpack.c.bf16 %v108, %v107
  %v111 = vpack.c.bf16 %v109, %v109
  %v112 = vld [vmem:[%s3] sm:$0xf]
  %v113 = vld [vmem:[%s3 + $0x4] sm:$0xf]
  %v114 = vld [vmem:[%s3 + $0x8] sm:$0xf]
  %v115 = vld [vmem:[%s3 + $0xc] sm:$0xf]
  %v120 = vunpack.c.l.b16 %v112
  %v121 = vunpack.c.l.b16 %v113
  %v122 = vunpack.c.l.b16 %v114
  %v123 = vunpack.c.l.b16 %v115
  %v124 = vpack.c.b16 %v121, %v120
  %v125 = vpack.c.b16 %v123, %v122
  %v129 = vsel %vm21, %v110, 0
  %v132 = vsel %vm21, %v111, 0
  %134 = vmatpush.bf16.msra.mxu0 0
  %135 = vmatpush.bf16.msra.mxu0 0
  %136 = vmatpush.bf16.msra.mxu0 0
  %137 = vmatpush.bf16.msra.mxu0 0
  %138 = vmatpush.bf16.msra.mxu0 0
  %139 = vmatpush.bf16.msra.mxu0 0
  %140 = vmatpush.bf16.msra.mxu0 %v125
  %141 = vmatpush.bf16.msra.mxu0 %v124
  %142 = vmatmul.bf16.gmra.mxu0 %v129
  %v143 = vpop.f32.mrf.mxu0
  %v144 = vadd.f32 0.0, %v143
  %v145 = vpop.f32.mrf.mxu0
  %v146 = vadd.f32 0.0, %v145
  %147 = vmatmul.bf16.gmra.mxu0 %v132
  %v148 = vpop.f32.mrf.mxu0
  %v149 = vadd.f32 0.0, %v148
  %v150 = vpop.f32.mrf.mxu0
  %151 = vdwg.mxu0
  %152 = vst [vmem:[%s4] sm:$0xff] %v144
  %153 = vst [vmem:[%s4 + $0x8] sm:$0xff] %v146
  %154 = vst [vmem:[%s4 + $0x10] sm:$0x3] %v149
  // Predicated region
  $region18: #{_lambda_.19} parent=0 // pred_check
    _
  $region19: #{_lambda_.19} parent=0 // pred_check_branch
    %156 = sbr.rel (0) target = $region21
  $region20: #{_lambda_.19} parent=0 // pred_region
    _
  $region21: #{_lambda_.19} parent=0 // pred_fallthru
    _
  // Predicated region
  $region22: #{_lambda_.19} parent=0 // pred_check
    _
  $region23: #{_lambda_.19} parent=0 // pred_check_branch
    %158 = sbr.rel (0) target = $region25
  $region24: #{_lambda_.19} parent=0 // pred_region
    _
  $region25: #{_lambda_.19} parent=0 // pred_fallthru
    _

// kernel: _lambda_.17
$region0: #{_lambda_.17}
  #allocation0 [shape = 'u32[]', space=smem, size = 0x4, offset = 0x4, fixed_abs, tag = 'smem constant byte address 0x4 - core index']
  #allocation1 [shape = 'u32[72,128]{1,0:T(1,128)}', space=vmem, size = 0x9000, scoped, tag = 'internal scratch']
  %s0 = inlined_call_operand.vmem [shape: f32[2,9,32], index: 0, kind: input, shape index: {}]
  %s1 = inlined_call_operand.vmem [shape: f32[1,32], index: 1, kind: input, shape index: {}]
  %s2 = inlined_call_operand.vmem [shape: f32[1,32], index: 2, kind: input, shape index: {}]
  %s3 = inlined_call_operand.vmem [shape: bf16[32,96], index: 3, kind: input, shape index: {}]
  %s4 = inlined_call_operand.vmem [shape: f32[1,96], index: 4, kind: input, shape index: {}]
  %s5 = inlined_call_operand.vmem [shape: bf16[32,32], index: 5, kind: input, shape index: {}]
  %s6 = inlined_call_operand.vmem [shape: f32[1,32], index: 6, kind: input, shape index: {}]
  %s7 = inlined_call_operand.vmem [shape: f32[2,9,32], index: 7, kind: output, shape index: {}]
  %s8 = sld [smem:[#allocation0]]
  $region61: #{_lambda_.17} parent=0
    _
  %s10 = ssub.s32 1, %s8
  %s11 = scalar_select 0, %s10, %s8
  loop: start=0, step=1, limit=4
  $region2: #{_lambda_.17} parent=0 // loop_pre_header
    _
  $region3: #{_lambda_.17} parent=0 // loop_header
    %s13 = sphi 0, %s17
    %p14 = scmp.ge.s32.totalorder %s13, 4
    %s23 = sphi 0, %s25
    %s26 = sphi 0, %s23
    %s27 = sphi 0, %s26
    %s43 = sphi 0, %s27
    %s47 = sphi 0, %s47
    %s49 = sphi 0, %s47
    %s50 = sphi 0, %s49
    %s64 = sphi 0, %s50
    %s68 = sphi 0, %s68
    %s70 = sphi 0, %s68
    %s71 = sphi 0, %s70
    %s85 = sphi 0, %s71
    %s89 = sphi 0, %s89
    %s91 = sphi 0, %s89
    %s92 = sphi 0, %s91
    %s106 = sphi 0, %s92
    %s110 = sphi 0, %s110
    %s112 = sphi 0, %s110
    %s113 = sphi 0, %s112
    %s127 = sphi 0, %s113
    %s131 = sphi 0, %s131
    %s133 = sphi 0, %s131
    %s134 = sphi 0, %s133
    %s148 = sphi 0, %s134
    %s152 = sphi 0, %s152
    %s154 = sphi 0, %s152
    %s155 = sphi 0, %s154
    %s169 = sphi 0, %s155
    %s175 = sphi 0, %s177
    %s178 = sphi 0, %s175
    %s179 = sphi 0, %s178
    %s195 = sphi 0, %s179
  $region4: #{_lambda_.17} parent=0 // loop_header_branch
    %16 = sbr.rel (%p14) target = $region8
  $region5: #{_lambda_.17} parent=0 // loop_body
    %s18 = ssub.s32 %s13, 1
    %s19 = ssub.s32 %s13, 2
    %s20 = sadd.s32 %s13, 1
    %s21 = ssub.s32 %s13, %s20
    %p22 = scmp.eq.s32.totalorder %s21, 0
    %s24 = sadd.s32 %s23, 1
    %s25 = scalar_select %p22, %s23, %s24
    %p28 = pneg %p22
    %p29 = scmp.eq.s32.totalorder %s13, 1
    %p30 = por %p28, %p29
    %p31 = scmp.ne.s32.totalorder %s23, %s26
    %p32 = scmp.eq.s32.totalorder %s13, 0
    %p33 = por %p31, %p32
    %p34 = scmp.ne.s32.totalorder %s23, %s26
    %p35 = scmp.eq.s32.totalorder %s18, 1
    %p36 = por %p34, %p35
    %p37 = scmp.ne.s32.totalorder %s26, %s27
    %p38 = scmp.eq.s32.totalorder %s18, 0
    %p39 = por %p37, %p38
    %p40 = scmp.ne.s32.totalorder %s26, %s27
    %p41 = scmp.eq.s32.totalorder %s19, 1
    %p42 = por %p40, %p41
    %p44 = scmp.ne.s32.totalorder %s27, %s43
    %p45 = scmp.eq.s32.totalorder %s19, 0
    %p46 = por %p44, %p45
    %s48 = sadd.s32 %s47, 1
    %p51 = scmp.eq.s32.totalorder %s13, 1
    %p52 = scmp.ne.s32.totalorder %s47, %s49
    %p53 = scmp.eq.s32.totalorder %s13, 0
    %p54 = por %p52, %p53
    %p55 = scmp.ne.s32.totalorder %s47, %s49
    %p56 = scmp.eq.s32.totalorder %s18, 1
    %p57 = por %p55, %p56
    %p58 = scmp.ne.s32.totalorder %s49, %s50
    %p59 = scmp.eq.s32.totalorder %s18, 0
    %p60 = por %p58, %p59
    %p61 = scmp.ne.s32.totalorder %s49, %s50
    %p62 = scmp.eq.s32.totalorder %s19, 1
    %p63 = por %p61, %p62
    %p65 = scmp.ne.s32.totalorder %s50, %s64
    %p66 = scmp.eq.s32.totalorder %s19, 0
    %p67 = por %p65, %p66
    %s69 = sadd.s32 %s68, 1
    %p72 = scmp.eq.s32.totalorder %s13, 1
    %p73 = scmp.ne.s32.totalorder %s68, %s70
    %p74 = scmp.eq.s32.totalorder %s13, 0
    %p75 = por %p73, %p74
    %p76 = scmp.ne.s32.totalorder %s68, %s70
    %p77 = scmp.eq.s32.totalorder %s18, 1
    %p78 = por %p76, %p77
    %p79 = scmp.ne.s32.totalorder %s70, %s71
    %p80 = scmp.eq.s32.totalorder %s18, 0
    %p81 = por %p79, %p80
    %p82 = scmp.ne.s32.totalorder %s70, %s71
    %p83 = scmp.eq.s32.totalorder %s19, 1
    %p84 = por %p82, %p83
    %p86 = scmp.ne.s32.totalorder %s71, %s85
    %p87 = scmp.eq.s32.totalorder %s19, 0
    %p88 = por %p86, %p87
    %s90 = sadd.s32 %s89, 1
    %p93 = scmp.eq.s32.totalorder %s13, 1
    %p94 = scmp.ne.s32.totalorder %s89, %s91
    %p95 = scmp.eq.s32.totalorder %s13, 0
    %p96 = por %p94, %p95
    %p97 = scmp.ne.s32.totalorder %s89, %s91
    %p98 = scmp.eq.s32.totalorder %s18, 1
    %p99 = por %p97, %p98
    %p100 = scmp.ne.s32.totalorder %s91, %s92
    %p101 = scmp.eq.s32.totalorder %s18, 0
    %p102 = por %p100, %p101
    %p103 = scmp.ne.s32.totalorder %s91, %s92
    %p104 = scmp.eq.s32.totalorder %s19, 1
    %p105 = por %p103, %p104
    %p107 = scmp.ne.s32.totalorder %s92, %s106
    %p108 = scmp.eq.s32.totalorder %s19, 0
    %p109 = por %p107, %p108
    %s111 = sadd.s32 %s110, 1
    %p114 = scmp.eq.s32.totalorder %s13, 1
    %p115 = scmp.ne.s32.totalorder %s110, %s112
    %p116 = scmp.eq.s32.totalorder %s13, 0
    %p117 = por %p115, %p116
    %p118 = scmp.ne.s32.totalorder %s110, %s112
    %p119 = scmp.eq.s32.totalorder %s18, 1
    %p120 = por %p118, %p119
    %p121 = scmp.ne.s32.totalorder %s112, %s113
    %p122 = scmp.eq.s32.totalorder %s18, 0
    %p123 = por %p121, %p122
    %p124 = scmp.ne.s32.totalorder %s112, %s113
    %p125 = scmp.eq.s32.totalorder %s19, 1
    %p126 = por %p124, %p125
    %p128 = scmp.ne.s32.totalorder %s113, %s127
    %p129 = scmp.eq.s32.totalorder %s19, 0
    %p130 = por %p128, %p129
    %s132 = sadd.s32 %s131, 1
    %p135 = scmp.eq.s32.totalorder %s13, 1
    %p136 = scmp.ne.s32.totalorder %s131, %s133
    %p137 = scmp.eq.s32.totalorder %s13, 0
    %p138 = por %p136, %p137
    %p139 = scmp.ne.s32.totalorder %s131, %s133
    %p140 = scmp.eq.s32.totalorder %s18, 1
    %p141 = por %p139, %p140
    %p142 = scmp.ne.s32.totalorder %s133, %s134
    %p143 = scmp.eq.s32.totalorder %s18, 0
    %p144 = por %p142, %p143
    %p145 = scmp.ne.s32.totalorder %s133, %s134
    %p146 = scmp.eq.s32.totalorder %s19, 1
    %p147 = por %p145, %p146
    %p149 = scmp.ne.s32.totalorder %s134, %s148
    %p150 = scmp.eq.s32.totalorder %s19, 0
    %p151 = por %p149, %p150
    %s153 = sadd.s32 %s152, 1
    %p156 = scmp.eq.s32.totalorder %s13, 1
    %p157 = scmp.ne.s32.totalorder %s152, %s154
    %p158 = scmp.eq.s32.totalorder %s13, 0
    %p159 = por %p157, %p158
    %p160 = scmp.ne.s32.totalorder %s152, %s154
    %p161 = scmp.eq.s32.totalorder %s18, 1
    %p162 = por %p160, %p161
    %p163 = scmp.ne.s32.totalorder %s154, %s155
    %p164 = scmp.eq.s32.totalorder %s18, 0
    %p165 = por %p163, %p164
    %p166 = scmp.ne.s32.totalorder %s154, %s155
    %p167 = scmp.eq.s32.totalorder %s19, 1
    %p168 = por %p166, %p167
    %p170 = scmp.ne.s32.totalorder %s155, %s169
    %p171 = scmp.eq.s32.totalorder %s19, 0
    %p172 = por %p170, %p171
    %s173 = ssub.s32 %s13, %s20
    %p174 = scmp.eq.s32.totalorder %s173, 0
    %s176 = sadd.s32 %s175, 1
    %s177 = scalar_select %p174, %s175, %s176
    %p180 = pneg %p174
    %p181 = scmp.eq.s32.totalorder %s13, 1
    %p182 = por %p180, %p181
    %p183 = scmp.ne.s32.totalorder %s175, %s178
    %p184 = scmp.eq.s32.totalorder %s13, 0
    %p185 = por %p183, %p184
    %p186 = scmp.ne.s32.totalorder %s175, %s178
    %p187 = scmp.eq.s32.totalorder %s18, 1
    %p188 = por %p186, %p187
    %p189 = scmp.ne.s32.totalorder %s178, %s179
    %p190 = scmp.eq.s32.totalorder %s18, 0
    %p191 = por %p189, %p190
    %p192 = scmp.ne.s32.totalorder %s178, %s179
    %p193 = scmp.eq.s32.totalorder %s19, 1
    %p194 = por %p192, %p193
    %p196 = scmp.ne.s32.totalorder %s179, %s195
    %p197 = scmp.eq.s32.totalorder %s19, 0
    %p198 = por %p196, %p197
    %p199 = scmp.le.s32.totalorder 1, %s13
    %p200 = scmp.lt.s32.totalorder %s13, 3
    %p201 = pnand %p199, %p200
    %p202 = pneg %p201
    // Predicated region
    $region9: #{_lambda_.17} parent=5 // pred_check
      _
    $region10: #{_lambda_.17} parent=5 // pred_check_branch
      %204 = sbr.rel (%p201) target = $region12
    $region11: #{_lambda_.17} parent=5 // pred_region
      %s205 = ssub.s32 %s13, 1
      // Predicated region
      $region13: #{_lambda_.17} parent=11 // pred_check
        %p206 = pneg %p60
      $region14: #{_lambda_.17} parent=11 // pred_check_branch
        %208 = sbr.rel (%p206) target = $region16
      $region15: #{_lambda_.17} parent=11 // pred_region
        _
      $region16: #{_lambda_.17} parent=11 // pred_fallthru
        _
      // Predicated region
      $region17: #{_lambda_.17} parent=11 // pred_check
        %p209 = pneg %p81
      $region18: #{_lambda_.17} parent=11 // pred_check_branch
        %211 = sbr.rel (%p209) target = $region20
      $region19: #{_lambda_.17} parent=11 // pred_region
        _
      $region20: #{_lambda_.17} parent=11 // pred_fallthru
        _
      // Predicated region
      $region21: #{_lambda_.17} parent=11 // pred_check
        %p212 = pneg %p102
      $region22: #{_lambda_.17} parent=11 // pred_check_branch
        %214 = sbr.rel (%p212) target = $region24
      $region23: #{_lambda_.17} parent=11 // pred_region
        _
      $region24: #{_lambda_.17} parent=11 // pred_fallthru
        _
      // Predicated region
      $region25: #{_lambda_.17} parent=11 // pred_check
        %p215 = pneg %p123
      $region26: #{_lambda_.17} parent=11 // pred_check_branch
        %217 = sbr.rel (%p215) target = $region28
      $region27: #{_lambda_.17} parent=11 // pred_region
        _
      $region28: #{_lambda_.17} parent=11 // pred_fallthru
        _
      // Predicated region
      $region29: #{_lambda_.17} parent=11 // pred_check
        %p218 = pneg %p144
      $region30: #{_lambda_.17} parent=11 // pred_check_branch
        %220 = sbr.rel (%p218) target = $region32
      $region31: #{_lambda_.17} parent=11 // pred_region
        _
      $region32: #{_lambda_.17} parent=11 // pred_fallthru
        _
      // Predicated region
      $region33: #{_lambda_.17} parent=11 // pred_check
        %p221 = pneg %p165
      $region34: #{_lambda_.17} parent=11 // pred_check_branch
        %223 = sbr.rel (%p221) target = $region36
      $region35: #{_lambda_.17} parent=11 // pred_region
        _
      $region36: #{_lambda_.17} parent=11 // pred_fallthru
        _
    $region12: #{_lambda_.17} parent=5 // pred_fallthru
      _
    %p224 = scmp.lt.s32.totalorder %s13, 2
    // Predicated region
    $region37: #{_lambda_.17} parent=5 // pred_check
      %p225 = pneg %p224
    $region38: #{_lambda_.17} parent=5 // pred_check_branch
      %227 = sbr.rel (%p225) target = $region40
    $region39: #{_lambda_.17} parent=5 // pred_region
      // Predicated region
      $region41: #{_lambda_.17} parent=39 // pred_check
        %p228 = pneg %p33
      $region42: #{_lambda_.17} parent=39 // pred_check_branch
        %230 = sbr.rel (%p228) target = $region44
      $region43: #{_lambda_.17} parent=39 // pred_region
        %p231 = scmp.lt.s32.totalorder %s13, 1
        %s232 = scalar_select %p231, %s13, 1
        %s233 = smul.addr %s232, 2
        %s234 = smul.addr %s233, 8
        %s235 = scalar_lea.vmem %s0, %s234
      $region44: #{_lambda_.17} parent=39 // pred_fallthru
        _
    $region40: #{_lambda_.17} parent=5 // pred_fallthru
      _
    %p236 = scmp.le.s32.totalorder 1, %s13
    %p237 = scmp.lt.s32.totalorder %s13, 3
    %p238 = pnand %p236, %p237
    %p239 = pneg %p238
    // Predicated region
    $region45: #{_lambda_.17} parent=5 // pred_check
      _
    $region46: #{_lambda_.17} parent=5 // pred_check_branch
      %241 = sbr.rel (%p238) target = $region48
    $region47: #{_lambda_.17} parent=5 // pred_region
      %s242 = ssub.s32 %s13, 1
      %p243 = scmp.lt.s32.totalorder %s18, 1
      %s244 = scalar_select %p243, %s18, 1
      %s245 = smul.addr %s244, 2
      %s246 = smul.addr %s245, 8
      %s247 = scalar_lea.vmem %s0, %s246
      %p248 = pneg %p39
      %p249 = pneg %p36
      %p250 = pneg %p60
      %p251 = pneg %p57
      %p252 = pneg %p81
      %p253 = pneg %p78
      %p254 = pneg %p102
      %p255 = pneg %p99
      %p256 = pneg %p123
      %p257 = pneg %p120
      %p258 = pneg %p144
      %p259 = pneg %p141
      %p260 = pneg %p165
      %p261 = pneg %p162
      %p262 = pneg %p191
      %p263 = pneg %p188
      %p264 = scmp.lt.s32.totalorder %s18, 1
      %s265 = scalar_select %p264, %s18, 1
      %s266 = smul.addr %s265, 2
      %s267 = smul.addr %s266, 8
      %s268 = scalar_lea.vmem %s7, %s267
      %p269 = scmp.lt.s32.totalorder %s18, 1
      %s270 = scalar_select %p269, %s18, 1
      %s271 = smul.addr %s270, 2
      %s272 = smul.addr %s271, 8
      %s273 = scalar_lea.vmem %s0, %s272
      %p274 = scmp.lt.s32.totalorder %s18, 1
      %s275 = scalar_select %p274, %s18, 1
      %s276 = smul.addr %s275, 2
      %s277 = smul.addr %s276, 8
      %s278 = scalar_lea.vmem %s7, %s277
      %v280 = vld [vmem:[%s273] sm:$0xff]
      %v281 = vld [vmem:[%s273 + $0x8] sm:$0x1]
      %vm282 = vcmask 261120
      %v283 = vsel %vm282, %v280, 0.0
      %284 = vadd.xlane.f32.xlu0 %v283
      %v285 = vpop.xlane.xlu0 %284
      %vm286 = vcmask 253952
      %v287 = vsel %vm286, %v281, 0.0
      %288 = vadd.xlane.f32.xlu0 %v287
      %v289 = vpop.xlane.xlu0 %288
      %v290 = vrcp.pop 32.0
      %v291 = vmul.f32 32.0, %v290
      %v292 = vsub.f32 1.0, %v291
      %v293 = vmul.f32 %v290, %v292
      %v294 = vadd.f32 %v290, %v293
      %vm295 = vweird.f32 %v290
      %v296 = vsel %vm295, %v290, %v294
      %v297 = vmul.f32 %v285, %v296
      %v298 = vmul.f32 %v289, %v296
      %v299 = vsub.f32 %v280, %v297
      %v300 = vsub.f32 %v281, %v298
      %v301 = vmul.f32 %v299, %v299
      %v302 = vmul.f32 %v300, %v300
      %v303 = vsel %vm282, %v301, 0.0
      %304 = vadd.xlane.f32.xlu0 %v303
      %v305 = vpop.xlane.xlu0 %304
      %v306 = vsel %vm286, %v302, 0.0
      %307 = vadd.xlane.f32.xlu0 %v306
      %v308 = vpop.xlane.xlu0 %307
      %v309 = vmul.f32 %v305, %v296
      %v310 = vmul.f32 %v308, %v296
      %v311 = vadd.f32 %v309, 1e-05
      %v312 = vadd.f32 %v310, 1e-05
      %v313 = vrsqrt.pop %v311
      %v314 = vmul.f32 %v313, %v311
      %v315 = vmul.f32 %v314, %v313
      %v316 = vmul.f32 0.5, %v315
      %v317 = vsub.f32 1.5, %v316
      %v318 = vmul.f32 %v313, %v317
      %vm319 = vweird.f32 %v311
      %vm320 = vweird.f32 %v313
      %vm321 = vmor %vm319, %vm320
      %v322 = vsel %vm321, %v313, %v318
      %v323 = vrsqrt.pop %v312
      %v324 = vmul.f32 %v323, %v312
      %v325 = vmul.f32 %v324, %v323
      %v326 = vmul.f32 0.5, %v325
      %v327 = vsub.f32 1.5, %v326
      %v328 = vmul.f32 %v323, %v327
      %vm329 = vweird.f32 %v312
      %vm330 = vweird.f32 %v323
      %vm331 = vmor %vm329, %vm330
      %v332 = vsel %vm331, %v323, %v328
      %v333 = vmul.f32 %v299, %v322
      %v334 = vmul.f32 %v300, %v332
      %v335 = vld [vmem:[%s1] sm:$0x1]
      %v337 = vperm.slane %v335, 0
      %v339 = vmul.f32 %v333, %v337
      %v340 = vmul.f32 %v334, %v337
      %v341 = vld [vmem:[%s2] sm:$0x1]
      %v343 = vperm.slane %v341, 0
      %v345 = vadd.f32 %v339, %v343
      %v346 = vadd.f32 %v340, %v343
      %v347 = vpack.c.bf16 %v346, %v345
      %v348 = vld [vmem:[%s3] sm:$0xf]
      %v349 = vld [vmem:[%s3 + $0x4] sm:$0xf]
      %v350 = vld [vmem:[%s3 + $0x8] sm:$0xf]
      %v351 = vld [vmem:[%s3 + $0xc] sm:$0xf]
      %v352 = vld [vmem:[%s4] sm:$0x1]
      %v354 = vperm.slane %v352, 0
      %v360 = vunpack.c.l.b16 %v348
      %v361 = vunpack.c.l.b16 %v349
      %v362 = vunpack.c.l.b16 %v350
      %v363 = vunpack.c.l.b16 %v351
      %v364 = vpack.c.b16 %v361, %v360
      %v365 = vpack.c.b16 %v363, %v362
      %v369 = vsel %vm282, %v347, 0
      %371 = vmatpush.bf16.msra.mxu0 0
      %372 = vmatpush.bf16.msra.mxu0 0
      %373 = vmatpush.bf16.msra.mxu0 0
      %374 = vmatpush.bf16.msra.mxu0 0
      %375 = vmatpush.bf16.msra.mxu0 0
      %376 = vmatpush.bf16.msra.mxu0 0
      %377 = vmatpush.bf16.msra.mxu0 %v365
      %378 = vmatpush.bf16.msra.mxu0 %v364
      %379 = vmatmul.bf16.gmra.mxu0 %v369
      %v380 = vpop.f32.mrf.mxu0
      %v381 = vadd.f32 %v354, %v380
      %v382 = vpop.f32.mrf.mxu0
      %v383 = vadd.f32 %v354, %v382
      %384 = vdwg.mxu0
      %v385 = vmul.f32 %v381, 0.35355338
      %v386 = vmul.f32 %v383, 0.35355338
      %v387 = vpack.c.bf16 %v386, %v385
      %v388 = vpack.c.bf16 %v383, %v381
      %390 = vrot.lane.b32.xlu0 %v388, 96
      %v391 = vpop.permute.xlu0 %390
      %vm392 = vcmask 64512
      %v394 = vsel %vm392, %v387, 0
      %v397 = vsel %vm392, %v391, 0
      %399 = vmatpush.bf16.xpose.msra.mxu0 0
      %400 = vmatpush.bf16.xpose.msra.mxu0 0
      %401 = vmatpush.bf16.xpose.msra.mxu0 0
      %402 = vmatpush.bf16.xpose.msra.mxu0 0
      %403 = vmatpush.bf16.xpose.msra.mxu0 0
      %404 = vmatpush.bf16.xpose.msra.mxu0 0
      %405 = vmatpush.bf16.xpose.msra.mxu0 0
      %406 = vmatpush.bf16.xpose.msra.mxu0 %v397
      %407 = vmatmul.bf16.gmra.mxu0 %v394
      %v408 = vpop.f32.mrf.mxu0
      %v409 = vadd.f32 0.0, %v408
      %v410 = vpop.f32.mrf.mxu0
      %v411 = vadd.f32 0.0, %v410
      %412 = vdwg.mxu0
      %vm413 = vcmask 72704
      %v414 = vsel %vm413, %v409, -inf
      %415 = vmax.xlane.f32.xlu0 %v414
      %v416 = vpop.xlane.xlu0 %415
      %vm417 = vcmask 65536
      %v418 = vsel %vm417, %v411, -inf
      %419 = vmax.xlane.f32.xlu0 %v418
      %v420 = vpop.xlane.xlu0 %419
      %v421 = vsub.f32 %v409, %v416
      %v422 = vsub.f32 %v411, %v420
      %v423 = vmul.f32 %v421, 1.442695
      %v424 = vpow.pop %v423
      %v425 = vmul.f32 %v422, 1.442695
      %v426 = vpow.pop %v425
      %v427 = vsel %vm413, %v424, 0.0
      %428 = vadd.xlane.f32.xlu0 %v427
      %v429 = vpop.xlane.xlu0 %428
      %v430 = vsel %vm417, %v426, 0.0
      %431 = vadd.xlane.f32.xlu0 %v430
      %v432 = vpop.xlane.xlu0 %431
      %v433 = vrcp.pop %v429
      %v434 = vrcp.pop %v432
      %v435 = vmul.f32 %v424, %v433
      %v436 = vmul.f32 %v426, %v434
      %v437 = vpack.c.bf16 %v436, %v435
      %438 = vrot.lane.b32.xlu0 %v388, 64
      %v439 = vpop.permute.xlu0 %438
      %v441 = vsel %vm413, %v437, 0
      %vm443 = vcmask 1043456
      %vm444 = vcmask 1044480
      %v445 = vsel %vm443, 4294967295, 65535
      %v446 = vsel %vm444, %v445, 0
      %v448 = vand.u32 %v439, %v446
      %450 = vmatpush.bf16.msra.mxu0 0
      %451 = vmatpush.bf16.msra.mxu0 0
      %452 = vmatpush.bf16.msra.mxu0 0
      %453 = vmatpush.bf16.msra.mxu0 0
      %454 = vmatpush.bf16.msra.mxu0 0
      %455 = vmatpush.bf16.msra.mxu0 0
      %456 = vmatpush.bf16.msra.mxu0 0
      %457 = vmatpush.bf16.msra.mxu0 %v448
      %458 = vmatmul.bf16.gmra.mxu0 %v441
      %v459 = vpop.f32.mrf.mxu0
      %v460 = vadd.f32 0.0, %v459
      %v461 = vpop.f32.mrf.mxu0
      %v462 = vadd.f32 0.0, %v461
      %463 = vdwg.mxu0
      %465 = vrot.lane.b32.xlu0 %v387, 120
      %v466 = vpop.permute.xlu0 %465
      %467 = vrot.lane.b32.xlu0 %v388, 88
      %v468 = vpop.permute.xlu0 %467
      %v470 = vsel %vm392, %v466, 0
      %v473 = vsel %vm392, %v468, 0
      %475 = vmatpush.bf16.xpose.msra.mxu0 0
      %476 = vmatpush.bf16.xpose.msra.mxu0 0
      %477 = vmatpush.bf16.xpose.msra.mxu0 0
      %478 = vmatpush.bf16.xpose.msra.mxu0 0
      %479 = vmatpush.bf16.xpose.msra.mxu0 0
      %480 = vmatpush.bf16.xpose.msra.mxu0 0
      %481 = vmatpush.bf16.xpose.msra.mxu0 0
      %482 = vmatpush.bf16.xpose.msra.mxu0 %v473
      %483 = vmatmul.bf16.gmra.mxu0 %v470
      %v484 = vpop.f32.mrf.mxu0
      %v485 = vadd.f32 0.0, %v484
      %v486 = vpop.f32.mrf.mxu0
      %v487 = vadd.f32 0.0, %v486
      %488 = vdwg.mxu0
      %v489 = vsel %vm413, %v485, -inf
      %490 = vmax.xlane.f32.xlu0 %v489
      %v491 = vpop.xlane.xlu0 %490
      %v492 = vsel %vm417, %v487, -inf
      %493 = vmax.xlane.f32.xlu0 %v492
      %v494 = vpop.xlane.xlu0 %493
      %v495 = vsub.f32 %v485, %v491
      %v496 = vsub.f32 %v487, %v494
      %v497 = vmul.f32 %v495, 1.442695
      %v498 = vpow.pop %v497
      %v499 = vmul.f32 %v496, 1.442695
      %v500 = vpow.pop %v499
      %v501 = vsel %vm413, %v498, 0.0
      %502 = vadd.xlane.f32.xlu0 %v501
      %v503 = vpop.xlane.xlu0 %502
      %v504 = vsel %vm417, %v500, 0.0
      %505 = vadd.xlane.f32.xlu0 %v504
      %v506 = vpop.xlane.xlu0 %505
      %v507 = vrcp.pop %v503
      %v508 = vrcp.pop %v506
      %v509 = vmul.f32 %v498, %v507
      %v510 = vmul.f32 %v500, %v508
      %v511 = vpack.c.bf16 %v510, %v509
      %512 = vrot.lane.b32.xlu0 %v388, 56
      %v513 = vpop.permute.xlu0 %512
      %v515 = vsel %vm413, %v511, 0
      %v518 = vand.u32 %v513, %v446
      %520 = vmatpush.bf16.msra.mxu0 0
      %521 = vmatpush.bf16.msra.mxu0 0
      %522 = vmatpush.bf16.msra.mxu0 0
      %523 = vmatpush.bf16.msra.mxu0 0
      %524 = vmatpush.bf16.msra.mxu0 0
      %525 = vmatpush.bf16.msra.mxu0 0
      %526 = vmatpush.bf16.msra.mxu0 0
      %527 = vmatpush.bf16.msra.mxu0 %v518
      %528 = vmatmul.bf16.gmra.mxu0 %v515
      %v529 = vpop.f32.mrf.mxu0
      %v530 = vadd.f32 0.0, %v529
      %v531 = vpop.f32.mrf.mxu0
      %v532 = vadd.f32 0.0, %v531
      %533 = vdwg.mxu0
      %534 = vrot.lane.b32.xlu0 %v387, 112
      %v535 = vpop.permute.xlu0 %534
      %536 = vrot.lane.b32.xlu0 %v388, 80
      %v537 = vpop.permute.xlu0 %536
      %v539 = vsel %vm392, %v535, 0
      %v542 = vsel %vm392, %v537, 0
      %544 = vmatpush.bf16.xpose.msra.mxu0 0
      %545 = vmatpush.bf16.xpose.msra.mxu0 0
      %546 = vmatpush.bf16.xpose.msra.mxu0 0
      %547 = vmatpush.bf16.xpose.msra.mxu0 0
      %548 = vmatpush.bf16.xpose.msra.mxu0 0
      %549 = vmatpush.bf16.xpose.msra.mxu0 0
      %550 = vmatpush.bf16.xpose.msra.mxu0 0
      %551 = vmatpush.bf16.xpose.msra.mxu0 %v542
      %552 = vmatmul.bf16.gmra.mxu0 %v539
      %v553 = vpop.f32.mrf.mxu0
      %v554 = vadd.f32 0.0, %v553
      %v555 = vpop.f32.mrf.mxu0
      %v556 = vadd.f32 0.0, %v555
      %557 = vdwg.mxu0
      %v558 = vsel %vm413, %v554, -inf
      %559 = vmax.xlane.f32.xlu0 %v558
      %v560 = vpop.xlane.xlu0 %559
      %v561 = vsel %vm417, %v556, -inf
      %562 = vmax.xlane.f32.xlu0 %v561
      %v563 = vpop.xlane.xlu0 %562
      %v564 = vsub.f32 %v554, %v560
      %v565 = vsub.f32 %v556, %v563
      %v566 = vmul.f32 %v564, 1.442695
      %v567 = vpow.pop %v566
      %v568 = vmul.f32 %v565, 1.442695
      %v569 = vpow.pop %v568
      %v570 = vsel %vm413, %v567, 0.0
      %571 = vadd.xlane.f32.xlu0 %v570
      %v572 = vpop.xlane.xlu0 %571
      %v573 = vsel %vm417, %v569, 0.0
      %574 = vadd.xlane.f32.xlu0 %v573
      %v575 = vpop.xlane.xlu0 %574
      %v576 = vrcp.pop %v572
      %v577 = vrcp.pop %v575
      %v578 = vmul.f32 %v567, %v576
      %v579 = vmul.f32 %v569, %v577
      %v580 = vpack.c.bf16 %v579, %v578
      %581 = vrot.lane.b32.xlu0 %v388, 48
      %v582 = vpop.permute.xlu0 %581
      %v584 = vsel %vm413, %v580, 0
      %v587 = vand.u32 %v582, %v446
      %589 = vmatpush.bf16.msra.mxu0 0
      %590 = vmatpush.bf16.msra.mxu0 0
      %591 = vmatpush.bf16.msra.mxu0 0
      %592 = vmatpush.bf16.msra.mxu0 0
      %593 = vmatpush.bf16.msra.mxu0 0
      %594 = vmatpush.bf16.msra.mxu0 0
      %595 = vmatpush.bf16.msra.mxu0 0
      %596 = vmatpush.bf16.msra.mxu0 %v587
      %597 = vmatmul.bf16.gmra.mxu0 %v584
      %v598 = vpop.f32.mrf.mxu0
      %v599 = vadd.f32 0.0, %v598
      %v600 = vpop.f32.mrf.mxu0
      %v601 = vadd.f32 0.0, %v600
      %602 = vdwg.mxu0
      %603 = vrot.lane.b32.xlu0 %v387, 104
      %v604 = vpop.permute.xlu0 %603
      %605 = vrot.lane.b32.xlu0 %v388, 72
      %v606 = vpop.permute.xlu0 %605
      %v608 = vsel %vm392, %v604, 0
      %v611 = vsel %vm392, %v606, 0
      %613 = vmatpush.bf16.xpose.msra.mxu0 0
      %614 = vmatpush.bf16.xpose.msra.mxu0 0
      %615 = vmatpush.bf16.xpose.msra.mxu0 0
      %616 = vmatpush.bf16.xpose.msra.mxu0 0
      %617 = vmatpush.bf16.xpose.msra.mxu0 0
      %618 = vmatpush.bf16.xpose.msra.mxu0 0
      %619 = vmatpush.bf16.xpose.msra.mxu0 0
      %620 = vmatpush.bf16.xpose.msra.mxu0 %v611
      %621 = vmatmul.bf16.gmra.mxu0 %v608
      %v622 = vpop.f32.mrf.mxu0
      %v623 = vadd.f32 0.0, %v622
      %v624 = vpop.f32.mrf.mxu0
      %v625 = vadd.f32 0.0, %v624
      %626 = vdwg.mxu0
      %v627 = vsel %vm413, %v623, -inf
      %628 = vmax.xlane.f32.xlu0 %v627
      %v629 = vpop.xlane.xlu0 %628
      %v630 = vsel %vm417, %v625, -inf
      %631 = vmax.xlane.f32.xlu0 %v630
      %v632 = vpop.xlane.xlu0 %631
      %v633 = vsub.f32 %v623, %v629
      %v634 = vsub.f32 %v625, %v632
      %v635 = vmul.f32 %v633, 1.442695
      %v636 = vpow.pop %v635
      %v637 = vmul.f32 %v634, 1.442695
      %v638 = vpow.pop %v637
      %v639 = vsel %vm413, %v636, 0.0
      %640 = vadd.xlane.f32.xlu0 %v639
      %v641 = vpop.xlane.xlu0 %640
      %v642 = vsel %vm417, %v638, 0.0
      %643 = vadd.xlane.f32.xlu0 %v642
      %v644 = vpop.xlane.xlu0 %643
      %v645 = vrcp.pop %v641
      %v646 = vrcp.pop %v644
      %v647 = vmul.f32 %v636, %v645
      %v648 = vmul.f32 %v638, %v646
      %v649 = vpack.c.bf16 %v648, %v647
      %650 = vrot.lane.b32.xlu0 %v388, 40
      %v651 = vpop.permute.xlu0 %650
      %v653 = vsel %vm413, %v649, 0
      %v656 = vand.u32 %v651, %v446
      %658 = vmatpush.bf16.msra.mxu0 0
      %659 = vmatpush.bf16.msra.mxu0 0
      %660 = vmatpush.bf16.msra.mxu0 0
      %661 = vmatpush.bf16.msra.mxu0 0
      %662 = vmatpush.bf16.msra.mxu0 0
      %663 = vmatpush.bf16.msra.mxu0 0
      %664 = vmatpush.bf16.msra.mxu0 0
      %665 = vmatpush.bf16.msra.mxu0 %v656
      %666 = vmatmul.bf16.gmra.mxu0 %v653
      %v667 = vpop.f32.mrf.mxu0
      %v668 = vadd.f32 0.0, %v667
      %v669 = vpop.f32.mrf.mxu0
      %v670 = vadd.f32 0.0, %v669
      %671 = vdwg.mxu0
      %674 = vrot.lane.b32.xlu0 %v530, 8
      %v675 = vpop.permute.xlu0 %674
      %676 = vrot.lane.b32.xlu0 %v532, 8
      %v677 = vpop.permute.xlu0 %676
      %682 = vrot.lane.b32.xlu0 %v599, 16
      %v683 = vpop.permute.xlu0 %682
      %684 = vrot.lane.b32.xlu0 %v601, 16
      %v685 = vpop.permute.xlu0 %684
      %690 = vrot.lane.b32.xlu0 %v668, 24
      %v691 = vpop.permute.xlu0 %690
      %692 = vrot.lane.b32.xlu0 %v670, 24
      %v693 = vpop.permute.xlu0 %692
      %v696 = vsel %vm392, %v460, %v675
      %v697 = vsel %vm392, %v462, %v677
      %vm698 = vcmask 130048
      %v699 = vsel %vm698, %v696, %v683
      %v700 = vsel %vm698, %v697, %v685
      %vm701 = vcmask 195584
      %v702 = vsel %vm701, %v699, %v691
      %v703 = vsel %vm701, %v700, %v693
      %v704 = vpack.c.bf16 %v703, %v702
      %v705 = vld [vmem:[%s5] sm:$0xf]
      %v706 = vld [vmem:[%s5 + $0x4] sm:$0xf]
      %v707 = vld [vmem:[%s5 + $0x8] sm:$0xf]
      %v708 = vld [vmem:[%s5 + $0xc] sm:$0xf]
      %v709 = vld [vmem:[%s6] sm:$0x1]
      %v711 = vperm.slane %v709, 0
      %v717 = vunpack.c.l.b16 %v705
      %v718 = vunpack.c.l.b16 %v706
      %v719 = vunpack.c.l.b16 %v707
      %v720 = vunpack.c.l.b16 %v708
      %v721 = vpack.c.b16 %v718, %v717
      %v722 = vpack.c.b16 %v720, %v719
      %v726 = vsel %vm282, %v704, 0
      %728 = vmatpush.bf16.msra.mxu0 0
      %729 = vmatpush.bf16.msra.mxu0 0
      %730 = vmatpush.bf16.msra.mxu0 0
      %731 = vmatpush.bf16.msra.mxu0 0
      %732 = vmatpush.bf16.msra.mxu0 0
      %733 = vmatpush.bf16.msra.mxu0 0
      %734 = vmatpush.bf16.msra.mxu0 %v722
      %735 = vmatpush.bf16.msra.mxu0 %v721
      %736 = vmatmul.bf16.gmra.mxu0 %v726
      %v737 = vpop.f32.mrf.mxu0
      %v738 = vadd.f32 %v711, %v737
      %v739 = vpop.f32.mrf.mxu0
      %v740 = vadd.f32 %v711, %v739
      %741 = vdwg.mxu0
      %v742 = vadd.f32 %v280, %v738
      %v743 = vadd.f32 %v281, %v740
      %744 = vst.msk [vmem:[%s278] sm:$0xff] %vm282, %v742
      %745 = vst.msk [vmem:[%s278 + $0x8] sm:$0x1] %vm286, %v743
      %p746 = scmp.lt.s32.totalorder %s18, 1
      %s747 = scalar_select %p746, %s18, 1
      %s748 = smul.addr %s747, 2
      %s749 = smul.addr %s748, 8
      %s750 = scalar_lea.vmem %s7, %s749
      // Predicated region
      $region49: #{_lambda_.17} parent=47 // pred_check
        %p751 = pneg %p188
      $region50: #{_lambda_.17} parent=47 // pred_check_branch
        %753 = sbr.rel (%p751) target = $region52
      $region51: #{_lambda_.17} parent=47 // pred_region
        _
      $region52: #{_lambda_.17} parent=47 // pred_fallthru
        _
    $region48: #{_lambda_.17} parent=5 // pred_fallthru
      _
    %p754 = scmp.le.s32.totalorder 2, %s13
    // Predicated region
    $region53: #{_lambda_.17} parent=5 // pred_check
      %p755 = pneg %p754
    $region54: #{_lambda_.17} parent=5 // pred_check_branch
      %757 = sbr.rel (%p755) target = $region56
    $region55: #{_lambda_.17} parent=5 // pred_region
      %s758 = ssub.s32 %s13, 2
      // Predicated region
      $region57: #{_lambda_.17} parent=55 // pred_check
        %p759 = pneg %p194
      $region58: #{_lambda_.17} parent=55 // pred_check_branch
        %761 = sbr.rel (%p759) target = $region60
      $region59: #{_lambda_.17} parent=55 // pred_region
        %p762 = scmp.lt.s32.totalorder %s19, 1
        %s763 = scalar_select %p762, %s19, 1
        %s764 = smul.addr %s763, 2
        %s765 = smul.addr %s764, 8
        %s766 = scalar_lea.vmem %s7, %s765
      $region60: #{_lambda_.17} parent=55 // pred_fallthru
        _
    $region56: #{_lambda_.17} parent=5 // pred_fallthru
      _
  $region6: #{_lambda_.17} parent=0 // loop_footer
    %s17 = sadd.s32 1, %s13
  $region7: #{_lambda_.17} parent=0 // loop_footer_branch
    %12 = sbr.rel target = $region3
  $region8: #{_lambda_.17} parent=0 // loop_exit
    _

// kernel: _lambda_.20
$region0: #{_lambda_.20}
  #allocation0 [shape = 'u32[]', space=smem, size = 0x4, offset = 0x4, fixed_abs, tag = 'smem constant byte address 0x4 - core index']
  #allocation1 [shape = 'u32[72,128]{1,0:T(1,128)}', space=vmem, size = 0x9000, scoped, tag = 'internal scratch']
  %s0 = inlined_call_operand.vmem [shape: f32[16,32], index: 0, kind: input, shape index: {}]
  %s1 = inlined_call_operand.vmem [shape: bf16[32,128], index: 1, kind: input, shape index: {}]
  %s2 = inlined_call_operand.vmem [shape: f32[1,128], index: 2, kind: input, shape index: {}]
  %s3 = inlined_call_operand.vmem [shape: f32[16,128], index: 3, kind: output, shape index: {}]
  %s4 = sld [smem:[#allocation0]]
  $region30: #{_lambda_.20} parent=0
    _
  %s6 = ssub.s32 1, %s4
  %s7 = scalar_select 0, %s6, %s4
  // Predicated region
  $region2: #{_lambda_.20} parent=0 // pred_check
    _
  $region3: #{_lambda_.20} parent=0 // pred_check_branch
    %9 = sbr.rel (0) target = $region5
  $region4: #{_lambda_.20} parent=0 // pred_region
    _
  $region5: #{_lambda_.20} parent=0 // pred_fallthru
    _
  // Predicated region
  $region6: #{_lambda_.20} parent=0 // pred_check
    _
  $region7: #{_lambda_.20} parent=0 // pred_check_branch
    %11 = sbr.rel (0) target = $region9
  $region8: #{_lambda_.20} parent=0 // pred_region
    _
  $region9: #{_lambda_.20} parent=0 // pred_fallthru
    _
  // Predicated region
  $region10: #{_lambda_.20} parent=0 // pred_check
    _
  $region11: #{_lambda_.20} parent=0 // pred_check_branch
    %13 = sbr.rel (0) target = $region13
  $region12: #{_lambda_.20} parent=0 // pred_region
    _
  $region13: #{_lambda_.20} parent=0 // pred_fallthru
    _
  %p15 = scmp.eq.s32.totalorder 0, 0
  // Predicated region
  $region14: #{_lambda_.20} parent=0 // pred_check
    %p16 = pneg %p15
  $region15: #{_lambda_.20} parent=0 // pred_check_branch
    %18 = sbr.rel (%p16) target = $region17
  $region16: #{_lambda_.20} parent=0 // pred_region
    %19 = vst [vmem:[%s3] sm:$0xff] 0.0
    %20 = vst [vmem:[%s3 + $0x8] sm:$0xff] 0.0
  $region17: #{_lambda_.20} parent=0 // pred_fallthru
    _
  %v21 = vld [vmem:[%s3] sm:$0xff]
  %v22 = vld [vmem:[%s3 + $0x8] sm:$0xff]
  %v23 = vld [vmem:[%s0] sm:$0xff]
  %v24 = vld [vmem:[%s0 + $0x8] sm:$0xff]
  %v25 = vpack.c.bf16 %v24, %v23
  %v26 = vld [vmem:[%s1] sm:$0xf]
  %v27 = vld [vmem:[%s1 + $0x4] sm:$0xf]
  %v28 = vld [vmem:[%s1 + $0x8] sm:$0xf]
  %v29 = vld [vmem:[%s1 + $0xc] sm:$0xf]
  %v34 = vunpack.c.l.b16 %v26
  %v35 = vunpack.c.l.b16 %v27
  %v36 = vunpack.c.l.b16 %v28
  %v37 = vunpack.c.l.b16 %v29
  %v38 = vpack.c.b16 %v35, %v34
  %v39 = vpack.c.b16 %v37, %v36
  %vm42 = vcmask 261120
  %v44 = vsel %vm42, %v25, 0
  %46 = vmatpush.bf16.msra.mxu0 0
  %47 = vmatpush.bf16.msra.mxu0 0
  %48 = vmatpush.bf16.msra.mxu0 0
  %49 = vmatpush.bf16.msra.mxu0 0
  %50 = vmatpush.bf16.msra.mxu0 0
  %51 = vmatpush.bf16.msra.mxu0 0
  %52 = vmatpush.bf16.msra.mxu0 %v39
  %53 = vmatpush.bf16.msra.mxu0 %v38
  %54 = vmatmul.bf16.gmra.mxu0 %v44
  %v55 = vpop.f32.mrf.mxu0
  %v56 = vadd.f32 0.0, %v55
  %v57 = vpop.f32.mrf.mxu0
  %v58 = vadd.f32 0.0, %v57
  %59 = vdwg.mxu0
  %v60 = vadd.f32 %v21, %v56
  %v61 = vadd.f32 %v22, %v58
  %62 = vst [vmem:[%s3] sm:$0xff] %v60
  %63 = vst [vmem:[%s3 + $0x8] sm:$0xff] %v61
  // Predicated region
  $region18: #{_lambda_.20} parent=0 // pred_check
    %p64 = pneg %p15
  $region19: #{_lambda_.20} parent=0 // pred_check_branch
    %66 = sbr.rel (%p64) target = $region21
  $region20: #{_lambda_.20} parent=0 // pred_region
    %v67 = vld [vmem:[%s3] sm:$0xff]
    %v68 = vld [vmem:[%s3 + $0x8] sm:$0xff]
    %v69 = vld [vmem:[%s2] sm:$0x1]
    %v71 = vperm.slane %v69, 0
    %v73 = vadd.f32 %v67, %v71
    %v74 = vadd.f32 %v68, %v71
    %75 = vst [vmem:[%s3] sm:$0xff] %v73
    %76 = vst [vmem:[%s3 + $0x8] sm:$0xff] %v74
  $region21: #{_lambda_.20} parent=0 // pred_fallthru
    _
  // Predicated region
  $region22: #{_lambda_.20} parent=0 // pred_check
    _
  $region23: #{_lambda_.20} parent=0 // pred_check_branch
    %78 = sbr.rel (0) target = $region25
  $region24: #{_lambda_.20} parent=0 // pred_region
    _
  $region25: #{_lambda_.20} parent=0 // pred_fallthru
    _
  // Predicated region
  $region26: #{_lambda_.20} parent=0 // pred_check
    _
  $region27: #{_lambda_.20} parent=0 // pred_check_branch
    %80 = sbr.rel (0) target = $region29
  $region28: #{_lambda_.20} parent=0 // pred_region
    _
  $region29: #{_lambda_.20} parent=0 // pred_fallthru
    _

// kernel: _lambda_.21
$region0: #{_lambda_.21}
  #allocation0 [shape = 'u32[]', space=smem, size = 0x4, offset = 0x4, fixed_abs, tag = 'smem constant byte address 0x4 - core index']
  #allocation1 [shape = 'u32[72,128]{1,0:T(1,128)}', space=vmem, size = 0x9000, scoped, tag = 'internal scratch']
  %s0 = inlined_call_operand.vmem [shape: f32[8,32], index: 0, kind: input, shape index: {}]
  %s1 = inlined_call_operand.vmem [shape: f32[1,32], index: 1, kind: input, shape index: {}]
  %s2 = inlined_call_operand.vmem [shape: f32[1,32], index: 2, kind: input, shape index: {}]
  %s3 = inlined_call_operand.vmem [shape: bf16[32,128], index: 3, kind: input, shape index: {}]
  %s4 = inlined_call_operand.vmem [shape: f32[1,128], index: 4, kind: input, shape index: {}]
  %s5 = inlined_call_operand.vmem [shape: f32[8,128], index: 5, kind: output, shape index: {}]
  %s6 = sld [smem:[#allocation0]]
  $region30: #{_lambda_.21} parent=0
    _
  %s8 = ssub.s32 1, %s6
  %s9 = scalar_select 0, %s8, %s6
  // Predicated region
  $region2: #{_lambda_.21} parent=0 // pred_check
    _
  $region3: #{_lambda_.21} parent=0 // pred_check_branch
    %11 = sbr.rel (0) target = $region5
  $region4: #{_lambda_.21} parent=0 // pred_region
    _
  $region5: #{_lambda_.21} parent=0 // pred_fallthru
    _
  // Predicated region
  $region6: #{_lambda_.21} parent=0 // pred_check
    _
  $region7: #{_lambda_.21} parent=0 // pred_check_branch
    %13 = sbr.rel (0) target = $region9
  $region8: #{_lambda_.21} parent=0 // pred_region
    _
  $region9: #{_lambda_.21} parent=0 // pred_fallthru
    _
  // Predicated region
  $region10: #{_lambda_.21} parent=0 // pred_check
    _
  $region11: #{_lambda_.21} parent=0 // pred_check_branch
    %15 = sbr.rel (0) target = $region13
  $region12: #{_lambda_.21} parent=0 // pred_region
    _
  $region13: #{_lambda_.21} parent=0 // pred_fallthru
    _
  // Predicated region
  $region14: #{_lambda_.21} parent=0 // pred_check
    _
  $region15: #{_lambda_.21} parent=0 // pred_check_branch
    %17 = sbr.rel (0) target = $region17
  $region16: #{_lambda_.21} parent=0 // pred_region
    _
  $region17: #{_lambda_.21} parent=0 // pred_fallthru
    _
  // Predicated region
  $region18: #{_lambda_.21} parent=0 // pred_check
    _
  $region19: #{_lambda_.21} parent=0 // pred_check_branch
    %19 = sbr.rel (0) target = $region21
  $region20: #{_lambda_.21} parent=0 // pred_region
    _
  $region21: #{_lambda_.21} parent=0 // pred_fallthru
    _
  %v21 = vld [vmem:[%s0] sm:$0xff]
  %vm22 = vcmask 261120
  %v23 = vsel %vm22, %v21, 0.0
  %24 = vadd.xlane.f32.xlu0 %v23
  %v25 = vpop.xlane.xlu0 %24
  %v26 = vrcp.pop 32.0
  %v27 = vmul.f32 32.0, %v26
  %v28 = vsub.f32 1.0, %v27
  %v29 = vmul.f32 %v26, %v28
  %v30 = vadd.f32 %v26, %v29
  %vm31 = vweird.f32 %v26
  %v32 = vsel %vm31, %v26, %v30
  %v33 = vmul.f32 %v25, %v32
  %v34 = vsub.f32 %v21, %v33
  %v35 = vmul.f32 %v34, %v34
  %v36 = vsel %vm22, %v35, 0.0
  %37 = vadd.xlane.f32.xlu0 %v36
  %v38 = vpop.xlane.xlu0 %37
  %v39 = vmul.f32 %v38, %v32
  %v40 = vadd.f32 %v39, 1e-05
  %v41 = vrsqrt.pop %v40
  %v42 = vmul.f32 %v41, %v40
  %v43 = vmul.f32 %v42, %v41
  %v44 = vmul.f32 0.5, %v43
  %v45 = vsub.f32 1.5, %v44
  %v46 = vmul.f32 %v41, %v45
  %vm47 = vweird.f32 %v40
  %vm48 = vweird.f32 %v41
  %vm49 = vmor %vm47, %vm48
  %v50 = vsel %vm49, %v41, %v46
  %v51 = vmul.f32 %v34, %v50
  %v52 = vld [vmem:[%s1] sm:$0x1]
  %v54 = vperm.slane %v52, 0
  %v56 = vmul.f32 %v51, %v54
  %v57 = vld [vmem:[%s2] sm:$0x1]
  %v59 = vperm.slane %v57, 0
  %v61 = vadd.f32 %v56, %v59
  %v62 = vpack.c.bf16 %v61, %v61
  %v63 = vld [vmem:[%s3] sm:$0xf]
  %v64 = vld [vmem:[%s3 + $0x4] sm:$0xf]
  %v65 = vld [vmem:[%s3 + $0x8] sm:$0xf]
  %v66 = vld [vmem:[%s3 + $0xc] sm:$0xf]
  %v67 = vld [vmem:[%s4] sm:$0x1]
  %v69 = vperm.slane %v67, 0
  %v75 = vunpack.c.l.b16 %v63
  %v76 = vunpack.c.l.b16 %v64
  %v77 = vunpack.c.l.b16 %v65
  %v78 = vunpack.c.l.b16 %v66
  %v79 = vpack.c.b16 %v76, %v75
  %v80 = vpack.c.b16 %v78, %v77
  %v84 = vsel %vm22, %v62, 0
  %86 = vmatpush.bf16.msra.mxu0 0
  %87 = vmatpush.bf16.msra.mxu0 0
  %88 = vmatpush.bf16.msra.mxu0 0
  %89 = vmatpush.bf16.msra.mxu0 0
  %90 = vmatpush.bf16.msra.mxu0 0
  %91 = vmatpush.bf16.msra.mxu0 0
  %92 = vmatpush.bf16.msra.mxu0 %v80
  %93 = vmatpush.bf16.msra.mxu0 %v79
  %94 = vmatmul.bf16.gmra.mxu0 %v84
  %v95 = vpop.f32.mrf.mxu0
  %v96 = vadd.f32 %v69, %v95
  %v97 = vpop.f32.mrf.mxu0
  %98 = vdwg.mxu0
  %99 = vst [vmem:[%s5] sm:$0xff] %v96
  // Predicated region
  $region22: #{_lambda_.21} parent=0 // pred_check
    _
  $region23: #{_lambda_.21} parent=0 // pred_check_branch
    %101 = sbr.rel (0) target = $region25
  $region24: #{_lambda_.21} parent=0 // pred_region
    _
  $region25: #{_lambda_.21} parent=0 // pred_fallthru
    _
  // Predicated region
  $region26: #{_lambda_.21} parent=0 // pred_check
    _
  $region27: #{_lambda_.21} parent=0 // pred_check_branch
    %103 = sbr.rel (0) target = $region29
  $region28: #{_lambda_.21} parent=0 // pred_region
    _
  $region29: #{_lambda_.21} parent=0 // pred_fallthru
    _

</llo_original>
